<compile_context>
chip_gen: v5e
topology: v5e:2x2
jax: 0.10.0
libtpu: 0.0.40
codegen_flags: <defaults>
</compile_context>

<pallas_src>
import functools

import jax
import jax.numpy as jnp
from jax import lax
from jax.experimental import pallas as pl
from jax.experimental.pallas import tpu as pltpu


def _efficient_attention_kernel(x_ref, wq_ref, wkv_ref, wp_ref, bp_ref,
                                out_ref, attn_ref,
                                kv_scr, attn_scr, o_scr,
                                *, num_heads, head_dim, q_tile):
    # x_ref:    (N, C)     full sequence for this batch element (batch squeezed)
    # wq_ref:   (C, C)     query weights, softmax scale pre-folded
    # wkv_ref:  (C, 2C)    key|value weights (torch layout: [:, :C]=K, [:, C:]=V)
    # wp_ref:   (C, C)     output-projection weights
    # bp_ref:   (1, C)     output-projection bias
    # out_ref:  (TQ, C)    output rows for this query tile
    # attn_ref: (TQ, Np)   head-averaged attention rows (lane-padded to Np)
    # kv_scr:   (N, 2C)    VMEM scratch, persists across query tiles
    # attn_scr: (TQ, N)    f32 head-sum accumulator
    # o_scr:    (TQ, C)    f32 merged-head output rows
    qi = pl.program_id(1)
    H = num_heads
    d = head_dim
    TQ = q_tile
    N, C = x_ref.shape
    Np = attn_ref.shape[-1]
    n_pad = Np - N
    cdt = x_ref.dtype  # feed MXU operands in the activation dtype (bf16-ready)

    # ---- K|V projection: once per batch element, one full-width matmul. ----
    @pl.when(qi == 0)
    def _():
        kv_scr[...] = jnp.dot(
            x_ref[...], wkv_ref[...],
            preferred_element_type=jnp.float32).astype(kv_scr.dtype)

    # ---- Query rows for this tile; one full-width Q projection. ----
    row0 = pl.multiple_of(qi * TQ, TQ)
    xq = x_ref[pl.ds(row0, TQ), :]                                  # (TQ, C)
    q_all = jnp.dot(xq, wq_ref[...],
                    preferred_element_type=jnp.float32)             # (TQ, C) f32

    attn_scr[...] = jnp.zeros_like(attn_scr)

    # ---- Per-head attention (static unrolled loop, scratch accumulators). ----
    for h in range(H):
        c0 = h * d
        q_h = q_all[:, c0:c0 + d].astype(cdt)                       # (TQ, d)
        k_h = kv_scr[:, c0:c0 + d]                                  # (N, d)
        v_h = kv_scr[:, C + c0:C + c0 + d]                          # (N, d)

        # scores = q_h @ k_h^T without an explicit transpose.
        s = lax.dot_general(q_h, k_h, (((1,), (1,)), ((), ())),
                            preferred_element_type=jnp.float32)     # (TQ, N)

        # Numerically stable softmax; EUP reciprocal + one Newton step.
        m = jnp.max(s, axis=-1, keepdims=True)
        e = jnp.exp(s - m)
        denom = jnp.sum(e, axis=-1, keepdims=True)
        r = pl.reciprocal(denom, approx=True)
        r = r * (2.0 - denom * r)
        p = e * r                                                    # (TQ, N) f32

        attn_scr[...] += p
        # Per-head output written at its column range; projection deferred.
        o_scr[:, c0:c0 + d] = jnp.dot(p.astype(cdt), v_h,
                                      preferred_element_type=jnp.float32)

    # ---- Single full-width output projection + bias. ----
    y = jnp.dot(o_scr[...].astype(cdt), wp_ref[...],
                preferred_element_type=jnp.float32) + bp_ref[...]
    out_ref[...] = y.astype(out_ref.dtype)

    attn_mean = attn_scr[...] * (1.0 / H)
    if n_pad:
        attn_mean = jnp.concatenate(
            [attn_mean, jnp.zeros((TQ, n_pad), attn_mean.dtype)], axis=-1)
    attn_ref[...] = attn_mean.astype(attn_ref.dtype)


def _device_kind():
    try:
        return jax.devices()[0].device_kind.lower()
    except Exception:
        return ""


def _gen_params(kind):
    """(max query-tile rows, vmem_limit cap in bytes) per TPU generation."""
    if "v7" in kind:
        return 256, 56 * 2 ** 20        # 64 MiB physical VMEM -> leave headroom
    if "v6" in kind:
        return 512, 112 * 2 ** 20       # 128 MiB physical, 256-wide MXU
    if "v5" in kind or "v4" in kind:
        return 128, 112 * 2 ** 20       # 128-wide MXU, 1 vector-store slot
    return 256, 56 * 2 ** 20            # unknown -> conservative


def _choose_q_tile(n, max_rows):
    """Largest query tile <= max_rows that divides N and keeps 8-row alignment."""
    if n <= max_rows:
        return n
    for tq in range(max_rows, 7, -1):
        if n % tq == 0 and tq % 8 == 0:
            return tq
    # Fallback: no 8-aligned divisor (e.g. N=197); process the whole sequence.
    return n


def efficient_attention(x, wq, wkv, wp, bp, *, num_heads, qk_scale=None,
                        q_tile=None):
    """x: (B, N, C). wq: (C, C), wkv: (C, 2C), wp: (C, C), bp: (C,).

    Returns (out (B, N, C), attn_mean (B, N, N)), matching the PyTorch module.
    """
    B, N, C = x.shape
    assert C % num_heads == 0
    H = num_heads
    d = C // H
    scale = float(qk_scale) if qk_scale is not None else d ** (-0.5)

    kind = _device_kind()
    max_rows, vmem_cap = _gen_params(kind)

    TQ = q_tile if q_tile is not None else _choose_q_tile(N, max_rows)
    assert N % TQ == 0
    n_q = N // TQ

    # Lane-dense attention output: pad the last dim up to a multiple of 128
    # when the relative overhead is small (N > 128); tiny N keeps exact width.
    if N % 128 == 0 or N < 128:
        Np = N
    else:
        Np = ((N + 127) // 128) * 128

    # Fold the softmax scale into Wq once, outside the kernel.
    wq_s = (wq * scale).astype(wq.dtype)
    bp2 = bp.reshape(1, C)

    kernel = functools.partial(_efficient_attention_kernel,
                               num_heads=H, head_dim=d, q_tile=TQ)

    xb = jnp.dtype(x.dtype).itemsize
    wb = jnp.dtype(wq.dtype).itemsize
    flops = B * (8 * N * C * C + 4 * N * N * C)
    transcendentals = B * H * N * N
    bytes_accessed = (2 * B * N * C * xb        # x in, out
                      + B * N * Np * xb         # attn out
                      + (4 * C * C + C) * wb)   # weights + bias

    # Rough VMEM estimate (streams, scratch, in-kernel temporaries), capped
    # generation-aware.
    est = (2 * N * C * xb                       # x (double-buffered)
           + 2 * (4 * C * C + C) * wb           # weights (worst case 2 bufs)
           + 2 * (TQ * C + TQ * Np) * xb        # outputs (double-buffered)
           + 2 * N * C * xb                     # K|V scratch
           + (TQ * C + TQ * N) * 4              # f32 scratch accumulators
           + 6 * TQ * max(N, C) * 4)            # f32 temporaries
    vmem_limit = int(min(max(int(1.5 * est), 16 * 2 ** 20), vmem_cap))

    out_shape = (jax.ShapeDtypeStruct((B, N, C), x.dtype),
                 jax.ShapeDtypeStruct((B, N, Np), x.dtype))
    out_specs = (pl.BlockSpec((None, TQ, C), lambda b, qi: (b, qi, 0)),
                 pl.BlockSpec((None, TQ, Np), lambda b, qi: (b, qi, 0)))
    scratch_shapes = [
        pltpu.VMEM((N, 2 * C), x.dtype),     # K|V, heads concatenated on lanes
        pltpu.VMEM((TQ, N), jnp.float32),    # attention head-sum accumulator
        pltpu.VMEM((TQ, C), jnp.float32),    # merged-head output rows
    ]

    def build_call(single_buffer_weights):
        # Grid-invariant weight blocks: single-buffer to save VMEM.
        wkw = ({"pipeline_mode": pl.Buffered(1)}
               if single_buffer_weights else {})
        in_specs = [
            pl.BlockSpec((None, N, C), lambda b, qi: (b, 0, 0)),      # x
            pl.BlockSpec((C, C), lambda b, qi: (0, 0), **wkw),        # Wq*scale
            pl.BlockSpec((C, 2 * C), lambda b, qi: (0, 0), **wkw),    # Wkv
            pl.BlockSpec((C, C), lambda b, qi: (0, 0), **wkw),        # Wproj
            pl.BlockSpec((1, C), lambda b, qi: (0, 0), **wkw),        # bias
        ]
        return pl.pallas_call(
            kernel,
            out_shape=out_shape,
            grid=(B, n_q),
            in_specs=in_specs,
            out_specs=out_specs,
            scratch_shapes=scratch_shapes,
            compiler_params=pltpu.CompilerParams(
                dimension_semantics=("parallel", "arbitrary"),
                vmem_limit_bytes=vmem_limit),
            cost_estimate=pl.CostEstimate(
                flops=flops, transcendentals=transcendentals,
                bytes_accessed=bytes_accessed),
        )

    try:
        out, attn_p = build_call(True)(x, wq_s, wkv, wp, bp2)
    except Exception:
        # Fallback for jax versions without BlockSpec(pipeline_mode=...).
        out, attn_p = build_call(False)(x, wq_s, wkv, wp, bp2)

    attn = attn_p if Np == N else attn_p[:, :, :N]
    return out, attn


def _reference(x, wq, wkv, wp, bp, num_heads):
    """Pure-JAX reference mirroring the PyTorch forward."""
    B, N, C = x.shape
    d = C // num_heads
    scale = d ** (-0.5)
    q = (x @ wq).reshape(B, N, num_heads, d).transpose(0, 2, 1, 3)
    kv = (x @ wkv).reshape(B, N, 2, num_heads, d).transpose(2, 0, 3, 1, 4)
    k, v = kv[0], kv[1]
    attn = jnp.einsum('bhnd,bhmd->bhnm', q, k) * scale
    attn = jax.nn.softmax(attn, axis=-1)
    o = jnp.einsum('bhnm,bhmd->bhnd', attn, v)
    o = o.transpose(0, 2, 1, 3).reshape(B, N, C)
    o = o @ wp + bp
    return o, attn.mean(axis=1)


if __name__ == "__main__":
    B, N, C = 2, 8, 32
    num_heads = 8

    key = jax.random.PRNGKey(0)
    kx, kq, kkv, kp, kb = jax.random.split(key, 5)

    x = jax.random.normal(kx, (B, N, C), dtype=jnp.float32)
    # Deterministic parameter init (shapes implied by the nn.Linear layers,
    # stored as (in_features, out_features) so y = x @ W + b).
    wq = jax.random.normal(kq, (C, C), dtype=jnp.float32) / jnp.sqrt(C)
    wkv = jax.random.normal(kkv, (C, 2 * C), dtype=jnp.float32) / jnp.sqrt(C)
    wp = jax.random.normal(kp, (C, C), dtype=jnp.float32) / jnp.sqrt(C)
    bp = jax.random.normal(kb, (C,), dtype=jnp.float32) * 0.01

    out, attn = efficient_attention(x, wq, wkv, wp, bp, num_heads=num_heads)
    out = jax.block_until_ready(out)
    attn = jax.block_until_ready(attn)

    out_ref, attn_ref = _reference(x, wq, wkv, wp, bp, num_heads)
    assert out.shape == (B, N, C) and attn.shape == (B, N, N)
    assert jnp.allclose(out, out_ref, atol=2e-4, rtol=2e-4)
    assert jnp.allclose(attn, attn_ref, atol=1e-4, rtol=1e-4)

    print("KERNEL_OK")
</pallas_src>

<mosaic_0001>
module attributes {stable_mosaic.version = 11 : i64} {
  func.func @_efficient_attention_kernel(%arg0: i32, %arg1: i32, %arg2: memref<1x8x32xf32, #tpu.memory_space<vmem>>, %arg3: memref<32x32xf32, #tpu.memory_space<vmem>>, %arg4: memref<32x64xf32, #tpu.memory_space<vmem>>, %arg5: memref<32x32xf32, #tpu.memory_space<vmem>>, %arg6: memref<1x32xf32, #tpu.memory_space<vmem>>, %arg7: memref<1x8x32xf32, #tpu.memory_space<vmem>>, %arg8: memref<1x8x8xf32, #tpu.memory_space<vmem>>, %arg9: memref<8x64xf32, #tpu.memory_space<vmem>>, %arg10: memref<8x8xf32, #tpu.memory_space<vmem>>, %arg11: memref<8x32xf32, #tpu.memory_space<vmem>>) attributes {dimension_semantics = [#tpu.dimension_semantics<parallel>, #tpu.dimension_semantics<arbitrary>], iteration_bounds = array<i64: 2, 1>, scalar_prefetch = 0 : i64, scratch_operands = 3 : i64, tpu.core_type = #tpu.core_type<tc>, window_params = [{transform_indices = @transform_0, window_bounds = array<i64: 1, 8, 32>}, {pipeline_mode = #tpu.pipeline_mode<synchronous>, transform_indices = @transform_1, window_bounds = array<i64: 32, 32>}, {pipeline_mode = #tpu.pipeline_mode<synchronous>, transform_indices = @transform_2, window_bounds = array<i64: 32, 64>}, {pipeline_mode = #tpu.pipeline_mode<synchronous>, transform_indices = @transform_3, window_bounds = array<i64: 32, 32>}, {pipeline_mode = #tpu.pipeline_mode<synchronous>, transform_indices = @transform_4, window_bounds = array<i64: 1, 32>}, {transform_indices = @transform_5, window_bounds = array<i64: 1, 8, 32>}, {transform_indices = @transform_6, window_bounds = array<i64: 1, 8, 8>}]} {
    %c0_i32 = arith.constant 0 : i32
    %0 = arith.cmpi eq, %arg1, %c0_i32 : i32
    %1 = arith.extui %0 : i1 to i32
    %c0_i32_0 = arith.constant 0 : i32
    %2 = arith.cmpi ne, %1, %c0_i32_0 : i32
    scf.if %2 {
      %c0_128 = arith.constant 0 : index
      %c0_129 = arith.constant 0 : index
      %c0_130 = arith.constant 0 : index
      %211 = vector.load %arg2[%c0_128, %c0_129, %c0_130] : memref<1x8x32xf32, #tpu.memory_space<vmem>>, vector<1x8x32xf32>
      %212 = vector.shape_cast %211 : vector<1x8x32xf32> to vector<8x32xf32>
      %c0_131 = arith.constant 0 : index
      %c0_132 = arith.constant 0 : index
      %213 = vector.load %arg4[%c0_131, %c0_132] : memref<32x64xf32, #tpu.memory_space<vmem>>, vector<32x64xf32>
      %cst_133 = arith.constant dense<0.000000e+00> : vector<8x64xf32>
      %214 = tpu.matmul %212, %213, %cst_133 {dimension_numbers = #tpu.dot_dimension_numbers<[1], [0], [0], [1], [0, 0, 1, 1], [], []>} : vector<8x32xf32>, vector<32x64xf32>, vector<8x64xf32> -> vector<8x64xf32>
      %c0_134 = arith.constant 0 : index
      %c0_135 = arith.constant 0 : index
      %215 = vector.load %arg9[%c0_134, %c0_135] : memref<8x64xf32, #tpu.memory_space<vmem>>, vector<8x64xf32>
      tpu.vector_store %arg9[%c0_134, %c0_135], %214 {strides = array<i32>} : memref<8x64xf32, #tpu.memory_space<vmem>>, vector<8x64xf32>,
    } else {
    }
    %c8_i32 = arith.constant 8 : i32
    %3 = arith.muli %arg1, %c8_i32 : i32
    %4 = tpu.assume_multiple %3, 8 : i32
    %c0 = arith.constant 0 : index
    %5 = arith.index_cast %4 : i32 to index
    %c0_1 = arith.constant 0 : index
    %6 = vector.load %arg2[%c0, %5, %c0_1] : memref<1x8x32xf32, #tpu.memory_space<vmem>>, vector<1x8x32xf32>
    %7 = vector.shape_cast %6 : vector<1x8x32xf32> to vector<8x32xf32>
    %c0_2 = arith.constant 0 : index
    %c0_3 = arith.constant 0 : index
    %8 = vector.load %arg3[%c0_2, %c0_3] : memref<32x32xf32, #tpu.memory_space<vmem>>, vector<32x32xf32>
    %cst = arith.constant dense<0.000000e+00> : vector<8x32xf32>
    %9 = tpu.matmul %7, %8, %cst {dimension_numbers = #tpu.dot_dimension_numbers<[1], [0], [0], [1], [0, 0, 1, 1], [], []>} : vector<8x32xf32>, vector<32x32xf32>, vector<8x32xf32> -> vector<8x32xf32>
    %cst_4 = arith.constant 0.000000e+00 : f32
    %10 = vector.broadcast %cst_4 : f32 to vector<8x8xf32>
    %c0_5 = arith.constant 0 : index
    %c0_6 = arith.constant 0 : index
    %11 = vector.load %arg10[%c0_5, %c0_6] : memref<8x8xf32, #tpu.memory_space<vmem>>, vector<8x8xf32>
    tpu.vector_store %arg10[%c0_5, %c0_6], %10 {strides = array<i32>} : memref<8x8xf32, #tpu.memory_space<vmem>>, vector<8x8xf32>,
    %12 = vector.extract_strided_slice %9 {offsets = [0, 0], sizes = [8, 4], strides = [1, 1]} : vector<8x32xf32> to vector<8x4xf32>
    %c0_7 = arith.constant 0 : index
    %c0_8 = arith.constant 0 : index
    %13 = vector.load %arg9[%c0_7, %c0_8] : memref<8x64xf32, #tpu.memory_space<vmem>>, vector<8x4xf32>
    %c0_9 = arith.constant 0 : index
    %c32 = arith.constant 32 : index
    %14 = vector.load %arg9[%c0_9, %c32] : memref<8x64xf32, #tpu.memory_space<vmem>>, vector<8x4xf32>
    %cst_10 = arith.constant dense<0.000000e+00> : vector<8x8xf32>
    %15 = tpu.matmul %12, %13, %cst_10 {dimension_numbers = #tpu.dot_dimension_numbers<[1], [1], [0], [0], [0, 0, 1, 0], [], []>} : vector<8x4xf32>, vector<8x4xf32>, vector<8x8xf32> -> vector<8x8xf32>
    %cst_11 = arith.constant dense<0xFF800000> : vector<8xf32>
    %16 = vector.multi_reduction <maximumf>, %15, %cst_11 [1] : vector<8x8xf32> to vector<8xf32>
    %17 = vector.shape_cast %16 : vector<8xf32> to vector<8x1xf32>
    %18 = vector.broadcast %17 : vector<8x1xf32> to vector<8x8xf32>
    %19 = arith.subf %15, %18 : vector<8x8xf32>
    %20 = math.exp %19 : vector<8x8xf32>
    %cst_12 = arith.constant dense<0.000000e+00> : vector<8xf32>
    %21 = vector.multi_reduction <add>, %20, %cst_12 [1] : vector<8x8xf32> to vector<8xf32>
    %22 = vector.shape_cast %21 : vector<8xf32> to vector<8x1xf32>
    %23 = tpu.reciprocal %22 {approx = true} : vector<8x1xf32> -> vector<8x1xf32>
    %24 = arith.mulf %22, %23 : vector<8x1xf32>
    %cst_13 = arith.constant 2.000000e+00 : f32
    %25 = vector.broadcast %cst_13 : f32 to vector<8x1xf32>
    %26 = arith.subf %25, %24 : vector<8x1xf32>
    %27 = arith.mulf %23, %26 : vector<8x1xf32>
    %28 = vector.broadcast %27 : vector<8x1xf32> to vector<8x8xf32>
    %29 = arith.mulf %20, %28 : vector<8x8xf32>
    %c0_14 = arith.constant 0 : index
    %c0_15 = arith.constant 0 : index
    %30 = vector.load %arg10[%c0_14, %c0_15] : memref<8x8xf32, #tpu.memory_space<vmem>>, vector<8x8xf32>
    %31 = arith.addf %30, %29 : vector<8x8xf32>
    %c0_16 = arith.constant 0 : index
    %c0_17 = arith.constant 0 : index
    %32 = vector.load %arg10[%c0_16, %c0_17] : memref<8x8xf32, #tpu.memory_space<vmem>>, vector<8x8xf32>
    tpu.vector_store %arg10[%c0_16, %c0_17], %31 {strides = array<i32>} : memref<8x8xf32, #tpu.memory_space<vmem>>, vector<8x8xf32>,
    %cst_18 = arith.constant dense<0.000000e+00> : vector<8x4xf32>
    %33 = tpu.matmul %29, %14, %cst_18 {dimension_numbers = #tpu.dot_dimension_numbers<[1], [0], [0], [1], [0, 0, 1, 1], [], []>} : vector<8x8xf32>, vector<8x4xf32>, vector<8x4xf32> -> vector<8x4xf32>
    %c0_19 = arith.constant 0 : index
    %c0_20 = arith.constant 0 : index
    %34 = vector.load %arg11[%c0_19, %c0_20] : memref<8x32xf32, #tpu.memory_space<vmem>>, vector<8x4xf32>
    tpu.vector_store %arg11[%c0_19, %c0_20], %33 {strides = array<i32>} : memref<8x32xf32, #tpu.memory_space<vmem>>, vector<8x4xf32>,
    %35 = vector.extract_strided_slice %9 {offsets = [0, 4], sizes = [8, 4], strides = [1, 1]} : vector<8x32xf32> to vector<8x4xf32>
    %c0_21 = arith.constant 0 : index
    %c4 = arith.constant 4 : index
    %36 = vector.load %arg9[%c0_21, %c4] : memref<8x64xf32, #tpu.memory_space<vmem>>, vector<8x4xf32>
    %c0_22 = arith.constant 0 : index
    %c36 = arith.constant 36 : index
    %37 = vector.load %arg9[%c0_22, %c36] : memref<8x64xf32, #tpu.memory_space<vmem>>, vector<8x4xf32>
    %cst_23 = arith.constant dense<0.000000e+00> : vector<8x8xf32>
    %38 = tpu.matmul %35, %36, %cst_23 {dimension_numbers = #tpu.dot_dimension_numbers<[1], [1], [0], [0], [0, 0, 1, 0], [], []>} : vector<8x4xf32>, vector<8x4xf32>, vector<8x8xf32> -> vector<8x8xf32>
    %cst_24 = arith.constant dense<0xFF800000> : vector<8xf32>
    %39 = vector.multi_reduction <maximumf>, %38, %cst_24 [1] : vector<8x8xf32> to vector<8xf32>
    %40 = vector.shape_cast %39 : vector<8xf32> to vector<8x1xf32>
    %41 = vector.broadcast %40 : vector<8x1xf32> to vector<8x8xf32>
    %42 = arith.subf %38, %41 : vector<8x8xf32>
    %43 = math.exp %42 : vector<8x8xf32>
    %cst_25 = arith.constant dense<0.000000e+00> : vector<8xf32>
    %44 = vector.multi_reduction <add>, %43, %cst_25 [1] : vector<8x8xf32> to vector<8xf32>
    %45 = vector.shape_cast %44 : vector<8xf32> to vector<8x1xf32>
    %46 = tpu.reciprocal %45 {approx = true} : vector<8x1xf32> -> vector<8x1xf32>
    %47 = arith.mulf %45, %46 : vector<8x1xf32>
    %cst_26 = arith.constant 2.000000e+00 : f32
    %48 = vector.broadcast %cst_26 : f32 to vector<8x1xf32>
    %49 = arith.subf %48, %47 : vector<8x1xf32>
    %50 = arith.mulf %46, %49 : vector<8x1xf32>
    %51 = vector.broadcast %50 : vector<8x1xf32> to vector<8x8xf32>
    %52 = arith.mulf %43, %51 : vector<8x8xf32>
    %c0_27 = arith.constant 0 : index
    %c0_28 = arith.constant 0 : index
    %53 = vector.load %arg10[%c0_27, %c0_28] : memref<8x8xf32, #tpu.memory_space<vmem>>, vector<8x8xf32>
    %54 = arith.addf %53, %52 : vector<8x8xf32>
    %c0_29 = arith.constant 0 : index
    %c0_30 = arith.constant 0 : index
    %55 = vector.load %arg10[%c0_29, %c0_30] : memref<8x8xf32, #tpu.memory_space<vmem>>, vector<8x8xf32>
    tpu.vector_store %arg10[%c0_29, %c0_30], %54 {strides = array<i32>} : memref<8x8xf32, #tpu.memory_space<vmem>>, vector<8x8xf32>,
    %cst_31 = arith.constant dense<0.000000e+00> : vector<8x4xf32>
    %56 = tpu.matmul %52, %37, %cst_31 {dimension_numbers = #tpu.dot_dimension_numbers<[1], [0], [0], [1], [0, 0, 1, 1], [], []>} : vector<8x8xf32>, vector<8x4xf32>, vector<8x4xf32> -> vector<8x4xf32>
    %c0_32 = arith.constant 0 : index
    %c4_33 = arith.constant 4 : index
    %57 = vector.load %arg11[%c0_32, %c4_33] : memref<8x32xf32, #tpu.memory_space<vmem>>, vector<8x4xf32>
    tpu.vector_store %arg11[%c0_32, %c4_33], %56 {strides = array<i32>} : memref<8x32xf32, #tpu.memory_space<vmem>>, vector<8x4xf32>,
    %58 = vector.extract_strided_slice %9 {offsets = [0, 8], sizes = [8, 4], strides = [1, 1]} : vector<8x32xf32> to vector<8x4xf32>
    %c0_34 = arith.constant 0 : index
    %c8 = arith.constant 8 : index
    %59 = vector.load %arg9[%c0_34, %c8] : memref<8x64xf32, #tpu.memory_space<vmem>>, vector<8x4xf32>
    %c0_35 = arith.constant 0 : index
    %c40 = arith.constant 40 : index
    %60 = vector.load %arg9[%c0_35, %c40] : memref<8x64xf32, #tpu.memory_space<vmem>>, vector<8x4xf32>
    %cst_36 = arith.constant dense<0.000000e+00> : vector<8x8xf32>
    %61 = tpu.matmul %58, %59, %cst_36 {dimension_numbers = #tpu.dot_dimension_numbers<[1], [1], [0], [0], [0, 0, 1, 0], [], []>} : vector<8x4xf32>, vector<8x4xf32>, vector<8x8xf32> -> vector<8x8xf32>
    %cst_37 = arith.constant dense<0xFF800000> : vector<8xf32>
    %62 = vector.multi_reduction <maximumf>, %61, %cst_37 [1] : vector<8x8xf32> to vector<8xf32>
    %63 = vector.shape_cast %62 : vector<8xf32> to vector<8x1xf32>
    %64 = vector.broadcast %63 : vector<8x1xf32> to vector<8x8xf32>
    %65 = arith.subf %61, %64 : vector<8x8xf32>
    %66 = math.exp %65 : vector<8x8xf32>
    %cst_38 = arith.constant dense<0.000000e+00> : vector<8xf32>
    %67 = vector.multi_reduction <add>, %66, %cst_38 [1] : vector<8x8xf32> to vector<8xf32>
    %68 = vector.shape_cast %67 : vector<8xf32> to vector<8x1xf32>
    %69 = tpu.reciprocal %68 {approx = true} : vector<8x1xf32> -> vector<8x1xf32>
    %70 = arith.mulf %68, %69 : vector<8x1xf32>
    %cst_39 = arith.constant 2.000000e+00 : f32
    %71 = vector.broadcast %cst_39 : f32 to vector<8x1xf32>
    %72 = arith.subf %71, %70 : vector<8x1xf32>
    %73 = arith.mulf %69, %72 : vector<8x1xf32>
    %74 = vector.broadcast %73 : vector<8x1xf32> to vector<8x8xf32>
    %75 = arith.mulf %66, %74 : vector<8x8xf32>
    %c0_40 = arith.constant 0 : index
    %c0_41 = arith.constant 0 : index
    %76 = vector.load %arg10[%c0_40, %c0_41] : memref<8x8xf32, #tpu.memory_space<vmem>>, vector<8x8xf32>
    %77 = arith.addf %76, %75 : vector<8x8xf32>
    %c0_42 = arith.constant 0 : index
    %c0_43 = arith.constant 0 : index
    %78 = vector.load %arg10[%c0_42, %c0_43] : memref<8x8xf32, #tpu.memory_space<vmem>>, vector<8x8xf32>
    tpu.vector_store %arg10[%c0_42, %c0_43], %77 {strides = array<i32>} : memref<8x8xf32, #tpu.memory_space<vmem>>, vector<8x8xf32>,
    %cst_44 = arith.constant dense<0.000000e+00> : vector<8x4xf32>
    %79 = tpu.matmul %75, %60, %cst_44 {dimension_numbers = #tpu.dot_dimension_numbers<[1], [0], [0], [1], [0, 0, 1, 1], [], []>} : vector<8x8xf32>, vector<8x4xf32>, vector<8x4xf32> -> vector<8x4xf32>
    %c0_45 = arith.constant 0 : index
    %c8_46 = arith.constant 8 : index
    %80 = vector.load %arg11[%c0_45, %c8_46] : memref<8x32xf32, #tpu.memory_space<vmem>>, vector<8x4xf32>
    tpu.vector_store %arg11[%c0_45, %c8_46], %79 {strides = array<i32>} : memref<8x32xf32, #tpu.memory_space<vmem>>, vector<8x4xf32>,
    %81 = vector.extract_strided_slice %9 {offsets = [0, 12], sizes = [8, 4], strides = [1, 1]} : vector<8x32xf32> to vector<8x4xf32>
    %c0_47 = arith.constant 0 : index
    %c12 = arith.constant 12 : index
    %82 = vector.load %arg9[%c0_47, %c12] : memref<8x64xf32, #tpu.memory_space<vmem>>, vector<8x4xf32>
    %c0_48 = arith.constant 0 : index
    %c44 = arith.constant 44 : index
    %83 = vector.load %arg9[%c0_48, %c44] : memref<8x64xf32, #tpu.memory_space<vmem>>, vector<8x4xf32>
    %cst_49 = arith.constant dense<0.000000e+00> : vector<8x8xf32>
    %84 = tpu.matmul %81, %82, %cst_49 {dimension_numbers = #tpu.dot_dimension_numbers<[1], [1], [0], [0], [0, 0, 1, 0], [], []>} : vector<8x4xf32>, vector<8x4xf32>, vector<8x8xf32> -> vector<8x8xf32>
    %cst_50 = arith.constant dense<0xFF800000> : vector<8xf32>
    %85 = vector.multi_reduction <maximumf>, %84, %cst_50 [1] : vector<8x8xf32> to vector<8xf32>
    %86 = vector.shape_cast %85 : vector<8xf32> to vector<8x1xf32>
    %87 = vector.broadcast %86 : vector<8x1xf32> to vector<8x8xf32>
    %88 = arith.subf %84, %87 : vector<8x8xf32>
    %89 = math.exp %88 : vector<8x8xf32>
    %cst_51 = arith.constant dense<0.000000e+00> : vector<8xf32>
    %90 = vector.multi_reduction <add>, %89, %cst_51 [1] : vector<8x8xf32> to vector<8xf32>
    %91 = vector.shape_cast %90 : vector<8xf32> to vector<8x1xf32>
    %92 = tpu.reciprocal %91 {approx = true} : vector<8x1xf32> -> vector<8x1xf32>
    %93 = arith.mulf %91, %92 : vector<8x1xf32>
    %cst_52 = arith.constant 2.000000e+00 : f32
    %94 = vector.broadcast %cst_52 : f32 to vector<8x1xf32>
    %95 = arith.subf %94, %93 : vector<8x1xf32>
    %96 = arith.mulf %92, %95 : vector<8x1xf32>
    %97 = vector.broadcast %96 : vector<8x1xf32> to vector<8x8xf32>
    %98 = arith.mulf %89, %97 : vector<8x8xf32>
    %c0_53 = arith.constant 0 : index
    %c0_54 = arith.constant 0 : index
    %99 = vector.load %arg10[%c0_53, %c0_54] : memref<8x8xf32, #tpu.memory_space<vmem>>, vector<8x8xf32>
    %100 = arith.addf %99, %98 : vector<8x8xf32>
    %c0_55 = arith.constant 0 : index
    %c0_56 = arith.constant 0 : index
    %101 = vector.load %arg10[%c0_55, %c0_56] : memref<8x8xf32, #tpu.memory_space<vmem>>, vector<8x8xf32>
    tpu.vector_store %arg10[%c0_55, %c0_56], %100 {strides = array<i32>} : memref<8x8xf32, #tpu.memory_space<vmem>>, vector<8x8xf32>,
    %cst_57 = arith.constant dense<0.000000e+00> : vector<8x4xf32>
    %102 = tpu.matmul %98, %83, %cst_57 {dimension_numbers = #tpu.dot_dimension_numbers<[1], [0], [0], [1], [0, 0, 1, 1], [], []>} : vector<8x8xf32>, vector<8x4xf32>, vector<8x4xf32> -> vector<8x4xf32>
    %c0_58 = arith.constant 0 : index
    %c12_59 = arith.constant 12 : index
    %103 = vector.load %arg11[%c0_58, %c12_59] : memref<8x32xf32, #tpu.memory_space<vmem>>, vector<8x4xf32>
    tpu.vector_store %arg11[%c0_58, %c12_59], %102 {strides = array<i32>} : memref<8x32xf32, #tpu.memory_space<vmem>>, vector<8x4xf32>,
    %104 = vector.extract_strided_slice %9 {offsets = [0, 16], sizes = [8, 4], strides = [1, 1]} : vector<8x32xf32> to vector<8x4xf32>
    %c0_60 = arith.constant 0 : index
    %c16 = arith.constant 16 : index
    %105 = vector.load %arg9[%c0_60, %c16] : memref<8x64xf32, #tpu.memory_space<vmem>>, vector<8x4xf32>
    %c0_61 = arith.constant 0 : index
    %c48 = arith.constant 48 : index
    %106 = vector.load %arg9[%c0_61, %c48] : memref<8x64xf32, #tpu.memory_space<vmem>>, vector<8x4xf32>
    %cst_62 = arith.constant dense<0.000000e+00> : vector<8x8xf32>
    %107 = tpu.matmul %104, %105, %cst_62 {dimension_numbers = #tpu.dot_dimension_numbers<[1], [1], [0], [0], [0, 0, 1, 0], [], []>} : vector<8x4xf32>, vector<8x4xf32>, vector<8x8xf32> -> vector<8x8xf32>
    %cst_63 = arith.constant dense<0xFF800000> : vector<8xf32>
    %108 = vector.multi_reduction <maximumf>, %107, %cst_63 [1] : vector<8x8xf32> to vector<8xf32>
    %109 = vector.shape_cast %108 : vector<8xf32> to vector<8x1xf32>
    %110 = vector.broadcast %109 : vector<8x1xf32> to vector<8x8xf32>
    %111 = arith.subf %107, %110 : vector<8x8xf32>
    %112 = math.exp %111 : vector<8x8xf32>
    %cst_64 = arith.constant dense<0.000000e+00> : vector<8xf32>
    %113 = vector.multi_reduction <add>, %112, %cst_64 [1] : vector<8x8xf32> to vector<8xf32>
    %114 = vector.shape_cast %113 : vector<8xf32> to vector<8x1xf32>
    %115 = tpu.reciprocal %114 {approx = true} : vector<8x1xf32> -> vector<8x1xf32>
    %116 = arith.mulf %114, %115 : vector<8x1xf32>
    %cst_65 = arith.constant 2.000000e+00 : f32
    %117 = vector.broadcast %cst_65 : f32 to vector<8x1xf32>
    %118 = arith.subf %117, %116 : vector<8x1xf32>
    %119 = arith.mulf %115, %118 : vector<8x1xf32>
    %120 = vector.broadcast %119 : vector<8x1xf32> to vector<8x8xf32>
    %121 = arith.mulf %112, %120 : vector<8x8xf32>
    %c0_66 = arith.constant 0 : index
    %c0_67 = arith.constant 0 : index
    %122 = vector.load %arg10[%c0_66, %c0_67] : memref<8x8xf32, #tpu.memory_space<vmem>>, vector<8x8xf32>
    %123 = arith.addf %122, %121 : vector<8x8xf32>
    %c0_68 = arith.constant 0 : index
    %c0_69 = arith.constant 0 : index
    %124 = vector.load %arg10[%c0_68, %c0_69] : memref<8x8xf32, #tpu.memory_space<vmem>>, vector<8x8xf32>
    tpu.vector_store %arg10[%c0_68, %c0_69], %123 {strides = array<i32>} : memref<8x8xf32, #tpu.memory_space<vmem>>, vector<8x8xf32>,
    %cst_70 = arith.constant dense<0.000000e+00> : vector<8x4xf32>
    %125 = tpu.matmul %121, %106, %cst_70 {dimension_numbers = #tpu.dot_dimension_numbers<[1], [0], [0], [1], [0, 0, 1, 1], [], []>} : vector<8x8xf32>, vector<8x4xf32>, vector<8x4xf32> -> vector<8x4xf32>
    %c0_71 = arith.constant 0 : index
    %c16_72 = arith.constant 16 : index
    %126 = vector.load %arg11[%c0_71, %c16_72] : memref<8x32xf32, #tpu.memory_space<vmem>>, vector<8x4xf32>
    tpu.vector_store %arg11[%c0_71, %c16_72], %125 {strides = array<i32>} : memref<8x32xf32, #tpu.memory_space<vmem>>, vector<8x4xf32>,
    %127 = vector.extract_strided_slice %9 {offsets = [0, 20], sizes = [8, 4], strides = [1, 1]} : vector<8x32xf32> to vector<8x4xf32>
    %c0_73 = arith.constant 0 : index
    %c20 = arith.constant 20 : index
    %128 = vector.load %arg9[%c0_73, %c20] : memref<8x64xf32, #tpu.memory_space<vmem>>, vector<8x4xf32>
    %c0_74 = arith.constant 0 : index
    %c52 = arith.constant 52 : index
    %129 = vector.load %arg9[%c0_74, %c52] : memref<8x64xf32, #tpu.memory_space<vmem>>, vector<8x4xf32>
    %cst_75 = arith.constant dense<0.000000e+00> : vector<8x8xf32>
    %130 = tpu.matmul %127, %128, %cst_75 {dimension_numbers = #tpu.dot_dimension_numbers<[1], [1], [0], [0], [0, 0, 1, 0], [], []>} : vector<8x4xf32>, vector<8x4xf32>, vector<8x8xf32> -> vector<8x8xf32>
    %cst_76 = arith.constant dense<0xFF800000> : vector<8xf32>
    %131 = vector.multi_reduction <maximumf>, %130, %cst_76 [1] : vector<8x8xf32> to vector<8xf32>
    %132 = vector.shape_cast %131 : vector<8xf32> to vector<8x1xf32>
    %133 = vector.broadcast %132 : vector<8x1xf32> to vector<8x8xf32>
    %134 = arith.subf %130, %133 : vector<8x8xf32>
    %135 = math.exp %134 : vector<8x8xf32>
    %cst_77 = arith.constant dense<0.000000e+00> : vector<8xf32>
    %136 = vector.multi_reduction <add>, %135, %cst_77 [1] : vector<8x8xf32> to vector<8xf32>
    %137 = vector.shape_cast %136 : vector<8xf32> to vector<8x1xf32>
    %138 = tpu.reciprocal %137 {approx = true} : vector<8x1xf32> -> vector<8x1xf32>
    %139 = arith.mulf %137, %138 : vector<8x1xf32>
    %cst_78 = arith.constant 2.000000e+00 : f32
    %140 = vector.broadcast %cst_78 : f32 to vector<8x1xf32>
    %141 = arith.subf %140, %139 : vector<8x1xf32>
    %142 = arith.mulf %138, %141 : vector<8x1xf32>
    %143 = vector.broadcast %142 : vector<8x1xf32> to vector<8x8xf32>
    %144 = arith.mulf %135, %143 : vector<8x8xf32>
    %c0_79 = arith.constant 0 : index
    %c0_80 = arith.constant 0 : index
    %145 = vector.load %arg10[%c0_79, %c0_80] : memref<8x8xf32, #tpu.memory_space<vmem>>, vector<8x8xf32>
    %146 = arith.addf %145, %144 : vector<8x8xf32>
    %c0_81 = arith.constant 0 : index
    %c0_82 = arith.constant 0 : index
    %147 = vector.load %arg10[%c0_81, %c0_82] : memref<8x8xf32, #tpu.memory_space<vmem>>, vector<8x8xf32>
    tpu.vector_store %arg10[%c0_81, %c0_82], %146 {strides = array<i32>} : memref<8x8xf32, #tpu.memory_space<vmem>>, vector<8x8xf32>,
    %cst_83 = arith.constant dense<0.000000e+00> : vector<8x4xf32>
    %148 = tpu.matmul %144, %129, %cst_83 {dimension_numbers = #tpu.dot_dimension_numbers<[1], [0], [0], [1], [0, 0, 1, 1], [], []>} : vector<8x8xf32>, vector<8x4xf32>, vector<8x4xf32> -> vector<8x4xf32>
    %c0_84 = arith.constant 0 : index
    %c20_85 = arith.constant 20 : index
    %149 = vector.load %arg11[%c0_84, %c20_85] : memref<8x32xf32, #tpu.memory_space<vmem>>, vector<8x4xf32>
    tpu.vector_store %arg11[%c0_84, %c20_85], %148 {strides = array<i32>} : memref<8x32xf32, #tpu.memory_space<vmem>>, vector<8x4xf32>,
    %150 = vector.extract_strided_slice %9 {offsets = [0, 24], sizes = [8, 4], strides = [1, 1]} : vector<8x32xf32> to vector<8x4xf32>
    %c0_86 = arith.constant 0 : index
    %c24 = arith.constant 24 : index
    %151 = vector.load %arg9[%c0_86, %c24] : memref<8x64xf32, #tpu.memory_space<vmem>>, vector<8x4xf32>
    %c0_87 = arith.constant 0 : index
    %c56 = arith.constant 56 : index
    %152 = vector.load %arg9[%c0_87, %c56] : memref<8x64xf32, #tpu.memory_space<vmem>>, vector<8x4xf32>
    %cst_88 = arith.constant dense<0.000000e+00> : vector<8x8xf32>
    %153 = tpu.matmul %150, %151, %cst_88 {dimension_numbers = #tpu.dot_dimension_numbers<[1], [1], [0], [0], [0, 0, 1, 0], [], []>} : vector<8x4xf32>, vector<8x4xf32>, vector<8x8xf32> -> vector<8x8xf32>
    %cst_89 = arith.constant dense<0xFF800000> : vector<8xf32>
    %154 = vector.multi_reduction <maximumf>, %153, %cst_89 [1] : vector<8x8xf32> to vector<8xf32>
    %155 = vector.shape_cast %154 : vector<8xf32> to vector<8x1xf32>
    %156 = vector.broadcast %155 : vector<8x1xf32> to vector<8x8xf32>
    %157 = arith.subf %153, %156 : vector<8x8xf32>
    %158 = math.exp %157 : vector<8x8xf32>
    %cst_90 = arith.constant dense<0.000000e+00> : vector<8xf32>
    %159 = vector.multi_reduction <add>, %158, %cst_90 [1] : vector<8x8xf32> to vector<8xf32>
    %160 = vector.shape_cast %159 : vector<8xf32> to vector<8x1xf32>
    %161 = tpu.reciprocal %160 {approx = true} : vector<8x1xf32> -> vector<8x1xf32>
    %162 = arith.mulf %160, %161 : vector<8x1xf32>
    %cst_91 = arith.constant 2.000000e+00 : f32
    %163 = vector.broadcast %cst_91 : f32 to vector<8x1xf32>
    %164 = arith.subf %163, %162 : vector<8x1xf32>
    %165 = arith.mulf %161, %164 : vector<8x1xf32>
    %166 = vector.broadcast %165 : vector<8x1xf32> to vector<8x8xf32>
    %167 = arith.mulf %158, %166 : vector<8x8xf32>
    %c0_92 = arith.constant 0 : index
    %c0_93 = arith.constant 0 : index
    %168 = vector.load %arg10[%c0_92, %c0_93] : memref<8x8xf32, #tpu.memory_space<vmem>>, vector<8x8xf32>
    %169 = arith.addf %168, %167 : vector<8x8xf32>
    %c0_94 = arith.constant 0 : index
    %c0_95 = arith.constant 0 : index
    %170 = vector.load %arg10[%c0_94, %c0_95] : memref<8x8xf32, #tpu.memory_space<vmem>>, vector<8x8xf32>
    tpu.vector_store %arg10[%c0_94, %c0_95], %169 {strides = array<i32>} : memref<8x8xf32, #tpu.memory_space<vmem>>, vector<8x8xf32>,
    %cst_96 = arith.constant dense<0.000000e+00> : vector<8x4xf32>
    %171 = tpu.matmul %167, %152, %cst_96 {dimension_numbers = #tpu.dot_dimension_numbers<[1], [0], [0], [1], [0, 0, 1, 1], [], []>} : vector<8x8xf32>, vector<8x4xf32>, vector<8x4xf32> -> vector<8x4xf32>
    %c0_97 = arith.constant 0 : index
    %c24_98 = arith.constant 24 : index
    %172 = vector.load %arg11[%c0_97, %c24_98] : memref<8x32xf32, #tpu.memory_space<vmem>>, vector<8x4xf32>
    tpu.vector_store %arg11[%c0_97, %c24_98], %171 {strides = array<i32>} : memref<8x32xf32, #tpu.memory_space<vmem>>, vector<8x4xf32>,
    %173 = vector.extract_strided_slice %9 {offsets = [0, 28], sizes = [8, 4], strides = [1, 1]} : vector<8x32xf32> to vector<8x4xf32>
    %c0_99 = arith.constant 0 : index
    %c28 = arith.constant 28 : index
    %174 = vector.load %arg9[%c0_99, %c28] : memref<8x64xf32, #tpu.memory_space<vmem>>, vector<8x4xf32>
    %c0_100 = arith.constant 0 : index
    %c60 = arith.constant 60 : index
    %175 = vector.load %arg9[%c0_100, %c60] : memref<8x64xf32, #tpu.memory_space<vmem>>, vector<8x4xf32>
    %cst_101 = arith.constant dense<0.000000e+00> : vector<8x8xf32>
    %176 = tpu.matmul %173, %174, %cst_101 {dimension_numbers = #tpu.dot_dimension_numbers<[1], [1], [0], [0], [0, 0, 1, 0], [], []>} : vector<8x4xf32>, vector<8x4xf32>, vector<8x8xf32> -> vector<8x8xf32>
    %cst_102 = arith.constant dense<0xFF800000> : vector<8xf32>
    %177 = vector.multi_reduction <maximumf>, %176, %cst_102 [1] : vector<8x8xf32> to vector<8xf32>
    %178 = vector.shape_cast %177 : vector<8xf32> to vector<8x1xf32>
    %179 = vector.broadcast %178 : vector<8x1xf32> to vector<8x8xf32>
    %180 = arith.subf %176, %179 : vector<8x8xf32>
    %181 = math.exp %180 : vector<8x8xf32>
    %cst_103 = arith.constant dense<0.000000e+00> : vector<8xf32>
    %182 = vector.multi_reduction <add>, %181, %cst_103 [1] : vector<8x8xf32> to vector<8xf32>
    %183 = vector.shape_cast %182 : vector<8xf32> to vector<8x1xf32>
    %184 = tpu.reciprocal %183 {approx = true} : vector<8x1xf32> -> vector<8x1xf32>
    %185 = arith.mulf %183, %184 : vector<8x1xf32>
    %cst_104 = arith.constant 2.000000e+00 : f32
    %186 = vector.broadcast %cst_104 : f32 to vector<8x1xf32>
    %187 = arith.subf %186, %185 : vector<8x1xf32>
    %188 = arith.mulf %184, %187 : vector<8x1xf32>
    %189 = vector.broadcast %188 : vector<8x1xf32> to vector<8x8xf32>
    %190 = arith.mulf %181, %189 : vector<8x8xf32>
    %c0_105 = arith.constant 0 : index
    %c0_106 = arith.constant 0 : index
    %191 = vector.load %arg10[%c0_105, %c0_106] : memref<8x8xf32, #tpu.memory_space<vmem>>, vector<8x8xf32>
    %192 = arith.addf %191, %190 : vector<8x8xf32>
    %c0_107 = arith.constant 0 : index
    %c0_108 = arith.constant 0 : index
    %193 = vector.load %arg10[%c0_107, %c0_108] : memref<8x8xf32, #tpu.memory_space<vmem>>, vector<8x8xf32>
    tpu.vector_store %arg10[%c0_107, %c0_108], %192 {strides = array<i32>} : memref<8x8xf32, #tpu.memory_space<vmem>>, vector<8x8xf32>,
    %cst_109 = arith.constant dense<0.000000e+00> : vector<8x4xf32>
    %194 = tpu.matmul %190, %175, %cst_109 {dimension_numbers = #tpu.dot_dimension_numbers<[1], [0], [0], [1], [0, 0, 1, 1], [], []>} : vector<8x8xf32>, vector<8x4xf32>, vector<8x4xf32> -> vector<8x4xf32>
    %c0_110 = arith.constant 0 : index
    %c28_111 = arith.constant 28 : index
    %195 = vector.load %arg11[%c0_110, %c28_111] : memref<8x32xf32, #tpu.memory_space<vmem>>, vector<8x4xf32>
    tpu.vector_store %arg11[%c0_110, %c28_111], %194 {strides = array<i32>} : memref<8x32xf32, #tpu.memory_space<vmem>>, vector<8x4xf32>,
    %c0_112 = arith.constant 0 : index
    %c0_113 = arith.constant 0 : index
    %196 = vector.load %arg11[%c0_112, %c0_113] : memref<8x32xf32, #tpu.memory_space<vmem>>, vector<8x32xf32>
    %c0_114 = arith.constant 0 : index
    %c0_115 = arith.constant 0 : index
    %197 = vector.load %arg5[%c0_114, %c0_115] : memref<32x32xf32, #tpu.memory_space<vmem>>, vector<32x32xf32>
    %cst_116 = arith.constant dense<0.000000e+00> : vector<8x32xf32>
    %198 = tpu.matmul %196, %197, %cst_116 {dimension_numbers = #tpu.dot_dimension_numbers<[1], [0], [0], [1], [0, 0, 1, 1], [], []>} : vector<8x32xf32>, vector<32x32xf32>, vector<8x32xf32> -> vector<8x32xf32>
    %c0_117 = arith.constant 0 : index
    %c0_118 = arith.constant 0 : index
    %199 = vector.load %arg6[%c0_117, %c0_118] : memref<1x32xf32, #tpu.memory_space<vmem>>, vector<1x32xf32>
    %200 = vector.broadcast %199 : vector<1x32xf32> to vector<8x32xf32>
    %201 = arith.addf %198, %200 : vector<8x32xf32>
    %c0_119 = arith.constant 0 : index
    %c0_120 = arith.constant 0 : index
    %c0_121 = arith.constant 0 : index
    %202 = vector.load %arg7[%c0_119, %c0_120, %c0_121] : memref<1x8x32xf32, #tpu.memory_space<vmem>>, vector<1x8x32xf32>
    %203 = vector.shape_cast %202 : vector<1x8x32xf32> to vector<8x32xf32>
    %204 = vector.shape_cast %201 : vector<8x32xf32> to vector<1x8x32xf32>
    tpu.vector_store %arg7[%c0_119, %c0_120, %c0_121], %204 {strides = array<i32>} : memref<1x8x32xf32, #tpu.memory_space<vmem>>, vector<1x8x32xf32>,
    %c0_122 = arith.constant 0 : index
    %c0_123 = arith.constant 0 : index
    %205 = vector.load %arg10[%c0_122, %c0_123] : memref<8x8xf32, #tpu.memory_space<vmem>>, vector<8x8xf32>
    %cst_124 = arith.constant 1.250000e-01 : f32
    %206 = vector.broadcast %cst_124 : f32 to vector<8x8xf32>
    %207 = arith.mulf %205, %206 : vector<8x8xf32>
    %c0_125 = arith.constant 0 : index
    %c0_126 = arith.constant 0 : index
    %c0_127 = arith.constant 0 : index
    %208 = vector.load %arg8[%c0_125, %c0_126, %c0_127] : memref<1x8x8xf32, #tpu.memory_space<vmem>>, vector<1x8x8xf32>
    %209 = vector.shape_cast %208 : vector<1x8x8xf32> to vector<8x8xf32>
    %210 = vector.shape_cast %207 : vector<8x8xf32> to vector<1x8x8xf32>
    tpu.vector_store %arg8[%c0_125, %c0_126, %c0_127], %210 {strides = array<i32>} : memref<1x8x8xf32, #tpu.memory_space<vmem>>, vector<1x8x8xf32>,
    return
  }
  func.func @transform_0(%arg0: i32, %arg1: i32) -> (i32, i32, i32) {
    %c0_i32 = arith.constant 0 : i32
    %c0_i32_0 = arith.constant 0 : i32
    %c0_i32_1 = arith.constant 0 : i32
    return %arg0, %c0_i32, %c0_i32_0 : i32, i32, i32
  }
  func.func @transform_1(%arg0: i32, %arg1: i32) -> (i32, i32) {
    %c0_i32 = arith.constant 0 : i32
    %c0_i32_0 = arith.constant 0 : i32
    %c0_i32_1 = arith.constant 0 : i32
    return %c0_i32, %c0_i32_0 : i32, i32
  }
  func.func @transform_2(%arg0: i32, %arg1: i32) -> (i32, i32) {
    %c0_i32 = arith.constant 0 : i32
    %c0_i32_0 = arith.constant 0 : i32
    %c0_i32_1 = arith.constant 0 : i32
    return %c0_i32, %c0_i32_0 : i32, i32
  }
  func.func @transform_3(%arg0: i32, %arg1: i32) -> (i32, i32) {
    %c0_i32 = arith.constant 0 : i32
    %c0_i32_0 = arith.constant 0 : i32
    %c0_i32_1 = arith.constant 0 : i32
    return %c0_i32, %c0_i32_0 : i32, i32
  }
  func.func @transform_4(%arg0: i32, %arg1: i32) -> (i32, i32) {
    %c0_i32 = arith.constant 0 : i32
    %c0_i32_0 = arith.constant 0 : i32
    %c0_i32_1 = arith.constant 0 : i32
    return %c0_i32, %c0_i32_0 : i32, i32
  }
  func.func @transform_5(%arg0: i32, %arg1: i32) -> (i32, i32, i32) {
    %c0_i32 = arith.constant 0 : i32
    %c0_i32_0 = arith.constant 0 : i32
    return %arg0, %arg1, %c0_i32 : i32, i32, i32
  }
  func.func @transform_6(%arg0: i32, %arg1: i32) -> (i32, i32, i32) {
    %c0_i32 = arith.constant 0 : i32
    %c0_i32_0 = arith.constant 0 : i32
    return %arg0, %arg1, %c0_i32 : i32, i32, i32
  }
}

module attributes {stable_mosaic.version = 11 : i64} {
  func.func @_efficient_attention_kernel(%arg0: i32, %arg1: i32, %arg2: memref<1x8x32xf32, #tpu.memory_space<vmem>>, %arg3: memref<32x32xf32, #tpu.memory_space<vmem>>, %arg4: memref<32x64xf32, #tpu.memory_space<vmem>>, %arg5: memref<32x32xf32, #tpu.memory_space<vmem>>, %arg6: memref<1x32xf32, #tpu.memory_space<vmem>>, %arg7: memref<1x8x32xf32, #tpu.memory_space<vmem>>, %arg8: memref<1x8x8xf32, #tpu.memory_space<vmem>>, %arg9: memref<8x64xf32, #tpu.memory_space<vmem>>, %arg10: memref<8x8xf32, #tpu.memory_space<vmem>>, %arg11: memref<8x32xf32, #tpu.memory_space<vmem>>) attributes {dimension_semantics = [#tpu.dimension_semantics<parallel>, #tpu.dimension_semantics<arbitrary>], iteration_bounds = array<i64: 2, 1>, scalar_prefetch = 0 : i64, scratch_operands = 3 : i64, tpu.core_type = #tpu.core_type<tc>, window_params = [{transform_indices = @transform_0, window_bounds = array<i64: 1, 8, 32>}, {pipeline_mode = #tpu.pipeline_mode<synchronous>, transform_indices = @transform_1, window_bounds = array<i64: 32, 32>}, {pipeline_mode = #tpu.pipeline_mode<synchronous>, transform_indices = @transform_2, window_bounds = array<i64: 32, 64>}, {pipeline_mode = #tpu.pipeline_mode<synchronous>, transform_indices = @transform_3, window_bounds = array<i64: 32, 32>}, {pipeline_mode = #tpu.pipeline_mode<synchronous>, transform_indices = @transform_4, window_bounds = array<i64: 1, 32>}, {transform_indices = @transform_5, window_bounds = array<i64: 1, 8, 32>}, {transform_indices = @transform_6, window_bounds = array<i64: 1, 8, 8>}]} {
    %c0_i32 = arith.constant 0 : i32
    %0 = arith.cmpi eq, %arg1, %c0_i32 : i32
    %1 = arith.extui %0 : i1 to i32
    %c0_i32_0 = arith.constant 0 : i32
    %2 = arith.cmpi ne, %1, %c0_i32_0 : i32
    scf.if %2 {
      %c0_128 = arith.constant 0 : index
      %c0_129 = arith.constant 0 : index
      %c0_130 = arith.constant 0 : index
      %211 = vector.load %arg2[%c0_128, %c0_129, %c0_130] : memref<1x8x32xf32, #tpu.memory_space<vmem>>, vector<1x8x32xf32>
      %212 = vector.shape_cast %211 : vector<1x8x32xf32> to vector<8x32xf32>
      %c0_131 = arith.constant 0 : index
      %c0_132 = arith.constant 0 : index
      %213 = vector.load %arg4[%c0_131, %c0_132] : memref<32x64xf32, #tpu.memory_space<vmem>>, vector<32x64xf32>
      %cst_133 = arith.constant dense<0.000000e+00> : vector<8x64xf32>
      %214 = tpu.matmul %212, %213, %cst_133 {dimension_numbers = #tpu.dot_dimension_numbers<[1], [0], [0], [1], [0, 0, 1, 1], [], []>} : vector<8x32xf32>, vector<32x64xf32>, vector<8x64xf32> -> vector<8x64xf32>
      %c0_134 = arith.constant 0 : index
      %c0_135 = arith.constant 0 : index
      %215 = vector.load %arg9[%c0_134, %c0_135] : memref<8x64xf32, #tpu.memory_space<vmem>>, vector<8x64xf32>
      tpu.vector_store %arg9[%c0_134, %c0_135], %214 {strides = array<i32>} : memref<8x64xf32, #tpu.memory_space<vmem>>, vector<8x64xf32>,
    } else {
    }
    %c8_i32 = arith.constant 8 : i32
    %3 = arith.muli %arg1, %c8_i32 : i32
    %4 = tpu.assume_multiple %3, 8 : i32
    %c0 = arith.constant 0 : index
    %5 = arith.index_cast %4 : i32 to index
    %c0_1 = arith.constant 0 : index
    %6 = vector.load %arg2[%c0, %5, %c0_1] : memref<1x8x32xf32, #tpu.memory_space<vmem>>, vector<1x8x32xf32>
    %7 = vector.shape_cast %6 : vector<1x8x32xf32> to vector<8x32xf32>
    %c0_2 = arith.constant 0 : index
    %c0_3 = arith.constant 0 : index
    %8 = vector.load %arg3[%c0_2, %c0_3] : memref<32x32xf32, #tpu.memory_space<vmem>>, vector<32x32xf32>
    %cst = arith.constant dense<0.000000e+00> : vector<8x32xf32>
    %9 = tpu.matmul %7, %8, %cst {dimension_numbers = #tpu.dot_dimension_numbers<[1], [0], [0], [1], [0, 0, 1, 1], [], []>} : vector<8x32xf32>, vector<32x32xf32>, vector<8x32xf32> -> vector<8x32xf32>
    %cst_4 = arith.constant 0.000000e+00 : f32
    %10 = vector.broadcast %cst_4 : f32 to vector<8x8xf32>
    %c0_5 = arith.constant 0 : index
    %c0_6 = arith.constant 0 : index
    %11 = vector.load %arg10[%c0_5, %c0_6] : memref<8x8xf32, #tpu.memory_space<vmem>>, vector<8x8xf32>
    tpu.vector_store %arg10[%c0_5, %c0_6], %10 {strides = array<i32>} : memref<8x8xf32, #tpu.memory_space<vmem>>, vector<8x8xf32>,
    %12 = vector.extract_strided_slice %9 {offsets = [0, 0], sizes = [8, 4], strides = [1, 1]} : vector<8x32xf32> to vector<8x4xf32>
    %c0_7 = arith.constant 0 : index
    %c0_8 = arith.constant 0 : index
    %13 = vector.load %arg9[%c0_7, %c0_8] : memref<8x64xf32, #tpu.memory_space<vmem>>, vector<8x4xf32>
    %c0_9 = arith.constant 0 : index
    %c32 = arith.constant 32 : index
    %14 = vector.load %arg9[%c0_9, %c32] : memref<8x64xf32, #tpu.memory_space<vmem>>, vector<8x4xf32>
    %cst_10 = arith.constant dense<0.000000e+00> : vector<8x8xf32>
    %15 = tpu.matmul %12, %13, %cst_10 {dimension_numbers = #tpu.dot_dimension_numbers<[1], [1], [0], [0], [0, 0, 1, 0], [], []>} : vector<8x4xf32>, vector<8x4xf32>, vector<8x8xf32> -> vector<8x8xf32>
    %cst_11 = arith.constant dense<0xFF800000> : vector<8xf32>
    %16 = vector.multi_reduction <maximumf>, %15, %cst_11 [1] : vector<8x8xf32> to vector<8xf32>
    %17 = vector.shape_cast %16 : vector<8xf32> to vector<8x1xf32>
    %18 = vector.broadcast %17 : vector<8x1xf32> to vector<8x8xf32>
    %19 = arith.subf %15, %18 : vector<8x8xf32>
    %20 = math.exp %19 : vector<8x8xf32>
    %cst_12 = arith.constant dense<0.000000e+00> : vector<8xf32>
    %21 = vector.multi_reduction <add>, %20, %cst_12 [1] : vector<8x8xf32> to vector<8xf32>
    %22 = vector.shape_cast %21 : vector<8xf32> to vector<8x1xf32>
    %23 = tpu.reciprocal %22 {approx = true} : vector<8x1xf32> -> vector<8x1xf32>
    %24 = arith.mulf %22, %23 : vector<8x1xf32>
    %cst_13 = arith.constant 2.000000e+00 : f32
    %25 = vector.broadcast %cst_13 : f32 to vector<8x1xf32>
    %26 = arith.subf %25, %24 : vector<8x1xf32>
    %27 = arith.mulf %23, %26 : vector<8x1xf32>
    %28 = vector.broadcast %27 : vector<8x1xf32> to vector<8x8xf32>
    %29 = arith.mulf %20, %28 : vector<8x8xf32>
    %c0_14 = arith.constant 0 : index
    %c0_15 = arith.constant 0 : index
    %30 = vector.load %arg10[%c0_14, %c0_15] : memref<8x8xf32, #tpu.memory_space<vmem>>, vector<8x8xf32>
    %31 = arith.addf %30, %29 : vector<8x8xf32>
    %c0_16 = arith.constant 0 : index
    %c0_17 = arith.constant 0 : index
    %32 = vector.load %arg10[%c0_16, %c0_17] : memref<8x8xf32, #tpu.memory_space<vmem>>, vector<8x8xf32>
    tpu.vector_store %arg10[%c0_16, %c0_17], %31 {strides = array<i32>} : memref<8x8xf32, #tpu.memory_space<vmem>>, vector<8x8xf32>,
    %cst_18 = arith.constant dense<0.000000e+00> : vector<8x4xf32>
    %33 = tpu.matmul %29, %14, %cst_18 {dimension_numbers = #tpu.dot_dimension_numbers<[1], [0], [0], [1], [0, 0, 1, 1], [], []>} : vector<8x8xf32>, vector<8x4xf32>, vector<8x4xf32> -> vector<8x4xf32>
    %c0_19 = arith.constant 0 : index
    %c0_20 = arith.constant 0 : index
    %34 = vector.load %arg11[%c0_19, %c0_20] : memref<8x32xf32, #tpu.memory_space<vmem>>, vector<8x4xf32>
    tpu.vector_store %arg11[%c0_19, %c0_20], %33 {strides = array<i32>} : memref<8x32xf32, #tpu.memory_space<vmem>>, vector<8x4xf32>,
    %35 = vector.extract_strided_slice %9 {offsets = [0, 4], sizes = [8, 4], strides = [1, 1]} : vector<8x32xf32> to vector<8x4xf32>
    %c0_21 = arith.constant 0 : index
    %c4 = arith.constant 4 : index
    %36 = vector.load %arg9[%c0_21, %c4] : memref<8x64xf32, #tpu.memory_space<vmem>>, vector<8x4xf32>
    %c0_22 = arith.constant 0 : index
    %c36 = arith.constant 36 : index
    %37 = vector.load %arg9[%c0_22, %c36] : memref<8x64xf32, #tpu.memory_space<vmem>>, vector<8x4xf32>
    %cst_23 = arith.constant dense<0.000000e+00> : vector<8x8xf32>
    %38 = tpu.matmul %35, %36, %cst_23 {dimension_numbers = #tpu.dot_dimension_numbers<[1], [1], [0], [0], [0, 0, 1, 0], [], []>} : vector<8x4xf32>, vector<8x4xf32>, vector<8x8xf32> -> vector<8x8xf32>
    %cst_24 = arith.constant dense<0xFF800000> : vector<8xf32>
    %39 = vector.multi_reduction <maximumf>, %38, %cst_24 [1] : vector<8x8xf32> to vector<8xf32>
    %40 = vector.shape_cast %39 : vector<8xf32> to vector<8x1xf32>
    %41 = vector.broadcast %40 : vector<8x1xf32> to vector<8x8xf32>
    %42 = arith.subf %38, %41 : vector<8x8xf32>
    %43 = math.exp %42 : vector<8x8xf32>
    %cst_25 = arith.constant dense<0.000000e+00> : vector<8xf32>
    %44 = vector.multi_reduction <add>, %43, %cst_25 [1] : vector<8x8xf32> to vector<8xf32>
    %45 = vector.shape_cast %44 : vector<8xf32> to vector<8x1xf32>
    %46 = tpu.reciprocal %45 {approx = true} : vector<8x1xf32> -> vector<8x1xf32>
    %47 = arith.mulf %45, %46 : vector<8x1xf32>
    %cst_26 = arith.constant 2.000000e+00 : f32
    %48 = vector.broadcast %cst_26 : f32 to vector<8x1xf32>
    %49 = arith.subf %48, %47 : vector<8x1xf32>
    %50 = arith.mulf %46, %49 : vector<8x1xf32>
    %51 = vector.broadcast %50 : vector<8x1xf32> to vector<8x8xf32>
    %52 = arith.mulf %43, %51 : vector<8x8xf32>
    %c0_27 = arith.constant 0 : index
    %c0_28 = arith.constant 0 : index
    %53 = vector.load %arg10[%c0_27, %c0_28] : memref<8x8xf32, #tpu.memory_space<vmem>>, vector<8x8xf32>
    %54 = arith.addf %53, %52 : vector<8x8xf32>
    %c0_29 = arith.constant 0 : index
    %c0_30 = arith.constant 0 : index
    %55 = vector.load %arg10[%c0_29, %c0_30] : memref<8x8xf32, #tpu.memory_space<vmem>>, vector<8x8xf32>
    tpu.vector_store %arg10[%c0_29, %c0_30], %54 {strides = array<i32>} : memref<8x8xf32, #tpu.memory_space<vmem>>, vector<8x8xf32>,
    %cst_31 = arith.constant dense<0.000000e+00> : vector<8x4xf32>
    %56 = tpu.matmul %52, %37, %cst_31 {dimension_numbers = #tpu.dot_dimension_numbers<[1], [0], [0], [1], [0, 0, 1, 1], [], []>} : vector<8x8xf32>, vector<8x4xf32>, vector<8x4xf32> -> vector<8x4xf32>
    %c0_32 = arith.constant 0 : index
    %c4_33 = arith.constant 4 : index
    %57 = vector.load %arg11[%c0_32, %c4_33] : memref<8x32xf32, #tpu.memory_space<vmem>>, vector<8x4xf32>
    tpu.vector_store %arg11[%c0_32, %c4_33], %56 {strides = array<i32>} : memref<8x32xf32, #tpu.memory_space<vmem>>, vector<8x4xf32>,
    %58 = vector.extract_strided_slice %9 {offsets = [0, 8], sizes = [8, 4], strides = [1, 1]} : vector<8x32xf32> to vector<8x4xf32>
    %c0_34 = arith.constant 0 : index
    %c8 = arith.constant 8 : index
    %59 = vector.load %arg9[%c0_34, %c8] : memref<8x64xf32, #tpu.memory_space<vmem>>, vector<8x4xf32>
    %c0_35 = arith.constant 0 : index
    %c40 = arith.constant 40 : index
    %60 = vector.load %arg9[%c0_35, %c40] : memref<8x64xf32, #tpu.memory_space<vmem>>, vector<8x4xf32>
    %cst_36 = arith.constant dense<0.000000e+00> : vector<8x8xf32>
    %61 = tpu.matmul %58, %59, %cst_36 {dimension_numbers = #tpu.dot_dimension_numbers<[1], [1], [0], [0], [0, 0, 1, 0], [], []>} : vector<8x4xf32>, vector<8x4xf32>, vector<8x8xf32> -> vector<8x8xf32>
    %cst_37 = arith.constant dense<0xFF800000> : vector<8xf32>
    %62 = vector.multi_reduction <maximumf>, %61, %cst_37 [1] : vector<8x8xf32> to vector<8xf32>
    %63 = vector.shape_cast %62 : vector<8xf32> to vector<8x1xf32>
    %64 = vector.broadcast %63 : vector<8x1xf32> to vector<8x8xf32>
    %65 = arith.subf %61, %64 : vector<8x8xf32>
    %66 = math.exp %65 : vector<8x8xf32>
    %cst_38 = arith.constant dense<0.000000e+00> : vector<8xf32>
    %67 = vector.multi_reduction <add>, %66, %cst_38 [1] : vector<8x8xf32> to vector<8xf32>
    %68 = vector.shape_cast %67 : vector<8xf32> to vector<8x1xf32>
    %69 = tpu.reciprocal %68 {approx = true} : vector<8x1xf32> -> vector<8x1xf32>
    %70 = arith.mulf %68, %69 : vector<8x1xf32>
    %cst_39 = arith.constant 2.000000e+00 : f32
    %71 = vector.broadcast %cst_39 : f32 to vector<8x1xf32>
    %72 = arith.subf %71, %70 : vector<8x1xf32>
    %73 = arith.mulf %69, %72 : vector<8x1xf32>
    %74 = vector.broadcast %73 : vector<8x1xf32> to vector<8x8xf32>
    %75 = arith.mulf %66, %74 : vector<8x8xf32>
    %c0_40 = arith.constant 0 : index
    %c0_41 = arith.constant 0 : index
    %76 = vector.load %arg10[%c0_40, %c0_41] : memref<8x8xf32, #tpu.memory_space<vmem>>, vector<8x8xf32>
    %77 = arith.addf %76, %75 : vector<8x8xf32>
    %c0_42 = arith.constant 0 : index
    %c0_43 = arith.constant 0 : index
    %78 = vector.load %arg10[%c0_42, %c0_43] : memref<8x8xf32, #tpu.memory_space<vmem>>, vector<8x8xf32>
    tpu.vector_store %arg10[%c0_42, %c0_43], %77 {strides = array<i32>} : memref<8x8xf32, #tpu.memory_space<vmem>>, vector<8x8xf32>,
    %cst_44 = arith.constant dense<0.000000e+00> : vector<8x4xf32>
    %79 = tpu.matmul %75, %60, %cst_44 {dimension_numbers = #tpu.dot_dimension_numbers<[1], [0], [0], [1], [0, 0, 1, 1], [], []>} : vector<8x8xf32>, vector<8x4xf32>, vector<8x4xf32> -> vector<8x4xf32>
    %c0_45 = arith.constant 0 : index
    %c8_46 = arith.constant 8 : index
    %80 = vector.load %arg11[%c0_45, %c8_46] : memref<8x32xf32, #tpu.memory_space<vmem>>, vector<8x4xf32>
    tpu.vector_store %arg11[%c0_45, %c8_46], %79 {strides = array<i32>} : memref<8x32xf32, #tpu.memory_space<vmem>>, vector<8x4xf32>,
    %81 = vector.extract_strided_slice %9 {offsets = [0, 12], sizes = [8, 4], strides = [1, 1]} : vector<8x32xf32> to vector<8x4xf32>
    %c0_47 = arith.constant 0 : index
    %c12 = arith.constant 12 : index
    %82 = vector.load %arg9[%c0_47, %c12] : memref<8x64xf32, #tpu.memory_space<vmem>>, vector<8x4xf32>
    %c0_48 = arith.constant 0 : index
    %c44 = arith.constant 44 : index
    %83 = vector.load %arg9[%c0_48, %c44] : memref<8x64xf32, #tpu.memory_space<vmem>>, vector<8x4xf32>
    %cst_49 = arith.constant dense<0.000000e+00> : vector<8x8xf32>
    %84 = tpu.matmul %81, %82, %cst_49 {dimension_numbers = #tpu.dot_dimension_numbers<[1], [1], [0], [0], [0, 0, 1, 0], [], []>} : vector<8x4xf32>, vector<8x4xf32>, vector<8x8xf32> -> vector<8x8xf32>
    %cst_50 = arith.constant dense<0xFF800000> : vector<8xf32>
    %85 = vector.multi_reduction <maximumf>, %84, %cst_50 [1] : vector<8x8xf32> to vector<8xf32>
    %86 = vector.shape_cast %85 : vector<8xf32> to vector<8x1xf32>
    %87 = vector.broadcast %86 : vector<8x1xf32> to vector<8x8xf32>
    %88 = arith.subf %84, %87 : vector<8x8xf32>
    %89 = math.exp %88 : vector<8x8xf32>
    %cst_51 = arith.constant dense<0.000000e+00> : vector<8xf32>
    %90 = vector.multi_reduction <add>, %89, %cst_51 [1] : vector<8x8xf32> to vector<8xf32>
    %91 = vector.shape_cast %90 : vector<8xf32> to vector<8x1xf32>
    %92 = tpu.reciprocal %91 {approx = true} : vector<8x1xf32> -> vector<8x1xf32>
    %93 = arith.mulf %91, %92 : vector<8x1xf32>
    %cst_52 = arith.constant 2.000000e+00 : f32
    %94 = vector.broadcast %cst_52 : f32 to vector<8x1xf32>
    %95 = arith.subf %94, %93 : vector<8x1xf32>
    %96 = arith.mulf %92, %95 : vector<8x1xf32>
    %97 = vector.broadcast %96 : vector<8x1xf32> to vector<8x8xf32>
    %98 = arith.mulf %89, %97 : vector<8x8xf32>
    %c0_53 = arith.constant 0 : index
    %c0_54 = arith.constant 0 : index
    %99 = vector.load %arg10[%c0_53, %c0_54] : memref<8x8xf32, #tpu.memory_space<vmem>>, vector<8x8xf32>
    %100 = arith.addf %99, %98 : vector<8x8xf32>
    %c0_55 = arith.constant 0 : index
    %c0_56 = arith.constant 0 : index
    %101 = vector.load %arg10[%c0_55, %c0_56] : memref<8x8xf32, #tpu.memory_space<vmem>>, vector<8x8xf32>
    tpu.vector_store %arg10[%c0_55, %c0_56], %100 {strides = array<i32>} : memref<8x8xf32, #tpu.memory_space<vmem>>, vector<8x8xf32>,
    %cst_57 = arith.constant dense<0.000000e+00> : vector<8x4xf32>
    %102 = tpu.matmul %98, %83, %cst_57 {dimension_numbers = #tpu.dot_dimension_numbers<[1], [0], [0], [1], [0, 0, 1, 1], [], []>} : vector<8x8xf32>, vector<8x4xf32>, vector<8x4xf32> -> vector<8x4xf32>
    %c0_58 = arith.constant 0 : index
    %c12_59 = arith.constant 12 : index
    %103 = vector.load %arg11[%c0_58, %c12_59] : memref<8x32xf32, #tpu.memory_space<vmem>>, vector<8x4xf32>
    tpu.vector_store %arg11[%c0_58, %c12_59], %102 {strides = array<i32>} : memref<8x32xf32, #tpu.memory_space<vmem>>, vector<8x4xf32>,
    %104 = vector.extract_strided_slice %9 {offsets = [0, 16], sizes = [8, 4], strides = [1, 1]} : vector<8x32xf32> to vector<8x4xf32>
    %c0_60 = arith.constant 0 : index
    %c16 = arith.constant 16 : index
    %105 = vector.load %arg9[%c0_60, %c16] : memref<8x64xf32, #tpu.memory_space<vmem>>, vector<8x4xf32>
    %c0_61 = arith.constant 0 : index
    %c48 = arith.constant 48 : index
    %106 = vector.load %arg9[%c0_61, %c48] : memref<8x64xf32, #tpu.memory_space<vmem>>, vector<8x4xf32>
    %cst_62 = arith.constant dense<0.000000e+00> : vector<8x8xf32>
    %107 = tpu.matmul %104, %105, %cst_62 {dimension_numbers = #tpu.dot_dimension_numbers<[1], [1], [0], [0], [0, 0, 1, 0], [], []>} : vector<8x4xf32>, vector<8x4xf32>, vector<8x8xf32> -> vector<8x8xf32>
    %cst_63 = arith.constant dense<0xFF800000> : vector<8xf32>
    %108 = vector.multi_reduction <maximumf>, %107, %cst_63 [1] : vector<8x8xf32> to vector<8xf32>
    %109 = vector.shape_cast %108 : vector<8xf32> to vector<8x1xf32>
    %110 = vector.broadcast %109 : vector<8x1xf32> to vector<8x8xf32>
    %111 = arith.subf %107, %110 : vector<8x8xf32>
    %112 = math.exp %111 : vector<8x8xf32>
    %cst_64 = arith.constant dense<0.000000e+00> : vector<8xf32>
    %113 = vector.multi_reduction <add>, %112, %cst_64 [1] : vector<8x8xf32> to vector<8xf32>
    %114 = vector.shape_cast %113 : vector<8xf32> to vector<8x1xf32>
    %115 = tpu.reciprocal %114 {approx = true} : vector<8x1xf32> -> vector<8x1xf32>
    %116 = arith.mulf %114, %115 : vector<8x1xf32>
    %cst_65 = arith.constant 2.000000e+00 : f32
    %117 = vector.broadcast %cst_65 : f32 to vector<8x1xf32>
    %118 = arith.subf %117, %116 : vector<8x1xf32>
    %119 = arith.mulf %115, %118 : vector<8x1xf32>
    %120 = vector.broadcast %119 : vector<8x1xf32> to vector<8x8xf32>
    %121 = arith.mulf %112, %120 : vector<8x8xf32>
    %c0_66 = arith.constant 0 : index
    %c0_67 = arith.constant 0 : index
    %122 = vector.load %arg10[%c0_66, %c0_67] : memref<8x8xf32, #tpu.memory_space<vmem>>, vector<8x8xf32>
    %123 = arith.addf %122, %121 : vector<8x8xf32>
    %c0_68 = arith.constant 0 : index
    %c0_69 = arith.constant 0 : index
    %124 = vector.load %arg10[%c0_68, %c0_69] : memref<8x8xf32, #tpu.memory_space<vmem>>, vector<8x8xf32>
    tpu.vector_store %arg10[%c0_68, %c0_69], %123 {strides = array<i32>} : memref<8x8xf32, #tpu.memory_space<vmem>>, vector<8x8xf32>,
    %cst_70 = arith.constant dense<0.000000e+00> : vector<8x4xf32>
    %125 = tpu.matmul %121, %106, %cst_70 {dimension_numbers = #tpu.dot_dimension_numbers<[1], [0], [0], [1], [0, 0, 1, 1], [], []>} : vector<8x8xf32>, vector<8x4xf32>, vector<8x4xf32> -> vector<8x4xf32>
    %c0_71 = arith.constant 0 : index
    %c16_72 = arith.constant 16 : index
    %126 = vector.load %arg11[%c0_71, %c16_72] : memref<8x32xf32, #tpu.memory_space<vmem>>, vector<8x4xf32>
    tpu.vector_store %arg11[%c0_71, %c16_72], %125 {strides = array<i32>} : memref<8x32xf32, #tpu.memory_space<vmem>>, vector<8x4xf32>,
    %127 = vector.extract_strided_slice %9 {offsets = [0, 20], sizes = [8, 4], strides = [1, 1]} : vector<8x32xf32> to vector<8x4xf32>
    %c0_73 = arith.constant 0 : index
    %c20 = arith.constant 20 : index
    %128 = vector.load %arg9[%c0_73, %c20] : memref<8x64xf32, #tpu.memory_space<vmem>>, vector<8x4xf32>
    %c0_74 = arith.constant 0 : index
    %c52 = arith.constant 52 : index
    %129 = vector.load %arg9[%c0_74, %c52] : memref<8x64xf32, #tpu.memory_space<vmem>>, vector<8x4xf32>
    %cst_75 = arith.constant dense<0.000000e+00> : vector<8x8xf32>
    %130 = tpu.matmul %127, %128, %cst_75 {dimension_numbers = #tpu.dot_dimension_numbers<[1], [1], [0], [0], [0, 0, 1, 0], [], []>} : vector<8x4xf32>, vector<8x4xf32>, vector<8x8xf32> -> vector<8x8xf32>
    %cst_76 = arith.constant dense<0xFF800000> : vector<8xf32>
    %131 = vector.multi_reduction <maximumf>, %130, %cst_76 [1] : vector<8x8xf32> to vector<8xf32>
    %132 = vector.shape_cast %131 : vector<8xf32> to vector<8x1xf32>
    %133 = vector.broadcast %132 : vector<8x1xf32> to vector<8x8xf32>
    %134 = arith.subf %130, %133 : vector<8x8xf32>
    %135 = math.exp %134 : vector<8x8xf32>
    %cst_77 = arith.constant dense<0.000000e+00> : vector<8xf32>
    %136 = vector.multi_reduction <add>, %135, %cst_77 [1] : vector<8x8xf32> to vector<8xf32>
    %137 = vector.shape_cast %136 : vector<8xf32> to vector<8x1xf32>
    %138 = tpu.reciprocal %137 {approx = true} : vector<8x1xf32> -> vector<8x1xf32>
    %139 = arith.mulf %137, %138 : vector<8x1xf32>
    %cst_78 = arith.constant 2.000000e+00 : f32
    %140 = vector.broadcast %cst_78 : f32 to vector<8x1xf32>
    %141 = arith.subf %140, %139 : vector<8x1xf32>
    %142 = arith.mulf %138, %141 : vector<8x1xf32>
    %143 = vector.broadcast %142 : vector<8x1xf32> to vector<8x8xf32>
    %144 = arith.mulf %135, %143 : vector<8x8xf32>
    %c0_79 = arith.constant 0 : index
    %c0_80 = arith.constant 0 : index
    %145 = vector.load %arg10[%c0_79, %c0_80] : memref<8x8xf32, #tpu.memory_space<vmem>>, vector<8x8xf32>
    %146 = arith.addf %145, %144 : vector<8x8xf32>
    %c0_81 = arith.constant 0 : index
    %c0_82 = arith.constant 0 : index
    %147 = vector.load %arg10[%c0_81, %c0_82] : memref<8x8xf32, #tpu.memory_space<vmem>>, vector<8x8xf32>
    tpu.vector_store %arg10[%c0_81, %c0_82], %146 {strides = array<i32>} : memref<8x8xf32, #tpu.memory_space<vmem>>, vector<8x8xf32>,
    %cst_83 = arith.constant dense<0.000000e+00> : vector<8x4xf32>
    %148 = tpu.matmul %144, %129, %cst_83 {dimension_numbers = #tpu.dot_dimension_numbers<[1], [0], [0], [1], [0, 0, 1, 1], [], []>} : vector<8x8xf32>, vector<8x4xf32>, vector<8x4xf32> -> vector<8x4xf32>
    %c0_84 = arith.constant 0 : index
    %c20_85 = arith.constant 20 : index
    %149 = vector.load %arg11[%c0_84, %c20_85] : memref<8x32xf32, #tpu.memory_space<vmem>>, vector<8x4xf32>
    tpu.vector_store %arg11[%c0_84, %c20_85], %148 {strides = array<i32>} : memref<8x32xf32, #tpu.memory_space<vmem>>, vector<8x4xf32>,
    %150 = vector.extract_strided_slice %9 {offsets = [0, 24], sizes = [8, 4], strides = [1, 1]} : vector<8x32xf32> to vector<8x4xf32>
    %c0_86 = arith.constant 0 : index
    %c24 = arith.constant 24 : index
    %151 = vector.load %arg9[%c0_86, %c24] : memref<8x64xf32, #tpu.memory_space<vmem>>, vector<8x4xf32>
    %c0_87 = arith.constant 0 : index
    %c56 = arith.constant 56 : index
    %152 = vector.load %arg9[%c0_87, %c56] : memref<8x64xf32, #tpu.memory_space<vmem>>, vector<8x4xf32>
    %cst_88 = arith.constant dense<0.000000e+00> : vector<8x8xf32>
    %153 = tpu.matmul %150, %151, %cst_88 {dimension_numbers = #tpu.dot_dimension_numbers<[1], [1], [0], [0], [0, 0, 1, 0], [], []>} : vector<8x4xf32>, vector<8x4xf32>, vector<8x8xf32> -> vector<8x8xf32>
    %cst_89 = arith.constant dense<0xFF800000> : vector<8xf32>
    %154 = vector.multi_reduction <maximumf>, %153, %cst_89 [1] : vector<8x8xf32> to vector<8xf32>
    %155 = vector.shape_cast %154 : vector<8xf32> to vector<8x1xf32>
    %156 = vector.broadcast %155 : vector<8x1xf32> to vector<8x8xf32>
    %157 = arith.subf %153, %156 : vector<8x8xf32>
    %158 = math.exp %157 : vector<8x8xf32>
    %cst_90 = arith.constant dense<0.000000e+00> : vector<8xf32>
    %159 = vector.multi_reduction <add>, %158, %cst_90 [1] : vector<8x8xf32> to vector<8xf32>
    %160 = vector.shape_cast %159 : vector<8xf32> to vector<8x1xf32>
    %161 = tpu.reciprocal %160 {approx = true} : vector<8x1xf32> -> vector<8x1xf32>
    %162 = arith.mulf %160, %161 : vector<8x1xf32>
    %cst_91 = arith.constant 2.000000e+00 : f32
    %163 = vector.broadcast %cst_91 : f32 to vector<8x1xf32>
    %164 = arith.subf %163, %162 : vector<8x1xf32>
    %165 = arith.mulf %161, %164 : vector<8x1xf32>
    %166 = vector.broadcast %165 : vector<8x1xf32> to vector<8x8xf32>
    %167 = arith.mulf %158, %166 : vector<8x8xf32>
    %c0_92 = arith.constant 0 : index
    %c0_93 = arith.constant 0 : index
    %168 = vector.load %arg10[%c0_92, %c0_93] : memref<8x8xf32, #tpu.memory_space<vmem>>, vector<8x8xf32>
    %169 = arith.addf %168, %167 : vector<8x8xf32>
    %c0_94 = arith.constant 0 : index
    %c0_95 = arith.constant 0 : index
    %170 = vector.load %arg10[%c0_94, %c0_95] : memref<8x8xf32, #tpu.memory_space<vmem>>, vector<8x8xf32>
    tpu.vector_store %arg10[%c0_94, %c0_95], %169 {strides = array<i32>} : memref<8x8xf32, #tpu.memory_space<vmem>>, vector<8x8xf32>,
    %cst_96 = arith.constant dense<0.000000e+00> : vector<8x4xf32>
    %171 = tpu.matmul %167, %152, %cst_96 {dimension_numbers = #tpu.dot_dimension_numbers<[1], [0], [0], [1], [0, 0, 1, 1], [], []>} : vector<8x8xf32>, vector<8x4xf32>, vector<8x4xf32> -> vector<8x4xf32>
    %c0_97 = arith.constant 0 : index
    %c24_98 = arith.constant 24 : index
    %172 = vector.load %arg11[%c0_97, %c24_98] : memref<8x32xf32, #tpu.memory_space<vmem>>, vector<8x4xf32>
    tpu.vector_store %arg11[%c0_97, %c24_98], %171 {strides = array<i32>} : memref<8x32xf32, #tpu.memory_space<vmem>>, vector<8x4xf32>,
    %173 = vector.extract_strided_slice %9 {offsets = [0, 28], sizes = [8, 4], strides = [1, 1]} : vector<8x32xf32> to vector<8x4xf32>
    %c0_99 = arith.constant 0 : index
    %c28 = arith.constant 28 : index
    %174 = vector.load %arg9[%c0_99, %c28] : memref<8x64xf32, #tpu.memory_space<vmem>>, vector<8x4xf32>
    %c0_100 = arith.constant 0 : index
    %c60 = arith.constant 60 : index
    %175 = vector.load %arg9[%c0_100, %c60] : memref<8x64xf32, #tpu.memory_space<vmem>>, vector<8x4xf32>
    %cst_101 = arith.constant dense<0.000000e+00> : vector<8x8xf32>
    %176 = tpu.matmul %173, %174, %cst_101 {dimension_numbers = #tpu.dot_dimension_numbers<[1], [1], [0], [0], [0, 0, 1, 0], [], []>} : vector<8x4xf32>, vector<8x4xf32>, vector<8x8xf32> -> vector<8x8xf32>
    %cst_102 = arith.constant dense<0xFF800000> : vector<8xf32>
    %177 = vector.multi_reduction <maximumf>, %176, %cst_102 [1] : vector<8x8xf32> to vector<8xf32>
    %178 = vector.shape_cast %177 : vector<8xf32> to vector<8x1xf32>
    %179 = vector.broadcast %178 : vector<8x1xf32> to vector<8x8xf32>
    %180 = arith.subf %176, %179 : vector<8x8xf32>
    %181 = math.exp %180 : vector<8x8xf32>
    %cst_103 = arith.constant dense<0.000000e+00> : vector<8xf32>
    %182 = vector.multi_reduction <add>, %181, %cst_103 [1] : vector<8x8xf32> to vector<8xf32>
    %183 = vector.shape_cast %182 : vector<8xf32> to vector<8x1xf32>
    %184 = tpu.reciprocal %183 {approx = true} : vector<8x1xf32> -> vector<8x1xf32>
    %185 = arith.mulf %183, %184 : vector<8x1xf32>
    %cst_104 = arith.constant 2.000000e+00 : f32
    %186 = vector.broadcast %cst_104 : f32 to vector<8x1xf32>
    %187 = arith.subf %186, %185 : vector<8x1xf32>
    %188 = arith.mulf %184, %187 : vector<8x1xf32>
    %189 = vector.broadcast %188 : vector<8x1xf32> to vector<8x8xf32>
    %190 = arith.mulf %181, %189 : vector<8x8xf32>
    %c0_105 = arith.constant 0 : index
    %c0_106 = arith.constant 0 : index
    %191 = vector.load %arg10[%c0_105, %c0_106] : memref<8x8xf32, #tpu.memory_space<vmem>>, vector<8x8xf32>
    %192 = arith.addf %191, %190 : vector<8x8xf32>
    %c0_107 = arith.constant 0 : index
    %c0_108 = arith.constant 0 : index
    %193 = vector.load %arg10[%c0_107, %c0_108] : memref<8x8xf32, #tpu.memory_space<vmem>>, vector<8x8xf32>
    tpu.vector_store %arg10[%c0_107, %c0_108], %192 {strides = array<i32>} : memref<8x8xf32, #tpu.memory_space<vmem>>, vector<8x8xf32>,
    %cst_109 = arith.constant dense<0.000000e+00> : vector<8x4xf32>
    %194 = tpu.matmul %190, %175, %cst_109 {dimension_numbers = #tpu.dot_dimension_numbers<[1], [0], [0], [1], [0, 0, 1, 1], [], []>} : vector<8x8xf32>, vector<8x4xf32>, vector<8x4xf32> -> vector<8x4xf32>
    %c0_110 = arith.constant 0 : index
    %c28_111 = arith.constant 28 : index
    %195 = vector.load %arg11[%c0_110, %c28_111] : memref<8x32xf32, #tpu.memory_space<vmem>>, vector<8x4xf32>
    tpu.vector_store %arg11[%c0_110, %c28_111], %194 {strides = array<i32>} : memref<8x32xf32, #tpu.memory_space<vmem>>, vector<8x4xf32>,
    %c0_112 = arith.constant 0 : index
    %c0_113 = arith.constant 0 : index
    %196 = vector.load %arg11[%c0_112, %c0_113] : memref<8x32xf32, #tpu.memory_space<vmem>>, vector<8x32xf32>
    %c0_114 = arith.constant 0 : index
    %c0_115 = arith.constant 0 : index
    %197 = vector.load %arg5[%c0_114, %c0_115] : memref<32x32xf32, #tpu.memory_space<vmem>>, vector<32x32xf32>
    %cst_116 = arith.constant dense<0.000000e+00> : vector<8x32xf32>
    %198 = tpu.matmul %196, %197, %cst_116 {dimension_numbers = #tpu.dot_dimension_numbers<[1], [0], [0], [1], [0, 0, 1, 1], [], []>} : vector<8x32xf32>, vector<32x32xf32>, vector<8x32xf32> -> vector<8x32xf32>
    %c0_117 = arith.constant 0 : index
    %c0_118 = arith.constant 0 : index
    %199 = vector.load %arg6[%c0_117, %c0_118] : memref<1x32xf32, #tpu.memory_space<vmem>>, vector<1x32xf32>
    %200 = vector.broadcast %199 : vector<1x32xf32> to vector<8x32xf32>
    %201 = arith.addf %198, %200 : vector<8x32xf32>
    %c0_119 = arith.constant 0 : index
    %c0_120 = arith.constant 0 : index
    %c0_121 = arith.constant 0 : index
    %202 = vector.load %arg7[%c0_119, %c0_120, %c0_121] : memref<1x8x32xf32, #tpu.memory_space<vmem>>, vector<1x8x32xf32>
    %203 = vector.shape_cast %202 : vector<1x8x32xf32> to vector<8x32xf32>
    %204 = vector.shape_cast %201 : vector<8x32xf32> to vector<1x8x32xf32>
    tpu.vector_store %arg7[%c0_119, %c0_120, %c0_121], %204 {strides = array<i32>} : memref<1x8x32xf32, #tpu.memory_space<vmem>>, vector<1x8x32xf32>,
    %c0_122 = arith.constant 0 : index
    %c0_123 = arith.constant 0 : index
    %205 = vector.load %arg10[%c0_122, %c0_123] : memref<8x8xf32, #tpu.memory_space<vmem>>, vector<8x8xf32>
    %cst_124 = arith.constant 1.250000e-01 : f32
    %206 = vector.broadcast %cst_124 : f32 to vector<8x8xf32>
    %207 = arith.mulf %205, %206 : vector<8x8xf32>
    %c0_125 = arith.constant 0 : index
    %c0_126 = arith.constant 0 : index
    %c0_127 = arith.constant 0 : index
    %208 = vector.load %arg8[%c0_125, %c0_126, %c0_127] : memref<1x8x8xf32, #tpu.memory_space<vmem>>, vector<1x8x8xf32>
    %209 = vector.shape_cast %208 : vector<1x8x8xf32> to vector<8x8xf32>
    %210 = vector.shape_cast %207 : vector<8x8xf32> to vector<1x8x8xf32>
    tpu.vector_store %arg8[%c0_125, %c0_126, %c0_127], %210 {strides = array<i32>} : memref<1x8x8xf32, #tpu.memory_space<vmem>>, vector<1x8x8xf32>,
    return
  }
  func.func @transform_0(%arg0: i32, %arg1: i32) -> (i32, i32, i32) {
    %c0_i32 = arith.constant 0 : i32
    %c0_i32_0 = arith.constant 0 : i32
    %c0_i32_1 = arith.constant 0 : i32
    return %arg0, %c0_i32, %c0_i32_0 : i32, i32, i32
  }
  func.func @transform_1(%arg0: i32, %arg1: i32) -> (i32, i32) {
    %c0_i32 = arith.constant 0 : i32
    %c0_i32_0 = arith.constant 0 : i32
    %c0_i32_1 = arith.constant 0 : i32
    return %c0_i32, %c0_i32_0 : i32, i32
  }
  func.func @transform_2(%arg0: i32, %arg1: i32) -> (i32, i32) {
    %c0_i32 = arith.constant 0 : i32
    %c0_i32_0 = arith.constant 0 : i32
    %c0_i32_1 = arith.constant 0 : i32
    return %c0_i32, %c0_i32_0 : i32, i32
  }
  func.func @transform_3(%arg0: i32, %arg1: i32) -> (i32, i32) {
    %c0_i32 = arith.constant 0 : i32
    %c0_i32_0 = arith.constant 0 : i32
    %c0_i32_1 = arith.constant 0 : i32
    return %c0_i32, %c0_i32_0 : i32, i32
  }
  func.func @transform_4(%arg0: i32, %arg1: i32) -> (i32, i32) {
    %c0_i32 = arith.constant 0 : i32
    %c0_i32_0 = arith.constant 0 : i32
    %c0_i32_1 = arith.constant 0 : i32
    return %c0_i32, %c0_i32_0 : i32, i32
  }
  func.func @transform_5(%arg0: i32, %arg1: i32) -> (i32, i32, i32) {
    %c0_i32 = arith.constant 0 : i32
    %c0_i32_0 = arith.constant 0 : i32
    return %arg0, %arg1, %c0_i32 : i32, i32, i32
  }
  func.func @transform_6(%arg0: i32, %arg1: i32) -> (i32, i32, i32) {
    %c0_i32 = arith.constant 0 : i32
    %c0_i32_0 = arith.constant 0 : i32
    return %arg0, %arg1, %c0_i32 : i32, i32, i32
  }
}

</mosaic_0001>

<llo_original>
// kernel: tpu_custom_call.1
$region0: #{tpu_custom_call.1}
  #allocation0 [shape = 'u32[]', space=smem, size = 0x4, offset = 0x4, fixed_abs, tag = 'smem constant byte address 0x4 - core index']
  #allocation1 [shape = 'u32[72,128]{1,0:T(1,128)}', space=vmem, size = 0x9000, scoped, tag = 'internal scratch']
  #allocation2 [shape = 'f32[8,64]{1,0:T(8,128)}', space=vmem, size = 0x1000, scoped, tag = 'scratch operand']
  #allocation3 [shape = 'f32[8,8]{1,0:T(8,128)}', space=vmem, size = 0x1000, scoped, tag = 'scratch operand']
  #allocation4 [shape = 'f32[8,32]{1,0:T(8,128)}', space=vmem, size = 0x1000, scoped, tag = 'scratch operand']
  %s0 = inlined_call_operand.hbm [shape: f32[2,8,32], index: 0, kind: input, shape index: {}]
  %s1 = inlined_call_operand.hbm [shape: f32[32,32], index: 1, kind: input, shape index: {}]
  %s2 = inlined_call_operand.hbm [shape: f32[32,64], index: 2, kind: input, shape index: {}]
  %s3 = inlined_call_operand.hbm [shape: f32[32,32], index: 3, kind: input, shape index: {}]
  %s4 = inlined_call_operand.vmem [shape: f32[1,32], index: 4, kind: input, shape index: {}]
  %s5 = inlined_call_operand.hbm [shape: f32[2,8,32], index: 5, kind: output, shape index: {0}]
  %s6 = inlined_call_operand.hbm [shape: f32[2,8,8], index: 6, kind: output, shape index: {1}]
  %7 = xla_tuple %s5, %s6
  %s8 = sld [smem:[#allocation0]]
  $region81: #{tpu_custom_call.1} parent=0
    _
  %s10 = ssub.s32 1, %s8
  %s11 = scalar_select 0, %s10, %s8
  $region1: #{tpu_custom_call.1} parent=0
    #allocation5 [shape = 'u8[8192]{0}', space=vmem, size = 0x2000, scoped, tag = 'input window, operand 0']
    #allocation6 [shape = 's32[2]{0}', space=sflag, size = 0x8, scoped, tag = 'scoped memory for tpu_custom_call.1']
    #allocation7 [shape = 's32[2]{0}', space=sflag, size = 0x8, scoped, tag = 'scoped memory for tpu_custom_call.1']
    #allocation8 [shape = 'u8[16384]{0}', space=vmem, size = 0x4000, scoped, tag = 'input window, operand 1, single buffered']
    #allocation9 [shape = 's32[1]{0}', space=sflag, size = 0x4, scoped, tag = 'scoped memory for tpu_custom_call.1']
    #allocation10 [shape = 'u8[16384]{0}', space=vmem, size = 0x4000, scoped, tag = 'input window, operand 2, single buffered']
    #allocation11 [shape = 'u8[16384]{0}', space=vmem, size = 0x4000, scoped, tag = 'input window, operand 3, single buffered']
    #allocation12 [shape = 's32[1]{0}', space=sflag, size = 0x4, scoped, tag = 'scoped memory for tpu_custom_call.1']
    #allocation13 [shape = 'u8[8192]{0}', space=vmem, size = 0x2000, scoped, tag = 'output window, operand 0']
    #allocation14 [shape = 'u8[8192]{0}', space=vmem, size = 0x2000, scoped, tag = 'output window, operand 1']
    #allocation15 [shape = 's32[2]{0}', space=sflag, size = 0x8, scoped, tag = 'scoped memory for tpu_custom_call.1']
    %12 = vsyncpa [#allocation6], 0
    %s13 = scalar_lea.sflag [#allocation6], 1
    %14 = vsyncpa %s13, 0
    %15 = vsyncpa [#allocation9], 0
    %16 = vsyncpa [#allocation12], 0
    %17 = vsyncpa [#allocation7], 0
    %s18 = scalar_lea.sflag [#allocation7], 1
    %19 = vsyncpa %s18, 0
    %20 = vsyncpa [#allocation15], 0
    %s21 = scalar_lea.sflag [#allocation15], 1
    %22 = vsyncpa %s21, 0
    loop: start=0, step=1, limit=4
    $region2: #{tpu_custom_call.1} parent=1 // loop_pre_header
      _
    $region3: #{tpu_custom_call.1} parent=1 // loop_header
      %s24 = sphi 0, %s28
      %p25 = scmp.ge.s32.totalorder %s24, 4
      %s31 = sphi 0, %s43
      %s32 = sphi 0, %s39
      %s33 = sphi 0, %s31
      %s34 = sphi 0, %s32
      %s35 = sphi 0, %s33
      %s36 = sphi 0, %s34
      %s46 = sphi 0, %s48
      %s49 = sphi 0, %s46
      %s50 = sphi 0, %s49
      %s66 = sphi 0, %s50
      %s70 = sphi 0, %s70
      %s72 = sphi 0, %s70
      %s73 = sphi 0, %s72
      %s87 = sphi 0, %s73
      %s91 = sphi 0, %s91
      %s93 = sphi 0, %s91
      %s94 = sphi 0, %s93
      %s108 = sphi 0, %s94
      %s112 = sphi 0, %s112
      %s114 = sphi 0, %s112
      %s115 = sphi 0, %s114
      %s129 = sphi 0, %s115
      %s133 = sphi 0, %s133
      %s135 = sphi 0, %s133
      %s136 = sphi 0, %s135
      %s150 = sphi 0, %s136
      %s158 = sphi 0, %s160
      %s161 = sphi 0, %s158
      %s162 = sphi 0, %s161
      %s178 = sphi 0, %s162
      %s186 = sphi 0, %s188
      %s189 = sphi 0, %s186
      %s190 = sphi 0, %s189
      %s206 = sphi 0, %s190
    $region4: #{tpu_custom_call.1} parent=1 // loop_header_branch
      %27 = sbr.rel (%p25) target = $region8
    $region5: #{tpu_custom_call.1} parent=1 // loop_body
      %s29 = ssub.s32 %s24, 1
      %s30 = ssub.s32 %s24, 2
      %s37 = sadd.s32 1, %s32
      %p38 = scmp.ge.s32.totalorder %s37, 1
      %s39 = scalar_select %p38, 0, %s37
      %s40 = sadd.s32 1, %s31
      %s41 = scalar_select %p38, %s40, %s31
      %p42 = scmp.ge.s32.totalorder %s41, 2
      %s43 = scalar_select %p42, 0, %s41
      %s44 = ssub.s32 %s31, %s43
      %p45 = scmp.eq.s32.totalorder %s44, 0
      %s47 = sadd.s32 %s46, 1
      %s48 = scalar_select %p45, %s46, %s47
      %p51 = pneg %p45
      %p52 = scmp.eq.s32.totalorder %s24, 1
      %p53 = por %p51, %p52
      %p54 = scmp.ne.s32.totalorder %s46, %s49
      %p55 = scmp.eq.s32.totalorder %s24, 0
      %p56 = por %p54, %p55
      %p57 = scmp.ne.s32.totalorder %s46, %s49
      %p58 = scmp.eq.s32.totalorder %s29, 1
      %p59 = por %p57, %p58
      %p60 = scmp.ne.s32.totalorder %s49, %s50
      %p61 = scmp.eq.s32.totalorder %s29, 0
      %p62 = por %p60, %p61
      %p63 = scmp.ne.s32.totalorder %s49, %s50
      %p64 = scmp.eq.s32.totalorder %s30, 1
      %p65 = por %p63, %p64
      %p67 = scmp.ne.s32.totalorder %s50, %s66
      %p68 = scmp.eq.s32.totalorder %s30, 0
      %p69 = por %p67, %p68
      %s71 = sadd.s32 %s70, 1
      %p74 = scmp.eq.s32.totalorder %s24, 1
      %p75 = scmp.ne.s32.totalorder %s70, %s72
      %p76 = scmp.eq.s32.totalorder %s24, 0
      %p77 = por %p75, %p76
      %p78 = scmp.ne.s32.totalorder %s70, %s72
      %p79 = scmp.eq.s32.totalorder %s29, 1
      %p80 = por %p78, %p79
      %p81 = scmp.ne.s32.totalorder %s72, %s73
      %p82 = scmp.eq.s32.totalorder %s29, 0
      %p83 = por %p81, %p82
      %p84 = scmp.ne.s32.totalorder %s72, %s73
      %p85 = scmp.eq.s32.totalorder %s30, 1
      %p86 = por %p84, %p85
      %p88 = scmp.ne.s32.totalorder %s73, %s87
      %p89 = scmp.eq.s32.totalorder %s30, 0
      %p90 = por %p88, %p89
      %s92 = sadd.s32 %s91, 1
      %p95 = scmp.eq.s32.totalorder %s24, 1
      %p96 = scmp.ne.s32.totalorder %s91, %s93
      %p97 = scmp.eq.s32.totalorder %s24, 0
      %p98 = por %p96, %p97
      %p99 = scmp.ne.s32.totalorder %s91, %s93
      %p100 = scmp.eq.s32.totalorder %s29, 1
      %p101 = por %p99, %p100
      %p102 = scmp.ne.s32.totalorder %s93, %s94
      %p103 = scmp.eq.s32.totalorder %s29, 0
      %p104 = por %p102, %p103
      %p105 = scmp.ne.s32.totalorder %s93, %s94
      %p106 = scmp.eq.s32.totalorder %s30, 1
      %p107 = por %p105, %p106
      %p109 = scmp.ne.s32.totalorder %s94, %s108
      %p110 = scmp.eq.s32.totalorder %s30, 0
      %p111 = por %p109, %p110
      %s113 = sadd.s32 %s112, 1
      %p116 = scmp.eq.s32.totalorder %s24, 1
      %p117 = scmp.ne.s32.totalorder %s112, %s114
      %p118 = scmp.eq.s32.totalorder %s24, 0
      %p119 = por %p117, %p118
      %p120 = scmp.ne.s32.totalorder %s112, %s114
      %p121 = scmp.eq.s32.totalorder %s29, 1
      %p122 = por %p120, %p121
      %p123 = scmp.ne.s32.totalorder %s114, %s115
      %p124 = scmp.eq.s32.totalorder %s29, 0
      %p125 = por %p123, %p124
      %p126 = scmp.ne.s32.totalorder %s114, %s115
      %p127 = scmp.eq.s32.totalorder %s30, 1
      %p128 = por %p126, %p127
      %p130 = scmp.ne.s32.totalorder %s115, %s129
      %p131 = scmp.eq.s32.totalorder %s30, 0
      %p132 = por %p130, %p131
      %s134 = sadd.s32 %s133, 1
      %p137 = scmp.eq.s32.totalorder %s24, 1
      %p138 = scmp.ne.s32.totalorder %s133, %s135
      %p139 = scmp.eq.s32.totalorder %s24, 0
      %p140 = por %p138, %p139
      %p141 = scmp.ne.s32.totalorder %s133, %s135
      %p142 = scmp.eq.s32.totalorder %s29, 1
      %p143 = por %p141, %p142
      %p144 = scmp.ne.s32.totalorder %s135, %s136
      %p145 = scmp.eq.s32.totalorder %s29, 0
      %p146 = por %p144, %p145
      %p147 = scmp.ne.s32.totalorder %s135, %s136
      %p148 = scmp.eq.s32.totalorder %s30, 1
      %p149 = por %p147, %p148
      %p151 = scmp.ne.s32.totalorder %s136, %s150
      %p152 = scmp.eq.s32.totalorder %s30, 0
      %p153 = por %p151, %p152
      %s154 = ssub.s32 %s31, %s43
      %s155 = ssub.s32 %s32, %s39
      %s156 = sor.u32 %s154, %s155
      %p157 = scmp.eq.s32.totalorder %s156, 0
      %s159 = sadd.s32 %s158, 1
      %s160 = scalar_select %p157, %s158, %s159
      %p163 = pneg %p157
      %p164 = scmp.eq.s32.totalorder %s24, 1
      %p165 = por %p163, %p164
      %p166 = scmp.ne.s32.totalorder %s158, %s161
      %p167 = scmp.eq.s32.totalorder %s24, 0
      %p168 = por %p166, %p167
      %p169 = scmp.ne.s32.totalorder %s158, %s161
      %p170 = scmp.eq.s32.totalorder %s29, 1
      %p171 = por %p169, %p170
      %p172 = scmp.ne.s32.totalorder %s161, %s162
      %p173 = scmp.eq.s32.totalorder %s29, 0
      %p174 = por %p172, %p173
      %p175 = scmp.ne.s32.totalorder %s161, %s162
      %p176 = scmp.eq.s32.totalorder %s30, 1
      %p177 = por %p175, %p176
      %p179 = scmp.ne.s32.totalorder %s162, %s178
      %p180 = scmp.eq.s32.totalorder %s30, 0
      %p181 = por %p179, %p180
      %s182 = ssub.s32 %s31, %s43
      %s183 = ssub.s32 %s32, %s39
      %s184 = sor.u32 %s182, %s183
      %p185 = scmp.eq.s32.totalorder %s184, 0
      %s187 = sadd.s32 %s186, 1
      %s188 = scalar_select %p185, %s186, %s187
      %p191 = pneg %p185
      %p192 = scmp.eq.s32.totalorder %s24, 1
      %p193 = por %p191, %p192
      %p194 = scmp.ne.s32.totalorder %s186, %s189
      %p195 = scmp.eq.s32.totalorder %s24, 0
      %p196 = por %p194, %p195
      %p197 = scmp.ne.s32.totalorder %s186, %s189
      %p198 = scmp.eq.s32.totalorder %s29, 1
      %p199 = por %p197, %p198
      %p200 = scmp.ne.s32.totalorder %s189, %s190
      %p201 = scmp.eq.s32.totalorder %s29, 0
      %p202 = por %p200, %p201
      %p203 = scmp.ne.s32.totalorder %s189, %s190
      %p204 = scmp.eq.s32.totalorder %s30, 1
      %p205 = por %p203, %p204
      %p207 = scmp.ne.s32.totalorder %s190, %s206
      %p208 = scmp.eq.s32.totalorder %s30, 0
      %p209 = por %p207, %p208
      %p210 = scmp.le.s32.totalorder 1, %s24
      %p211 = scmp.lt.s32.totalorder %s24, 3
      %p212 = pnand %p210, %p211
      %p213 = pneg %p212
      // Predicated region
      $region9: #{tpu_custom_call.1} parent=5 // pred_check
        _
      $region10: #{tpu_custom_call.1} parent=5 // pred_check_branch
        %215 = sbr.rel (%p212) target = $region12
      $region11: #{tpu_custom_call.1} parent=5 // pred_region
        %s216 = ssub.s32 %s24, 1
        // Predicated region
        $region13: #{tpu_custom_call.1} parent=11 // pred_check
          %p217 = pneg %p83
        $region14: #{tpu_custom_call.1} parent=11 // pred_check_branch
          %219 = sbr.rel (%p217) target = $region16
        $region15: #{tpu_custom_call.1} parent=11 // pred_region
          %221 = vsyncadd [#allocation9], 0
          %s222 = sshll.u32 %s1, 4
          %s223 = int_to_ptr.hbm [resolvable:$true] %s222
          %s224 = sshll.u32 [#allocation8], 4
          %s225 = int_to_ptr.vmem [resolvable:$true] %s224
          %230 = dma.hbm_to_vmem [thread:$0]  %s223, 512, %s225, [#allocation9], 128, 128, 8
        $region16: #{tpu_custom_call.1} parent=11 // pred_fallthru
          _
        // Predicated region
        $region17: #{tpu_custom_call.1} parent=11 // pred_check
          %p231 = pneg %p104
        $region18: #{tpu_custom_call.1} parent=11 // pred_check_branch
          %233 = sbr.rel (%p231) target = $region20
        $region19: #{tpu_custom_call.1} parent=11 // pred_region
          %235 = vsyncadd [#allocation9], 0
          %s236 = sshll.u32 %s2, 4
          %s237 = int_to_ptr.hbm [resolvable:$true] %s236
          %s238 = sshll.u32 [#allocation10], 4
          %s239 = int_to_ptr.vmem [resolvable:$true] %s238
          %244 = dma.hbm_to_vmem [thread:$0]  %s237, 512, %s239, [#allocation9], 128, 128, 8
        $region20: #{tpu_custom_call.1} parent=11 // pred_fallthru
          _
        // Predicated region
        $region21: #{tpu_custom_call.1} parent=11 // pred_check
          %p245 = pneg %p125
        $region22: #{tpu_custom_call.1} parent=11 // pred_check_branch
          %247 = sbr.rel (%p245) target = $region24
        $region23: #{tpu_custom_call.1} parent=11 // pred_region
          %249 = vsyncadd [#allocation12], 0
          %s250 = sshll.u32 %s3, 4
          %s251 = int_to_ptr.hbm [resolvable:$true] %s250
          %s252 = sshll.u32 [#allocation11], 4
          %s253 = int_to_ptr.vmem [resolvable:$true] %s252
          %258 = dma.hbm_to_vmem [thread:$0]  %s251, 512, %s253, [#allocation12], 128, 128, 8
        $region24: #{tpu_custom_call.1} parent=11 // pred_fallthru
          _
        // Predicated region
        $region25: #{tpu_custom_call.1} parent=11 // pred_check
          %p259 = pneg %p146
        $region26: #{tpu_custom_call.1} parent=11 // pred_check_branch
          %261 = sbr.rel (%p259) target = $region28
        $region27: #{tpu_custom_call.1} parent=11 // pred_region
          _
        $region28: #{tpu_custom_call.1} parent=11 // pred_fallthru
          _
      $region12: #{tpu_custom_call.1} parent=5 // pred_fallthru
        _
      %p262 = scmp.lt.s32.totalorder %s24, 2
      // Predicated region
      $region29: #{tpu_custom_call.1} parent=5 // pred_check
        %p263 = pneg %p262
      $region30: #{tpu_custom_call.1} parent=5 // pred_check_branch
        %265 = sbr.rel (%p263) target = $region32
      $region31: #{tpu_custom_call.1} parent=5 // pred_region
        // Predicated region
        $region33: #{tpu_custom_call.1} parent=31 // pred_check
          %p266 = pneg %p56
        $region34: #{tpu_custom_call.1} parent=31 // pred_check_branch
          %268 = sbr.rel (%p266) target = $region36
        $region35: #{tpu_custom_call.1} parent=31 // pred_region
          %s269 = sand.u32 %s46, 1
          %s270 = scalar_lea.sflag [#allocation6], %s269
          %s271 = sand.u32 %s46, 1
          %s272 = smul.addr %s271, 8
          %s273 = scalar_lea.vmem [#allocation5], %s272
          %275 = vsyncadd %s270, 0
          %s276 = smul.addr %s31, 8
          %s277 = scalar_lea.hbm %s0, %s276
          %s279 = sshll.u32 %s277, 4
          %s280 = int_to_ptr.hbm [resolvable:$true] %s279
          %s281 = sshll.u32 %s273, 4
          %s282 = int_to_ptr.vmem [resolvable:$true] %s281
          %284 = dma.hbm_to_vmem [thread:$0]  %s280, 128, %s282, %s270
        $region36: #{tpu_custom_call.1} parent=31 // pred_fallthru
          _
      $region32: #{tpu_custom_call.1} parent=5 // pred_fallthru
        _
      %p285 = scmp.le.s32.totalorder 1, %s24
      %p286 = scmp.lt.s32.totalorder %s24, 3
      %p287 = pnand %p285, %p286
      %p288 = pneg %p287
      // Predicated region
      $region37: #{tpu_custom_call.1} parent=5 // pred_check
        _
      $region38: #{tpu_custom_call.1} parent=5 // pred_check_branch
        %290 = sbr.rel (%p287) target = $region40
      $region39: #{tpu_custom_call.1} parent=5 // pred_region
        %s291 = ssub.s32 %s24, 1
        %s292 = sand.u32 %s49, 1
        %s293 = scalar_lea.sflag [#allocation6], %s292
        %s294 = sand.u32 %s49, 1
        %s295 = smul.addr %s294, 8
        %s296 = scalar_lea.vmem [#allocation5], %s295
        // Predicated region
        $region41: #{tpu_custom_call.1} parent=39 // pred_check
          %p297 = pneg %p62
        $region42: #{tpu_custom_call.1} parent=39 // pred_check_branch
          %299 = sbr.rel (%p297) target = $region44
        $region43: #{tpu_custom_call.1} parent=39 // pred_region
          %301 = dma.done %s293, 128
        $region44: #{tpu_custom_call.1} parent=39 // pred_fallthru
          _
        // Predicated region
        $region45: #{tpu_custom_call.1} parent=39 // pred_check
          %p302 = pneg %p83
        $region46: #{tpu_custom_call.1} parent=39 // pred_check_branch
          %304 = sbr.rel (%p302) target = $region48
        $region47: #{tpu_custom_call.1} parent=39 // pred_region
          %306 = dma.done [#allocation9], 512
        $region48: #{tpu_custom_call.1} parent=39 // pred_fallthru
          _
        // Predicated region
        $region49: #{tpu_custom_call.1} parent=39 // pred_check
          %p307 = pneg %p104
        $region50: #{tpu_custom_call.1} parent=39 // pred_check_branch
          %309 = sbr.rel (%p307) target = $region52
        $region51: #{tpu_custom_call.1} parent=39 // pred_region
          %311 = dma.done [#allocation9], 512
        $region52: #{tpu_custom_call.1} parent=39 // pred_fallthru
          _
        // Predicated region
        $region53: #{tpu_custom_call.1} parent=39 // pred_check
          %p312 = pneg %p125
        $region54: #{tpu_custom_call.1} parent=39 // pred_check_branch
          %314 = sbr.rel (%p312) target = $region56
        $region55: #{tpu_custom_call.1} parent=39 // pred_region
          %316 = dma.done [#allocation12], 512
        $region56: #{tpu_custom_call.1} parent=39 // pred_fallthru
          _
        %s317 = sand.u32 %s49, 1
        %s318 = scalar_lea.sflag [#allocation6], %s317
        %s319 = sand.u32 %s49, 1
        %s320 = smul.addr %s319, 8
        %s321 = scalar_lea.vmem [#allocation5], %s320
        %p322 = pneg %p62
        %p323 = pneg %p59
        %p324 = pneg %p83
        %p325 = pneg %p80
        %p326 = pneg %p104
        %p327 = pneg %p101
        %p328 = pneg %p125
        %p329 = pneg %p122
        %p330 = pneg %p146
        %p331 = pneg %p143
        %p332 = pneg %p174
        %p333 = pneg %p171
        %s334 = sand.u32 %s161, 1
        %s335 = scalar_lea.sflag [#allocation7], %s334
        %s336 = sand.u32 %s161, 1
        %s337 = smul.addr %s336, 8
        %s338 = scalar_lea.vmem [#allocation13], %s337
        %p339 = pneg %p202
        %p340 = pneg %p199
        %s341 = sand.u32 %s189, 1
        %s342 = scalar_lea.sflag [#allocation15], %s341
        %s343 = sand.u32 %s189, 1
        %s344 = smul.addr %s343, 8
        %s345 = scalar_lea.vmem [#allocation14], %s344
        %p346 = scmp.eq.s32.totalorder %s34, 0
        // Predicated region
        $region57: #{tpu_custom_call.1} parent=39 // pred_check
          %p347 = pneg %p346
        $region58: #{tpu_custom_call.1} parent=39 // pred_check_branch
          %349 = sbr.rel (%p347) target = $region60
        $region59: #{tpu_custom_call.1} parent=39 // pred_region
          %v350 = vld [vmem:[%s296] sm:$0xff]
          %v351 = vld [vmem:[#allocation10] sm:$0xff]
          %v352 = vld [vmem:[#allocation10 + $0x8] sm:$0xff]
          %v353 = vld [vmem:[#allocation10 + $0x10] sm:$0xff]
          %v354 = vld [vmem:[#allocation10 + $0x18] sm:$0xff]
          %vm355 = vcmask 261120
          %v357 = vsel %vm355, %v350, 0
          %359 = vmatpush.msra.mxu0 0.0
          %360 = vmatpush.msra.mxu0 0.0
          %361 = vmatpush.msra.mxu0 0.0
          %362 = vmatpush.msra.mxu0 0.0
          %363 = vmatpush.msra.mxu0 0.0
          %364 = vmatpush.msra.mxu0 0.0
          %365 = vmatpush.msra.mxu0 0.0
          %366 = vmatpush.msra.mxu0 0.0
          %367 = vmatpush.msra.mxu0 0.0
          %368 = vmatpush.msra.mxu0 0.0
          %369 = vmatpush.msra.mxu0 0.0
          %370 = vmatpush.msra.mxu0 0.0
          %371 = vmatpush.msra.mxu0 %v354
          %372 = vmatpush.msra.mxu0 %v353
          %373 = vmatpush.msra.mxu0 %v352
          %374 = vmatpush.msra.mxu0 %v351
          %375 = vmatmul.f32.gmra.mxu0 %v357
          %v376 = vpop.f32.mrf.mxu0
          %v377 = vadd.f32 0.0, %v376
          %378 = vdwg.mxu0
          %vm379 = vcmask 523264
          %380 = vst.msk [vmem:[#allocation2] sm:$0xff] %vm379, %v377
        $region60: #{tpu_custom_call.1} parent=39 // pred_fallthru
          _
        %s381 = smul.u32 %s34, 8
        %s382 = scalar_lea.vmem %s296, %s381 [#allocation5]
        %v383 = vld [vmem:[%s382] sm:$0xff]
        %v384 = vld [vmem:[#allocation8] sm:$0xff]
        %v385 = vld [vmem:[#allocation8 + $0x8] sm:$0xff]
        %v386 = vld [vmem:[#allocation8 + $0x10] sm:$0xff]
        %v387 = vld [vmem:[#allocation8 + $0x18] sm:$0xff]
        %vm388 = vcmask 261120
        %v390 = vsel %vm388, %v383, 0
        %392 = vmatpush.msra.mxu0 0.0
        %393 = vmatpush.msra.mxu0 0.0
        %394 = vmatpush.msra.mxu0 0.0
        %395 = vmatpush.msra.mxu0 0.0
        %396 = vmatpush.msra.mxu0 0.0
        %397 = vmatpush.msra.mxu0 0.0
        %398 = vmatpush.msra.mxu0 0.0
        %399 = vmatpush.msra.mxu0 0.0
        %400 = vmatpush.msra.mxu0 0.0
        %401 = vmatpush.msra.mxu0 0.0
        %402 = vmatpush.msra.mxu0 0.0
        %403 = vmatpush.msra.mxu0 0.0
        %404 = vmatpush.msra.mxu0 %v387
        %405 = vmatpush.msra.mxu0 %v386
        %406 = vmatpush.msra.mxu0 %v385
        %407 = vmatpush.msra.mxu0 %v384
        %408 = vmatmul.f32.gmra.mxu0 %v390
        %v409 = vpop.f32.mrf.mxu0
        %v410 = vadd.f32 0.0, %v409
        %411 = vdwg.mxu0
        %vm412 = vcmask 64512
        %413 = vst.msk [vmem:[#allocation3] sm:$0xff] %vm412, 0.0
        %v414 = vld [vmem:[#allocation2] sm:$0xff]
        %vm415 = vcmask 31744
        %v417 = vsel %vm415, %v410, 0
        %v420 = vsel %vm415, %v414, 0
        %422 = vmatpush.xpose.msra.mxu0 0.0
        %423 = vmatpush.xpose.msra.mxu0 0.0
        %424 = vmatpush.xpose.msra.mxu0 0.0
        %425 = vmatpush.xpose.msra.mxu0 0.0
        %426 = vmatpush.xpose.msra.mxu0 0.0
        %427 = vmatpush.xpose.msra.mxu0 0.0
        %428 = vmatpush.xpose.msra.mxu0 0.0
        %429 = vmatpush.xpose.msra.mxu0 0.0
        %430 = vmatpush.xpose.msra.mxu0 0.0
        %431 = vmatpush.xpose.msra.mxu0 0.0
        %432 = vmatpush.xpose.msra.mxu0 0.0
        %433 = vmatpush.xpose.msra.mxu0 0.0
        %434 = vmatpush.xpose.msra.mxu0 0.0
        %435 = vmatpush.xpose.msra.mxu0 0.0
        %436 = vmatpush.xpose.msra.mxu0 0.0
        %437 = vmatpush.xpose.msra.mxu0 %v420
        %438 = vmatmul.f32.gmra.mxu0 %v417
        %v439 = vpop.f32.mrf.mxu0
        %v440 = vadd.f32 0.0, %v439
        %441 = vdwg.mxu0
        %v442 = vsel %vm412, %v440, -inf
        %443 = vmax.xlane.f32.xlu0 %v442
        %v444 = vpop.xlane.xlu0 %443
        %v445 = vsub.f32 %v440, %v444
        %v446 = vmul.f32 %v445, 1.442695
        %v447 = vpow.pop %v446
        %v448 = vsel %vm412, %v447, 0.0
        %449 = vadd.xlane.f32.xlu0 %v448
        %v450 = vpop.xlane.xlu0 %449
        %v451 = vrcp.pop %v450
        %v452 = vmul.f32 %v450, %v451
        %v453 = vsub.f32 2.0, %v452
        %v454 = vmul.f32 %v451, %v453
        %v455 = vmul.f32 %v447, %v454
        %v456 = vld [vmem:[#allocation3] sm:$0xff]
        %v457 = vadd.f32 %v456, %v455
        %458 = vst.msk [vmem:[#allocation3] sm:$0xff] %vm412, %v457
        %459 = vrot.lane.b32.xlu0 %v414, 96
        %v460 = vpop.permute.xlu0 %459
        %v463 = vsel %vm412, %v455, 0
        %465 = vmatpush.msra.mxu0 0.0
        %466 = vmatpush.msra.mxu0 0.0
        %467 = vmatpush.msra.mxu0 0.0
        %468 = vmatpush.msra.mxu0 0.0
        %469 = vmatpush.msra.mxu0 0.0
        %470 = vmatpush.msra.mxu0 0.0
        %471 = vmatpush.msra.mxu0 0.0
        %472 = vmatpush.msra.mxu0 0.0
        %473 = vmatpush.msra.mxu0 0.0
        %474 = vmatpush.msra.mxu0 0.0
        %475 = vmatpush.msra.mxu0 0.0
        %476 = vmatpush.msra.mxu0 0.0
        %477 = vmatpush.msra.mxu0 0.0
        %478 = vmatpush.msra.mxu0 0.0
        %479 = vmatpush.msra.mxu0 0.0
        %480 = vmatpush.msra.mxu0 %v460
        %481 = vmatmul.f32.gmra.mxu0 %v463
        %v482 = vpop.f32.mrf.mxu0
        %v483 = vadd.f32 0.0, %v482
        %484 = vdwg.mxu0
        %485 = vst.msk [vmem:[#allocation4] sm:$0xff] %vm415, %v483
        %v486 = vld [vmem:[#allocation2] sm:$0xff]
        %487 = vrot.lane.b32.xlu0 %v410, 124
        %v488 = vpop.permute.xlu0 %487
        %490 = vrot.lane.b32.xlu0 %v486, 124
        %v491 = vpop.permute.xlu0 %490
        %v492 = vsel %vm415, %v488, 0
        %v494 = vsel %vm415, %v491, 0
        %496 = vmatpush.xpose.msra.mxu0 0.0
        %497 = vmatpush.xpose.msra.mxu0 0.0
        %498 = vmatpush.xpose.msra.mxu0 0.0
        %499 = vmatpush.xpose.msra.mxu0 0.0
        %500 = vmatpush.xpose.msra.mxu0 0.0
        %501 = vmatpush.xpose.msra.mxu0 0.0
        %502 = vmatpush.xpose.msra.mxu0 0.0
        %503 = vmatpush.xpose.msra.mxu0 0.0
        %504 = vmatpush.xpose.msra.mxu0 0.0
        %505 = vmatpush.xpose.msra.mxu0 0.0
        %506 = vmatpush.xpose.msra.mxu0 0.0
        %507 = vmatpush.xpose.msra.mxu0 0.0
        %508 = vmatpush.xpose.msra.mxu0 0.0
        %509 = vmatpush.xpose.msra.mxu0 0.0
        %510 = vmatpush.xpose.msra.mxu0 0.0
        %511 = vmatpush.xpose.msra.mxu0 %v494
        %512 = vmatmul.f32.gmra.mxu0 %v492
        %v513 = vpop.f32.mrf.mxu0
        %v514 = vadd.f32 0.0, %v513
        %515 = vdwg.mxu0
        %v516 = vsel %vm412, %v514, -inf
        %517 = vmax.xlane.f32.xlu0 %v516
        %v518 = vpop.xlane.xlu0 %517
        %v519 = vsub.f32 %v514, %v518
        %v520 = vmul.f32 %v519, 1.442695
        %v521 = vpow.pop %v520
        %v522 = vsel %vm412, %v521, 0.0
        %523 = vadd.xlane.f32.xlu0 %v522
        %v524 = vpop.xlane.xlu0 %523
        %v525 = vrcp.pop %v524
        %v526 = vmul.f32 %v524, %v525
        %v527 = vsub.f32 2.0, %v526
        %v528 = vmul.f32 %v525, %v527
        %v529 = vmul.f32 %v521, %v528
        %v530 = vld [vmem:[#allocation3] sm:$0xff]
        %v531 = vadd.f32 %v530, %v529
        %532 = vst.msk [vmem:[#allocation3] sm:$0xff] %vm412, %v531
        %533 = vrot.lane.b32.xlu0 %v486, 92
        %v534 = vpop.permute.xlu0 %533
        %v537 = vsel %vm412, %v529, 0
        %539 = vmatpush.msra.mxu0 0.0
        %540 = vmatpush.msra.mxu0 0.0
        %541 = vmatpush.msra.mxu0 0.0
        %542 = vmatpush.msra.mxu0 0.0
        %543 = vmatpush.msra.mxu0 0.0
        %544 = vmatpush.msra.mxu0 0.0
        %545 = vmatpush.msra.mxu0 0.0
        %546 = vmatpush.msra.mxu0 0.0
        %547 = vmatpush.msra.mxu0 0.0
        %548 = vmatpush.msra.mxu0 0.0
        %549 = vmatpush.msra.mxu0 0.0
        %550 = vmatpush.msra.mxu0 0.0
        %551 = vmatpush.msra.mxu0 0.0
        %552 = vmatpush.msra.mxu0 0.0
        %553 = vmatpush.msra.mxu0 0.0
        %554 = vmatpush.msra.mxu0 %v534
        %555 = vmatmul.f32.gmra.mxu0 %v537
        %v556 = vpop.f32.mrf.mxu0
        %v557 = vadd.f32 0.0, %v556
        %558 = vdwg.mxu0
        %560 = vrot.lane.b32.xlu0 %v557, 4
        %v561 = vpop.permute.xlu0 %560
        %vm563 = vcmask 64544
        %564 = vst.msk [vmem:[#allocation4] sm:$0xff] %vm563, %v561
        %v565 = vld [vmem:[#allocation2] sm:$0xff]
        %566 = vrot.lane.b32.xlu0 %v410, 120
        %v567 = vpop.permute.xlu0 %566
        %569 = vrot.lane.b32.xlu0 %v565, 120
        %v570 = vpop.permute.xlu0 %569
        %v571 = vsel %vm415, %v567, 0
        %v573 = vsel %vm415, %v570, 0
        %575 = vmatpush.xpose.msra.mxu0 0.0
        %576 = vmatpush.xpose.msra.mxu0 0.0
        %577 = vmatpush.xpose.msra.mxu0 0.0
        %578 = vmatpush.xpose.msra.mxu0 0.0
        %579 = vmatpush.xpose.msra.mxu0 0.0
        %580 = vmatpush.xpose.msra.mxu0 0.0
        %581 = vmatpush.xpose.msra.mxu0 0.0
        %582 = vmatpush.xpose.msra.mxu0 0.0
        %583 = vmatpush.xpose.msra.mxu0 0.0
        %584 = vmatpush.xpose.msra.mxu0 0.0
        %585 = vmatpush.xpose.msra.mxu0 0.0
        %586 = vmatpush.xpose.msra.mxu0 0.0
        %587 = vmatpush.xpose.msra.mxu0 0.0
        %588 = vmatpush.xpose.msra.mxu0 0.0
        %589 = vmatpush.xpose.msra.mxu0 0.0
        %590 = vmatpush.xpose.msra.mxu0 %v573
        %591 = vmatmul.f32.gmra.mxu0 %v571
        %v592 = vpop.f32.mrf.mxu0
        %v593 = vadd.f32 0.0, %v592
        %594 = vdwg.mxu0
        %v595 = vsel %vm412, %v593, -inf
        %596 = vmax.xlane.f32.xlu0 %v595
        %v597 = vpop.xlane.xlu0 %596
        %v598 = vsub.f32 %v593, %v597
        %v599 = vmul.f32 %v598, 1.442695
        %v600 = vpow.pop %v599
        %v601 = vsel %vm412, %v600, 0.0
        %602 = vadd.xlane.f32.xlu0 %v601
        %v603 = vpop.xlane.xlu0 %602
        %v604 = vrcp.pop %v603
        %v605 = vmul.f32 %v603, %v604
        %v606 = vsub.f32 2.0, %v605
        %v607 = vmul.f32 %v604, %v606
        %v608 = vmul.f32 %v600, %v607
        %v609 = vld [vmem:[#allocation3] sm:$0xff]
        %v610 = vadd.f32 %v609, %v608
        %611 = vst.msk [vmem:[#allocation3] sm:$0xff] %vm412, %v610
        %612 = vrot.lane.b32.xlu0 %v565, 88
        %v613 = vpop.permute.xlu0 %612
        %v616 = vsel %vm412, %v608, 0
        %618 = vmatpush.msra.mxu0 0.0
        %619 = vmatpush.msra.mxu0 0.0
        %620 = vmatpush.msra.mxu0 0.0
        %621 = vmatpush.msra.mxu0 0.0
        %622 = vmatpush.msra.mxu0 0.0
        %623 = vmatpush.msra.mxu0 0.0
        %624 = vmatpush.msra.mxu0 0.0
        %625 = vmatpush.msra.mxu0 0.0
        %626 = vmatpush.msra.mxu0 0.0
        %627 = vmatpush.msra.mxu0 0.0
        %628 = vmatpush.msra.mxu0 0.0
        %629 = vmatpush.msra.mxu0 0.0
        %630 = vmatpush.msra.mxu0 0.0
        %631 = vmatpush.msra.mxu0 0.0
        %632 = vmatpush.msra.mxu0 0.0
        %633 = vmatpush.msra.mxu0 %v613
        %634 = vmatmul.f32.gmra.mxu0 %v616
        %v635 = vpop.f32.mrf.mxu0
        %v636 = vadd.f32 0.0, %v635
        %637 = vdwg.mxu0
        %639 = vrot.lane.b32.xlu0 %v636, 8
        %v640 = vpop.permute.xlu0 %639
        %vm642 = vcmask 97344
        %643 = vst.msk [vmem:[#allocation4] sm:$0xff] %vm642, %v640
        %v644 = vld [vmem:[#allocation2] sm:$0xff]
        %645 = vrot.lane.b32.xlu0 %v410, 116
        %v646 = vpop.permute.xlu0 %645
        %648 = vrot.lane.b32.xlu0 %v644, 116
        %v649 = vpop.permute.xlu0 %648
        %v650 = vsel %vm415, %v646, 0
        %v652 = vsel %vm415, %v649, 0
        %654 = vmatpush.xpose.msra.mxu0 0.0
        %655 = vmatpush.xpose.msra.mxu0 0.0
        %656 = vmatpush.xpose.msra.mxu0 0.0
        %657 = vmatpush.xpose.msra.mxu0 0.0
        %658 = vmatpush.xpose.msra.mxu0 0.0
        %659 = vmatpush.xpose.msra.mxu0 0.0
        %660 = vmatpush.xpose.msra.mxu0 0.0
        %661 = vmatpush.xpose.msra.mxu0 0.0
        %662 = vmatpush.xpose.msra.mxu0 0.0
        %663 = vmatpush.xpose.msra.mxu0 0.0
        %664 = vmatpush.xpose.msra.mxu0 0.0
        %665 = vmatpush.xpose.msra.mxu0 0.0
        %666 = vmatpush.xpose.msra.mxu0 0.0
        %667 = vmatpush.xpose.msra.mxu0 0.0
        %668 = vmatpush.xpose.msra.mxu0 0.0
        %669 = vmatpush.xpose.msra.mxu0 %v652
        %670 = vmatmul.f32.gmra.mxu0 %v650
        %v671 = vpop.f32.mrf.mxu0
        %v672 = vadd.f32 0.0, %v671
        %673 = vdwg.mxu0
        %v674 = vsel %vm412, %v672, -inf
        %675 = vmax.xlane.f32.xlu0 %v674
        %v676 = vpop.xlane.xlu0 %675
        %v677 = vsub.f32 %v672, %v676
        %v678 = vmul.f32 %v677, 1.442695
        %v679 = vpow.pop %v678
        %v680 = vsel %vm412, %v679, 0.0
        %681 = vadd.xlane.f32.xlu0 %v680
        %v682 = vpop.xlane.xlu0 %681
        %v683 = vrcp.pop %v682
        %v684 = vmul.f32 %v682, %v683
        %v685 = vsub.f32 2.0, %v684
        %v686 = vmul.f32 %v683, %v685
        %v687 = vmul.f32 %v679, %v686
        %v688 = vld [vmem:[#allocation3] sm:$0xff]
        %v689 = vadd.f32 %v688, %v687
        %690 = vst.msk [vmem:[#allocation3] sm:$0xff] %vm412, %v689
        %691 = vrot.lane.b32.xlu0 %v644, 84
        %v692 = vpop.permute.xlu0 %691
        %v695 = vsel %vm412, %v687, 0
        %697 = vmatpush.msra.mxu0 0.0
        %698 = vmatpush.msra.mxu0 0.0
        %699 = vmatpush.msra.mxu0 0.0
        %700 = vmatpush.msra.mxu0 0.0
        %701 = vmatpush.msra.mxu0 0.0
        %702 = vmatpush.msra.mxu0 0.0
        %703 = vmatpush.msra.mxu0 0.0
        %704 = vmatpush.msra.mxu0 0.0
        %705 = vmatpush.msra.mxu0 0.0
        %706 = vmatpush.msra.mxu0 0.0
        %707 = vmatpush.msra.mxu0 0.0
        %708 = vmatpush.msra.mxu0 0.0
        %709 = vmatpush.msra.mxu0 0.0
        %710 = vmatpush.msra.mxu0 0.0
        %711 = vmatpush.msra.mxu0 0.0
        %712 = vmatpush.msra.mxu0 %v692
        %713 = vmatmul.f32.gmra.mxu0 %v695
        %v714 = vpop.f32.mrf.mxu0
        %v715 = vadd.f32 0.0, %v714
        %716 = vdwg.mxu0
        %718 = vrot.lane.b32.xlu0 %v715, 12
        %v719 = vpop.permute.xlu0 %718
        %vm721 = vcmask 130144
        %722 = vst.msk [vmem:[#allocation4] sm:$0xff] %vm721, %v719
        %v723 = vld [vmem:[#allocation2] sm:$0xff]
        %724 = vrot.lane.b32.xlu0 %v410, 112
        %v725 = vpop.permute.xlu0 %724
        %727 = vrot.lane.b32.xlu0 %v723, 112
        %v728 = vpop.permute.xlu0 %727
        %v729 = vsel %vm415, %v725, 0
        %v731 = vsel %vm415, %v728, 0
        %733 = vmatpush.xpose.msra.mxu0 0.0
        %734 = vmatpush.xpose.msra.mxu0 0.0
        %735 = vmatpush.xpose.msra.mxu0 0.0
        %736 = vmatpush.xpose.msra.mxu0 0.0
        %737 = vmatpush.xpose.msra.mxu0 0.0
        %738 = vmatpush.xpose.msra.mxu0 0.0
        %739 = vmatpush.xpose.msra.mxu0 0.0
        %740 = vmatpush.xpose.msra.mxu0 0.0
        %741 = vmatpush.xpose.msra.mxu0 0.0
        %742 = vmatpush.xpose.msra.mxu0 0.0
        %743 = vmatpush.xpose.msra.mxu0 0.0
        %744 = vmatpush.xpose.msra.mxu0 0.0
        %745 = vmatpush.xpose.msra.mxu0 0.0
        %746 = vmatpush.xpose.msra.mxu0 0.0
        %747 = vmatpush.xpose.msra.mxu0 0.0
        %748 = vmatpush.xpose.msra.mxu0 %v731
        %749 = vmatmul.f32.gmra.mxu0 %v729
        %v750 = vpop.f32.mrf.mxu0
        %v751 = vadd.f32 0.0, %v750
        %752 = vdwg.mxu0
        %v753 = vsel %vm412, %v751, -inf
        %754 = vmax.xlane.f32.xlu0 %v753
        %v755 = vpop.xlane.xlu0 %754
        %v756 = vsub.f32 %v751, %v755
        %v757 = vmul.f32 %v756, 1.442695
        %v758 = vpow.pop %v757
        %v759 = vsel %vm412, %v758, 0.0
        %760 = vadd.xlane.f32.xlu0 %v759
        %v761 = vpop.xlane.xlu0 %760
        %v762 = vrcp.pop %v761
        %v763 = vmul.f32 %v761, %v762
        %v764 = vsub.f32 2.0, %v763
        %v765 = vmul.f32 %v762, %v764
        %v766 = vmul.f32 %v758, %v765
        %v767 = vld [vmem:[#allocation3] sm:$0xff]
        %v768 = vadd.f32 %v767, %v766
        %769 = vst.msk [vmem:[#allocation3] sm:$0xff] %vm412, %v768
        %770 = vrot.lane.b32.xlu0 %v723, 80
        %v771 = vpop.permute.xlu0 %770
        %v774 = vsel %vm412, %v766, 0
        %776 = vmatpush.msra.mxu0 0.0
        %777 = vmatpush.msra.mxu0 0.0
        %778 = vmatpush.msra.mxu0 0.0
        %779 = vmatpush.msra.mxu0 0.0
        %780 = vmatpush.msra.mxu0 0.0
        %781 = vmatpush.msra.mxu0 0.0
        %782 = vmatpush.msra.mxu0 0.0
        %783 = vmatpush.msra.mxu0 0.0
        %784 = vmatpush.msra.mxu0 0.0
        %785 = vmatpush.msra.mxu0 0.0
        %786 = vmatpush.msra.mxu0 0.0
        %787 = vmatpush.msra.mxu0 0.0
        %788 = vmatpush.msra.mxu0 0.0
        %789 = vmatpush.msra.mxu0 0.0
        %790 = vmatpush.msra.mxu0 0.0
        %791 = vmatpush.msra.mxu0 %v771
        %792 = vmatmul.f32.gmra.mxu0 %v774
        %v793 = vpop.f32.mrf.mxu0
        %v794 = vadd.f32 0.0, %v793
        %795 = vdwg.mxu0
        %797 = vrot.lane.b32.xlu0 %v794, 16
        %v798 = vpop.permute.xlu0 %797
        %vm800 = vcmask 162944
        %801 = vst.msk [vmem:[#allocation4] sm:$0xff] %vm800, %v798
        %v802 = vld [vmem:[#allocation2] sm:$0xff]
        %803 = vrot.lane.b32.xlu0 %v410, 108
        %v804 = vpop.permute.xlu0 %803
        %806 = vrot.lane.b32.xlu0 %v802, 108
        %v807 = vpop.permute.xlu0 %806
        %v808 = vsel %vm415, %v804, 0
        %v810 = vsel %vm415, %v807, 0
        %812 = vmatpush.xpose.msra.mxu0 0.0
        %813 = vmatpush.xpose.msra.mxu0 0.0
        %814 = vmatpush.xpose.msra.mxu0 0.0
        %815 = vmatpush.xpose.msra.mxu0 0.0
        %816 = vmatpush.xpose.msra.mxu0 0.0
        %817 = vmatpush.xpose.msra.mxu0 0.0
        %818 = vmatpush.xpose.msra.mxu0 0.0
        %819 = vmatpush.xpose.msra.mxu0 0.0
        %820 = vmatpush.xpose.msra.mxu0 0.0
        %821 = vmatpush.xpose.msra.mxu0 0.0
        %822 = vmatpush.xpose.msra.mxu0 0.0
        %823 = vmatpush.xpose.msra.mxu0 0.0
        %824 = vmatpush.xpose.msra.mxu0 0.0
        %825 = vmatpush.xpose.msra.mxu0 0.0
        %826 = vmatpush.xpose.msra.mxu0 0.0
        %827 = vmatpush.xpose.msra.mxu0 %v810
        %828 = vmatmul.f32.gmra.mxu0 %v808
        %v829 = vpop.f32.mrf.mxu0
        %v830 = vadd.f32 0.0, %v829
        %831 = vdwg.mxu0
        %v832 = vsel %vm412, %v830, -inf
        %833 = vmax.xlane.f32.xlu0 %v832
        %v834 = vpop.xlane.xlu0 %833
        %v835 = vsub.f32 %v830, %v834
        %v836 = vmul.f32 %v835, 1.442695
        %v837 = vpow.pop %v836
        %v838 = vsel %vm412, %v837, 0.0
        %839 = vadd.xlane.f32.xlu0 %v838
        %v840 = vpop.xlane.xlu0 %839
        %v841 = vrcp.pop %v840
        %v842 = vmul.f32 %v840, %v841
        %v843 = vsub.f32 2.0, %v842
        %v844 = vmul.f32 %v841, %v843
        %v845 = vmul.f32 %v837, %v844
        %v846 = vld [vmem:[#allocation3] sm:$0xff]
        %v847 = vadd.f32 %v846, %v845
        %848 = vst.msk [vmem:[#allocation3] sm:$0xff] %vm412, %v847
        %849 = vrot.lane.b32.xlu0 %v802, 76
        %v850 = vpop.permute.xlu0 %849
        %v853 = vsel %vm412, %v845, 0
        %855 = vmatpush.msra.mxu0 0.0
        %856 = vmatpush.msra.mxu0 0.0
        %857 = vmatpush.msra.mxu0 0.0
        %858 = vmatpush.msra.mxu0 0.0
        %859 = vmatpush.msra.mxu0 0.0
        %860 = vmatpush.msra.mxu0 0.0
        %861 = vmatpush.msra.mxu0 0.0
        %862 = vmatpush.msra.mxu0 0.0
        %863 = vmatpush.msra.mxu0 0.0
        %864 = vmatpush.msra.mxu0 0.0
        %865 = vmatpush.msra.mxu0 0.0
        %866 = vmatpush.msra.mxu0 0.0
        %867 = vmatpush.msra.mxu0 0.0
        %868 = vmatpush.msra.mxu0 0.0
        %869 = vmatpush.msra.mxu0 0.0
        %870 = vmatpush.msra.mxu0 %v850
        %871 = vmatmul.f32.gmra.mxu0 %v853
        %v872 = vpop.f32.mrf.mxu0
        %v873 = vadd.f32 0.0, %v872
        %874 = vdwg.mxu0
        %876 = vrot.lane.b32.xlu0 %v873, 20
        %v877 = vpop.permute.xlu0 %876
        %vm879 = vcmask 195744
        %880 = vst.msk [vmem:[#allocation4] sm:$0xff] %vm879, %v877
        %v881 = vld [vmem:[#allocation2] sm:$0xff]
        %882 = vrot.lane.b32.xlu0 %v410, 104
        %v883 = vpop.permute.xlu0 %882
        %885 = vrot.lane.b32.xlu0 %v881, 104
        %v886 = vpop.permute.xlu0 %885
        %v887 = vsel %vm415, %v883, 0
        %v889 = vsel %vm415, %v886, 0
        %891 = vmatpush.xpose.msra.mxu0 0.0
        %892 = vmatpush.xpose.msra.mxu0 0.0
        %893 = vmatpush.xpose.msra.mxu0 0.0
        %894 = vmatpush.xpose.msra.mxu0 0.0
        %895 = vmatpush.xpose.msra.mxu0 0.0
        %896 = vmatpush.xpose.msra.mxu0 0.0
        %897 = vmatpush.xpose.msra.mxu0 0.0
        %898 = vmatpush.xpose.msra.mxu0 0.0
        %899 = vmatpush.xpose.msra.mxu0 0.0
        %900 = vmatpush.xpose.msra.mxu0 0.0
        %901 = vmatpush.xpose.msra.mxu0 0.0
        %902 = vmatpush.xpose.msra.mxu0 0.0
        %903 = vmatpush.xpose.msra.mxu0 0.0
        %904 = vmatpush.xpose.msra.mxu0 0.0
        %905 = vmatpush.xpose.msra.mxu0 0.0
        %906 = vmatpush.xpose.msra.mxu0 %v889
        %907 = vmatmul.f32.gmra.mxu0 %v887
        %v908 = vpop.f32.mrf.mxu0
        %v909 = vadd.f32 0.0, %v908
        %910 = vdwg.mxu0
        %v911 = vsel %vm412, %v909, -inf
        %912 = vmax.xlane.f32.xlu0 %v911
        %v913 = vpop.xlane.xlu0 %912
        %v914 = vsub.f32 %v909, %v913
        %v915 = vmul.f32 %v914, 1.442695
        %v916 = vpow.pop %v915
        %v917 = vsel %vm412, %v916, 0.0
        %918 = vadd.xlane.f32.xlu0 %v917
        %v919 = vpop.xlane.xlu0 %918
        %v920 = vrcp.pop %v919
        %v921 = vmul.f32 %v919, %v920
        %v922 = vsub.f32 2.0, %v921
        %v923 = vmul.f32 %v920, %v922
        %v924 = vmul.f32 %v916, %v923
        %v925 = vld [vmem:[#allocation3] sm:$0xff]
        %v926 = vadd.f32 %v925, %v924
        %927 = vst.msk [vmem:[#allocation3] sm:$0xff] %vm412, %v926
        %928 = vrot.lane.b32.xlu0 %v881, 72
        %v929 = vpop.permute.xlu0 %928
        %v932 = vsel %vm412, %v924, 0
        %934 = vmatpush.msra.mxu0 0.0
        %935 = vmatpush.msra.mxu0 0.0
        %936 = vmatpush.msra.mxu0 0.0
        %937 = vmatpush.msra.mxu0 0.0
        %938 = vmatpush.msra.mxu0 0.0
        %939 = vmatpush.msra.mxu0 0.0
        %940 = vmatpush.msra.mxu0 0.0
        %941 = vmatpush.msra.mxu0 0.0
        %942 = vmatpush.msra.mxu0 0.0
        %943 = vmatpush.msra.mxu0 0.0
        %944 = vmatpush.msra.mxu0 0.0
        %945 = vmatpush.msra.mxu0 0.0
        %946 = vmatpush.msra.mxu0 0.0
        %947 = vmatpush.msra.mxu0 0.0
        %948 = vmatpush.msra.mxu0 0.0
        %949 = vmatpush.msra.mxu0 %v929
        %950 = vmatmul.f32.gmra.mxu0 %v932
        %v951 = vpop.f32.mrf.mxu0
        %v952 = vadd.f32 0.0, %v951
        %953 = vdwg.mxu0
        %955 = vrot.lane.b32.xlu0 %v952, 24
        %v956 = vpop.permute.xlu0 %955
        %vm958 = vcmask 228544
        %959 = vst.msk [vmem:[#allocation4] sm:$0xff] %vm958, %v956
        %v960 = vld [vmem:[#allocation2] sm:$0xff]
        %961 = vrot.lane.b32.xlu0 %v410, 100
        %v962 = vpop.permute.xlu0 %961
        %964 = vrot.lane.b32.xlu0 %v960, 100
        %v965 = vpop.permute.xlu0 %964
        %v966 = vsel %vm415, %v962, 0
        %v968 = vsel %vm415, %v965, 0
        %970 = vmatpush.xpose.msra.mxu0 0.0
        %971 = vmatpush.xpose.msra.mxu0 0.0
        %972 = vmatpush.xpose.msra.mxu0 0.0
        %973 = vmatpush.xpose.msra.mxu0 0.0
        %974 = vmatpush.xpose.msra.mxu0 0.0
        %975 = vmatpush.xpose.msra.mxu0 0.0
        %976 = vmatpush.xpose.msra.mxu0 0.0
        %977 = vmatpush.xpose.msra.mxu0 0.0
        %978 = vmatpush.xpose.msra.mxu0 0.0
        %979 = vmatpush.xpose.msra.mxu0 0.0
        %980 = vmatpush.xpose.msra.mxu0 0.0
        %981 = vmatpush.xpose.msra.mxu0 0.0
        %982 = vmatpush.xpose.msra.mxu0 0.0
        %983 = vmatpush.xpose.msra.mxu0 0.0
        %984 = vmatpush.xpose.msra.mxu0 0.0
        %985 = vmatpush.xpose.msra.mxu0 %v968
        %986 = vmatmul.f32.gmra.mxu0 %v966
        %v987 = vpop.f32.mrf.mxu0
        %v988 = vadd.f32 0.0, %v987
        %989 = vdwg.mxu0
        %v990 = vsel %vm412, %v988, -inf
        %991 = vmax.xlane.f32.xlu0 %v990
        %v992 = vpop.xlane.xlu0 %991
        %v993 = vsub.f32 %v988, %v992
        %v994 = vmul.f32 %v993, 1.442695
        %v995 = vpow.pop %v994
        %v996 = vsel %vm412, %v995, 0.0
        %997 = vadd.xlane.f32.xlu0 %v996
        %v998 = vpop.xlane.xlu0 %997
        %v999 = vrcp.pop %v998
        %v1000 = vmul.f32 %v998, %v999
        %v1001 = vsub.f32 2.0, %v1000
        %v1002 = vmul.f32 %v999, %v1001
        %v1003 = vmul.f32 %v995, %v1002
        %v1004 = vld [vmem:[#allocation3] sm:$0xff]
        %v1005 = vadd.f32 %v1004, %v1003
        %1006 = vst.msk [vmem:[#allocation3] sm:$0xff] %vm412, %v1005
        %1007 = vrot.lane.b32.xlu0 %v960, 68
        %v1008 = vpop.permute.xlu0 %1007
        %v1011 = vsel %vm412, %v1003, 0
        %1013 = vmatpush.msra.mxu0 0.0
        %1014 = vmatpush.msra.mxu0 0.0
        %1015 = vmatpush.msra.mxu0 0.0
        %1016 = vmatpush.msra.mxu0 0.0
        %1017 = vmatpush.msra.mxu0 0.0
        %1018 = vmatpush.msra.mxu0 0.0
        %1019 = vmatpush.msra.mxu0 0.0
        %1020 = vmatpush.msra.mxu0 0.0
        %1021 = vmatpush.msra.mxu0 0.0
        %1022 = vmatpush.msra.mxu0 0.0
        %1023 = vmatpush.msra.mxu0 0.0
        %1024 = vmatpush.msra.mxu0 0.0
        %1025 = vmatpush.msra.mxu0 0.0
        %1026 = vmatpush.msra.mxu0 0.0
        %1027 = vmatpush.msra.mxu0 0.0
        %1028 = vmatpush.msra.mxu0 %v1008
        %1029 = vmatmul.f32.gmra.mxu0 %v1011
        %v1030 = vpop.f32.mrf.mxu0
        %v1031 = vadd.f32 0.0, %v1030
        %1032 = vdwg.mxu0
        %1034 = vrot.lane.b32.xlu0 %v1031, 28
        %v1035 = vpop.permute.xlu0 %1034
        %vm1037 = vcmask 261344
        %1038 = vst.msk [vmem:[#allocation4] sm:$0xff] %vm1037, %v1035
        %v1039 = vld [vmem:[#allocation4] sm:$0xff]
        %v1040 = vld [vmem:[#allocation11] sm:$0xff]
        %v1041 = vld [vmem:[#allocation11 + $0x8] sm:$0xff]
        %v1042 = vld [vmem:[#allocation11 + $0x10] sm:$0xff]
        %v1043 = vld [vmem:[#allocation11 + $0x18] sm:$0xff]
        %v1044 = vld [vmem:[%s4] sm:$0x1]
        %v1046 = vperm.slane %v1044, 0
        %v1049 = vsel %vm388, %v1039, 0
        %1051 = vmatpush.msra.mxu0 0.0
        %1052 = vmatpush.msra.mxu0 0.0
        %1053 = vmatpush.msra.mxu0 0.0
        %1054 = vmatpush.msra.mxu0 0.0
        %1055 = vmatpush.msra.mxu0 0.0
        %1056 = vmatpush.msra.mxu0 0.0
        %1057 = vmatpush.msra.mxu0 0.0
        %1058 = vmatpush.msra.mxu0 0.0
        %1059 = vmatpush.msra.mxu0 0.0
        %1060 = vmatpush.msra.mxu0 0.0
        %1061 = vmatpush.msra.mxu0 0.0
        %1062 = vmatpush.msra.mxu0 0.0
        %1063 = vmatpush.msra.mxu0 %v1043
        %1064 = vmatpush.msra.mxu0 %v1042
        %1065 = vmatpush.msra.mxu0 %v1041
        %1066 = vmatpush.msra.mxu0 %v1040
        %1067 = vmatmul.f32.gmra.mxu0 %v1049
        %v1068 = vpop.f32.mrf.mxu0
        %v1069 = vadd.f32 %v1046, %v1068
        %1070 = vdwg.mxu0
        %1071 = vst.msk [vmem:[%s338] sm:$0xff] %vm388, %v1069
        %v1072 = vld [vmem:[#allocation3] sm:$0xff]
        %v1073 = vmul.f32 %v1072, 0.125
        %1074 = vst.msk [vmem:[%s345] sm:$0xff] %vm412, %v1073
        %s1075 = sand.u32 %s161, 1
        %s1076 = scalar_lea.sflag [#allocation7], %s1075
        %s1077 = sand.u32 %s161, 1
        %s1078 = smul.addr %s1077, 8
        %s1079 = scalar_lea.vmem [#allocation13], %s1078
        %s1080 = sand.u32 %s189, 1
        %s1081 = scalar_lea.sflag [#allocation15], %s1080
        %s1082 = sand.u32 %s189, 1
        %s1083 = smul.addr %s1082, 8
        %s1084 = scalar_lea.vmem [#allocation14], %s1083
        // Predicated region
        $region61: #{tpu_custom_call.1} parent=39 // pred_check
          %p1085 = pneg %p171
        $region62: #{tpu_custom_call.1} parent=39 // pred_check_branch
          %1087 = sbr.rel (%p1085) target = $region64
        $region63: #{tpu_custom_call.1} parent=39 // pred_region
          %1089 = vsyncadd %s1076, 0
          %s1090 = sadd.s32 %s34, %s33
          %s1091 = smul.addr %s1090, 8
          %s1092 = scalar_lea.hbm %s5, %s1091
          %s1094 = sshll.u32 %s1079, 4
          %s1095 = int_to_ptr.vmem [resolvable:$true] %s1094
          %s1096 = sshll.u32 %s1092, 4
          %s1097 = int_to_ptr.hbm [resolvable:$true] %s1096
          %1099 = dma.vmem_to_hbm [thread:$0]  %s1095, 128, %s1097, %s1076
        $region64: #{tpu_custom_call.1} parent=39 // pred_fallthru
          _
        // Predicated region
        $region65: #{tpu_custom_call.1} parent=39 // pred_check
          %p1100 = pneg %p199
        $region66: #{tpu_custom_call.1} parent=39 // pred_check_branch
          %1102 = sbr.rel (%p1100) target = $region68
        $region67: #{tpu_custom_call.1} parent=39 // pred_region
          %1104 = vsyncadd %s1081, 0
          %s1105 = sadd.s32 %s34, %s33
          %s1106 = smul.addr %s1105, 8
          %s1107 = scalar_lea.hbm %s6, %s1106
          %s1109 = sshll.u32 %s1084, 4
          %s1110 = int_to_ptr.vmem [resolvable:$true] %s1109
          %s1111 = sshll.u32 %s1107, 4
          %s1112 = int_to_ptr.hbm [resolvable:$true] %s1111
          %1114 = dma.vmem_to_hbm [thread:$0]  %s1110, 128, %s1112, %s1081
        $region68: #{tpu_custom_call.1} parent=39 // pred_fallthru
          _
      $region40: #{tpu_custom_call.1} parent=5 // pred_fallthru
        _
      %p1115 = scmp.le.s32.totalorder 2, %s24
      // Predicated region
      $region69: #{tpu_custom_call.1} parent=5 // pred_check
        %p1116 = pneg %p1115
      $region70: #{tpu_custom_call.1} parent=5 // pred_check_branch
        %1118 = sbr.rel (%p1116) target = $region72
      $region71: #{tpu_custom_call.1} parent=5 // pred_region
        %s1119 = ssub.s32 %s24, 2
        // Predicated region
        $region73: #{tpu_custom_call.1} parent=71 // pred_check
          %p1120 = pneg %p177
        $region74: #{tpu_custom_call.1} parent=71 // pred_check_branch
          %1122 = sbr.rel (%p1120) target = $region76
        $region75: #{tpu_custom_call.1} parent=71 // pred_region
          %s1123 = sand.u32 %s162, 1
          %s1124 = scalar_lea.sflag [#allocation7], %s1123
          %s1125 = sand.u32 %s162, 1
          %s1126 = smul.addr %s1125, 8
          %s1127 = scalar_lea.vmem [#allocation13], %s1126
          %1129 = dma.done %s1124, 128
        $region76: #{tpu_custom_call.1} parent=71 // pred_fallthru
          _
        // Predicated region
        $region77: #{tpu_custom_call.1} parent=71 // pred_check
          %p1130 = pneg %p205
        $region78: #{tpu_custom_call.1} parent=71 // pred_check_branch
          %1132 = sbr.rel (%p1130) target = $region80
        $region79: #{tpu_custom_call.1} parent=71 // pred_region
          %s1133 = sand.u32 %s190, 1
          %s1134 = scalar_lea.sflag [#allocation15], %s1133
          %s1135 = sand.u32 %s190, 1
          %s1136 = smul.addr %s1135, 8
          %s1137 = scalar_lea.vmem [#allocation14], %s1136
          %1139 = dma.done %s1134, 128
        $region80: #{tpu_custom_call.1} parent=71 // pred_fallthru
          _
      $region72: #{tpu_custom_call.1} parent=5 // pred_fallthru
        _
    $region6: #{tpu_custom_call.1} parent=1 // loop_footer
      %s28 = sadd.s32 1, %s24
    $region7: #{tpu_custom_call.1} parent=1 // loop_footer_branch
      %23 = sbr.rel target = $region3
    $region8: #{tpu_custom_call.1} parent=1 // loop_exit
      _
    %1140 = vsyncpa [#allocation6], 1
    %s1141 = scalar_lea.sflag [#allocation6], 1
    %1142 = vsyncpa %s1141, 1
    %1143 = vsyncpa [#allocation9], 1
    %1144 = vsyncpa [#allocation12], 1
    %1145 = vsyncpa [#allocation7], 1
    %s1146 = scalar_lea.sflag [#allocation7], 1
    %1147 = vsyncpa %s1146, 1
    %1148 = vsyncpa [#allocation15], 1
    %s1149 = scalar_lea.sflag [#allocation15], 1
    %1150 = vsyncpa %s1149, 1

// kernel: tpu_custom_call.1
$region0: #{tpu_custom_call.1}
  #allocation0 [shape = 'u32[]', space=smem, size = 0x4, offset = 0x4, fixed_abs, tag = 'smem constant byte address 0x4 - core index']
  #allocation1 [shape = 'u32[72,128]{1,0:T(1,128)}', space=vmem, size = 0x9000, scoped, tag = 'internal scratch']
  #allocation2 [shape = 'f32[8,64]{1,0:T(8,128)}', space=vmem, size = 0x1000, scoped, tag = 'scratch operand']
  #allocation3 [shape = 'f32[8,8]{1,0:T(8,128)}', space=vmem, size = 0x1000, scoped, tag = 'scratch operand']
  #allocation4 [shape = 'f32[8,32]{1,0:T(8,128)}', space=vmem, size = 0x1000, scoped, tag = 'scratch operand']
  %s0 = inlined_call_operand.hbm [shape: f32[2,8,32], index: 0, kind: input, shape index: {}]
  %s1 = inlined_call_operand.hbm [shape: f32[32,32], index: 1, kind: input, shape index: {}]
  %s2 = inlined_call_operand.hbm [shape: f32[32,64], index: 2, kind: input, shape index: {}]
  %s3 = inlined_call_operand.hbm [shape: f32[32,32], index: 3, kind: input, shape index: {}]
  %s4 = inlined_call_operand.vmem [shape: f32[1,32], index: 4, kind: input, shape index: {}]
  %s5 = inlined_call_operand.hbm [shape: f32[2,8,32], index: 5, kind: output, shape index: {0}]
  %s6 = inlined_call_operand.hbm [shape: f32[2,8,8], index: 6, kind: output, shape index: {1}]
  %7 = xla_tuple %s5, %s6
  %s8 = sld [smem:[#allocation0]]
  $region81: #{tpu_custom_call.1} parent=0
    _
  %s10 = ssub.s32 1, %s8
  %s11 = scalar_select 0, %s10, %s8
  $region1: #{tpu_custom_call.1} parent=0
    #allocation5 [shape = 'u8[8192]{0}', space=vmem, size = 0x2000, scoped, tag = 'input window, operand 0']
    #allocation6 [shape = 's32[2]{0}', space=sflag, size = 0x8, scoped, tag = 'scoped memory for tpu_custom_call.1']
    #allocation7 [shape = 's32[2]{0}', space=sflag, size = 0x8, scoped, tag = 'scoped memory for tpu_custom_call.1']
    #allocation8 [shape = 'u8[16384]{0}', space=vmem, size = 0x4000, scoped, tag = 'input window, operand 1, single buffered']
    #allocation9 [shape = 's32[1]{0}', space=sflag, size = 0x4, scoped, tag = 'scoped memory for tpu_custom_call.1']
    #allocation10 [shape = 'u8[16384]{0}', space=vmem, size = 0x4000, scoped, tag = 'input window, operand 2, single buffered']
    #allocation11 [shape = 'u8[16384]{0}', space=vmem, size = 0x4000, scoped, tag = 'input window, operand 3, single buffered']
    #allocation12 [shape = 's32[1]{0}', space=sflag, size = 0x4, scoped, tag = 'scoped memory for tpu_custom_call.1']
    #allocation13 [shape = 'u8[8192]{0}', space=vmem, size = 0x2000, scoped, tag = 'output window, operand 0']
    #allocation14 [shape = 'u8[8192]{0}', space=vmem, size = 0x2000, scoped, tag = 'output window, operand 1']
    #allocation15 [shape = 's32[2]{0}', space=sflag, size = 0x8, scoped, tag = 'scoped memory for tpu_custom_call.1']
    %12 = vsyncpa [#allocation6], 0
    %s13 = scalar_lea.sflag [#allocation6], 1
    %14 = vsyncpa %s13, 0
    %15 = vsyncpa [#allocation9], 0
    %16 = vsyncpa [#allocation12], 0
    %17 = vsyncpa [#allocation7], 0
    %s18 = scalar_lea.sflag [#allocation7], 1
    %19 = vsyncpa %s18, 0
    %20 = vsyncpa [#allocation15], 0
    %s21 = scalar_lea.sflag [#allocation15], 1
    %22 = vsyncpa %s21, 0
    loop: start=0, step=1, limit=4
    $region2: #{tpu_custom_call.1} parent=1 // loop_pre_header
      _
    $region3: #{tpu_custom_call.1} parent=1 // loop_header
      %s24 = sphi 0, %s28
      %p25 = scmp.ge.s32.totalorder %s24, 4
      %s31 = sphi 0, %s43
      %s32 = sphi 0, %s39
      %s33 = sphi 0, %s31
      %s34 = sphi 0, %s32
      %s35 = sphi 0, %s33
      %s36 = sphi 0, %s34
      %s46 = sphi 0, %s48
      %s49 = sphi 0, %s46
      %s50 = sphi 0, %s49
      %s66 = sphi 0, %s50
      %s70 = sphi 0, %s70
      %s72 = sphi 0, %s70
      %s73 = sphi 0, %s72
      %s87 = sphi 0, %s73
      %s91 = sphi 0, %s91
      %s93 = sphi 0, %s91
      %s94 = sphi 0, %s93
      %s108 = sphi 0, %s94
      %s112 = sphi 0, %s112
      %s114 = sphi 0, %s112
      %s115 = sphi 0, %s114
      %s129 = sphi 0, %s115
      %s133 = sphi 0, %s133
      %s135 = sphi 0, %s133
      %s136 = sphi 0, %s135
      %s150 = sphi 0, %s136
      %s158 = sphi 0, %s160
      %s161 = sphi 0, %s158
      %s162 = sphi 0, %s161
      %s178 = sphi 0, %s162
      %s186 = sphi 0, %s188
      %s189 = sphi 0, %s186
      %s190 = sphi 0, %s189
      %s206 = sphi 0, %s190
    $region4: #{tpu_custom_call.1} parent=1 // loop_header_branch
      %27 = sbr.rel (%p25) target = $region8
    $region5: #{tpu_custom_call.1} parent=1 // loop_body
      %s29 = ssub.s32 %s24, 1
      %s30 = ssub.s32 %s24, 2
      %s37 = sadd.s32 1, %s32
      %p38 = scmp.ge.s32.totalorder %s37, 1
      %s39 = scalar_select %p38, 0, %s37
      %s40 = sadd.s32 1, %s31
      %s41 = scalar_select %p38, %s40, %s31
      %p42 = scmp.ge.s32.totalorder %s41, 2
      %s43 = scalar_select %p42, 0, %s41
      %s44 = ssub.s32 %s31, %s43
      %p45 = scmp.eq.s32.totalorder %s44, 0
      %s47 = sadd.s32 %s46, 1
      %s48 = scalar_select %p45, %s46, %s47
      %p51 = pneg %p45
      %p52 = scmp.eq.s32.totalorder %s24, 1
      %p53 = por %p51, %p52
      %p54 = scmp.ne.s32.totalorder %s46, %s49
      %p55 = scmp.eq.s32.totalorder %s24, 0
      %p56 = por %p54, %p55
      %p57 = scmp.ne.s32.totalorder %s46, %s49
      %p58 = scmp.eq.s32.totalorder %s29, 1
      %p59 = por %p57, %p58
      %p60 = scmp.ne.s32.totalorder %s49, %s50
      %p61 = scmp.eq.s32.totalorder %s29, 0
      %p62 = por %p60, %p61
      %p63 = scmp.ne.s32.totalorder %s49, %s50
      %p64 = scmp.eq.s32.totalorder %s30, 1
      %p65 = por %p63, %p64
      %p67 = scmp.ne.s32.totalorder %s50, %s66
      %p68 = scmp.eq.s32.totalorder %s30, 0
      %p69 = por %p67, %p68
      %s71 = sadd.s32 %s70, 1
      %p74 = scmp.eq.s32.totalorder %s24, 1
      %p75 = scmp.ne.s32.totalorder %s70, %s72
      %p76 = scmp.eq.s32.totalorder %s24, 0
      %p77 = por %p75, %p76
      %p78 = scmp.ne.s32.totalorder %s70, %s72
      %p79 = scmp.eq.s32.totalorder %s29, 1
      %p80 = por %p78, %p79
      %p81 = scmp.ne.s32.totalorder %s72, %s73
      %p82 = scmp.eq.s32.totalorder %s29, 0
      %p83 = por %p81, %p82
      %p84 = scmp.ne.s32.totalorder %s72, %s73
      %p85 = scmp.eq.s32.totalorder %s30, 1
      %p86 = por %p84, %p85
      %p88 = scmp.ne.s32.totalorder %s73, %s87
      %p89 = scmp.eq.s32.totalorder %s30, 0
      %p90 = por %p88, %p89
      %s92 = sadd.s32 %s91, 1
      %p95 = scmp.eq.s32.totalorder %s24, 1
      %p96 = scmp.ne.s32.totalorder %s91, %s93
      %p97 = scmp.eq.s32.totalorder %s24, 0
      %p98 = por %p96, %p97
      %p99 = scmp.ne.s32.totalorder %s91, %s93
      %p100 = scmp.eq.s32.totalorder %s29, 1
      %p101 = por %p99, %p100
      %p102 = scmp.ne.s32.totalorder %s93, %s94
      %p103 = scmp.eq.s32.totalorder %s29, 0
      %p104 = por %p102, %p103
      %p105 = scmp.ne.s32.totalorder %s93, %s94
      %p106 = scmp.eq.s32.totalorder %s30, 1
      %p107 = por %p105, %p106
      %p109 = scmp.ne.s32.totalorder %s94, %s108
      %p110 = scmp.eq.s32.totalorder %s30, 0
      %p111 = por %p109, %p110
      %s113 = sadd.s32 %s112, 1
      %p116 = scmp.eq.s32.totalorder %s24, 1
      %p117 = scmp.ne.s32.totalorder %s112, %s114
      %p118 = scmp.eq.s32.totalorder %s24, 0
      %p119 = por %p117, %p118
      %p120 = scmp.ne.s32.totalorder %s112, %s114
      %p121 = scmp.eq.s32.totalorder %s29, 1
      %p122 = por %p120, %p121
      %p123 = scmp.ne.s32.totalorder %s114, %s115
      %p124 = scmp.eq.s32.totalorder %s29, 0
      %p125 = por %p123, %p124
      %p126 = scmp.ne.s32.totalorder %s114, %s115
      %p127 = scmp.eq.s32.totalorder %s30, 1
      %p128 = por %p126, %p127
      %p130 = scmp.ne.s32.totalorder %s115, %s129
      %p131 = scmp.eq.s32.totalorder %s30, 0
      %p132 = por %p130, %p131
      %s134 = sadd.s32 %s133, 1
      %p137 = scmp.eq.s32.totalorder %s24, 1
      %p138 = scmp.ne.s32.totalorder %s133, %s135
      %p139 = scmp.eq.s32.totalorder %s24, 0
      %p140 = por %p138, %p139
      %p141 = scmp.ne.s32.totalorder %s133, %s135
      %p142 = scmp.eq.s32.totalorder %s29, 1
      %p143 = por %p141, %p142
      %p144 = scmp.ne.s32.totalorder %s135, %s136
      %p145 = scmp.eq.s32.totalorder %s29, 0
      %p146 = por %p144, %p145
      %p147 = scmp.ne.s32.totalorder %s135, %s136
      %p148 = scmp.eq.s32.totalorder %s30, 1
      %p149 = por %p147, %p148
      %p151 = scmp.ne.s32.totalorder %s136, %s150
      %p152 = scmp.eq.s32.totalorder %s30, 0
      %p153 = por %p151, %p152
      %s154 = ssub.s32 %s31, %s43
      %s155 = ssub.s32 %s32, %s39
      %s156 = sor.u32 %s154, %s155
      %p157 = scmp.eq.s32.totalorder %s156, 0
      %s159 = sadd.s32 %s158, 1
      %s160 = scalar_select %p157, %s158, %s159
      %p163 = pneg %p157
      %p164 = scmp.eq.s32.totalorder %s24, 1
      %p165 = por %p163, %p164
      %p166 = scmp.ne.s32.totalorder %s158, %s161
      %p167 = scmp.eq.s32.totalorder %s24, 0
      %p168 = por %p166, %p167
      %p169 = scmp.ne.s32.totalorder %s158, %s161
      %p170 = scmp.eq.s32.totalorder %s29, 1
      %p171 = por %p169, %p170
      %p172 = scmp.ne.s32.totalorder %s161, %s162
      %p173 = scmp.eq.s32.totalorder %s29, 0
      %p174 = por %p172, %p173
      %p175 = scmp.ne.s32.totalorder %s161, %s162
      %p176 = scmp.eq.s32.totalorder %s30, 1
      %p177 = por %p175, %p176
      %p179 = scmp.ne.s32.totalorder %s162, %s178
      %p180 = scmp.eq.s32.totalorder %s30, 0
      %p181 = por %p179, %p180
      %s182 = ssub.s32 %s31, %s43
      %s183 = ssub.s32 %s32, %s39
      %s184 = sor.u32 %s182, %s183
      %p185 = scmp.eq.s32.totalorder %s184, 0
      %s187 = sadd.s32 %s186, 1
      %s188 = scalar_select %p185, %s186, %s187
      %p191 = pneg %p185
      %p192 = scmp.eq.s32.totalorder %s24, 1
      %p193 = por %p191, %p192
      %p194 = scmp.ne.s32.totalorder %s186, %s189
      %p195 = scmp.eq.s32.totalorder %s24, 0
      %p196 = por %p194, %p195
      %p197 = scmp.ne.s32.totalorder %s186, %s189
      %p198 = scmp.eq.s32.totalorder %s29, 1
      %p199 = por %p197, %p198
      %p200 = scmp.ne.s32.totalorder %s189, %s190
      %p201 = scmp.eq.s32.totalorder %s29, 0
      %p202 = por %p200, %p201
      %p203 = scmp.ne.s32.totalorder %s189, %s190
      %p204 = scmp.eq.s32.totalorder %s30, 1
      %p205 = por %p203, %p204
      %p207 = scmp.ne.s32.totalorder %s190, %s206
      %p208 = scmp.eq.s32.totalorder %s30, 0
      %p209 = por %p207, %p208
      %p210 = scmp.le.s32.totalorder 1, %s24
      %p211 = scmp.lt.s32.totalorder %s24, 3
      %p212 = pnand %p210, %p211
      %p213 = pneg %p212
      // Predicated region
      $region9: #{tpu_custom_call.1} parent=5 // pred_check
        _
      $region10: #{tpu_custom_call.1} parent=5 // pred_check_branch
        %215 = sbr.rel (%p212) target = $region12
      $region11: #{tpu_custom_call.1} parent=5 // pred_region
        %s216 = ssub.s32 %s24, 1
        // Predicated region
        $region13: #{tpu_custom_call.1} parent=11 // pred_check
          %p217 = pneg %p83
        $region14: #{tpu_custom_call.1} parent=11 // pred_check_branch
          %219 = sbr.rel (%p217) target = $region16
        $region15: #{tpu_custom_call.1} parent=11 // pred_region
          %221 = vsyncadd [#allocation9], 0
          %s222 = sshll.u32 %s1, 4
          %s223 = int_to_ptr.hbm [resolvable:$true] %s222
          %s224 = sshll.u32 [#allocation8], 4
          %s225 = int_to_ptr.vmem [resolvable:$true] %s224
          %230 = dma.hbm_to_vmem [thread:$0]  %s223, 512, %s225, [#allocation9], 128, 128, 8
        $region16: #{tpu_custom_call.1} parent=11 // pred_fallthru
          _
        // Predicated region
        $region17: #{tpu_custom_call.1} parent=11 // pred_check
          %p231 = pneg %p104
        $region18: #{tpu_custom_call.1} parent=11 // pred_check_branch
          %233 = sbr.rel (%p231) target = $region20
        $region19: #{tpu_custom_call.1} parent=11 // pred_region
          %235 = vsyncadd [#allocation9], 0
          %s236 = sshll.u32 %s2, 4
          %s237 = int_to_ptr.hbm [resolvable:$true] %s236
          %s238 = sshll.u32 [#allocation10], 4
          %s239 = int_to_ptr.vmem [resolvable:$true] %s238
          %244 = dma.hbm_to_vmem [thread:$0]  %s237, 512, %s239, [#allocation9], 128, 128, 8
        $region20: #{tpu_custom_call.1} parent=11 // pred_fallthru
          _
        // Predicated region
        $region21: #{tpu_custom_call.1} parent=11 // pred_check
          %p245 = pneg %p125
        $region22: #{tpu_custom_call.1} parent=11 // pred_check_branch
          %247 = sbr.rel (%p245) target = $region24
        $region23: #{tpu_custom_call.1} parent=11 // pred_region
          %249 = vsyncadd [#allocation12], 0
          %s250 = sshll.u32 %s3, 4
          %s251 = int_to_ptr.hbm [resolvable:$true] %s250
          %s252 = sshll.u32 [#allocation11], 4
          %s253 = int_to_ptr.vmem [resolvable:$true] %s252
          %258 = dma.hbm_to_vmem [thread:$0]  %s251, 512, %s253, [#allocation12], 128, 128, 8
        $region24: #{tpu_custom_call.1} parent=11 // pred_fallthru
          _
        // Predicated region
        $region25: #{tpu_custom_call.1} parent=11 // pred_check
          %p259 = pneg %p146
        $region26: #{tpu_custom_call.1} parent=11 // pred_check_branch
          %261 = sbr.rel (%p259) target = $region28
        $region27: #{tpu_custom_call.1} parent=11 // pred_region
          _
        $region28: #{tpu_custom_call.1} parent=11 // pred_fallthru
          _
      $region12: #{tpu_custom_call.1} parent=5 // pred_fallthru
        _
      %p262 = scmp.lt.s32.totalorder %s24, 2
      // Predicated region
      $region29: #{tpu_custom_call.1} parent=5 // pred_check
        %p263 = pneg %p262
      $region30: #{tpu_custom_call.1} parent=5 // pred_check_branch
        %265 = sbr.rel (%p263) target = $region32
      $region31: #{tpu_custom_call.1} parent=5 // pred_region
        // Predicated region
        $region33: #{tpu_custom_call.1} parent=31 // pred_check
          %p266 = pneg %p56
        $region34: #{tpu_custom_call.1} parent=31 // pred_check_branch
          %268 = sbr.rel (%p266) target = $region36
        $region35: #{tpu_custom_call.1} parent=31 // pred_region
          %s269 = sand.u32 %s46, 1
          %s270 = scalar_lea.sflag [#allocation6], %s269
          %s271 = sand.u32 %s46, 1
          %s272 = smul.addr %s271, 8
          %s273 = scalar_lea.vmem [#allocation5], %s272
          %275 = vsyncadd %s270, 0
          %s276 = smul.addr %s31, 8
          %s277 = scalar_lea.hbm %s0, %s276
          %s279 = sshll.u32 %s277, 4
          %s280 = int_to_ptr.hbm [resolvable:$true] %s279
          %s281 = sshll.u32 %s273, 4
          %s282 = int_to_ptr.vmem [resolvable:$true] %s281
          %284 = dma.hbm_to_vmem [thread:$0]  %s280, 128, %s282, %s270
        $region36: #{tpu_custom_call.1} parent=31 // pred_fallthru
          _
      $region32: #{tpu_custom_call.1} parent=5 // pred_fallthru
        _
      %p285 = scmp.le.s32.totalorder 1, %s24
      %p286 = scmp.lt.s32.totalorder %s24, 3
      %p287 = pnand %p285, %p286
      %p288 = pneg %p287
      // Predicated region
      $region37: #{tpu_custom_call.1} parent=5 // pred_check
        _
      $region38: #{tpu_custom_call.1} parent=5 // pred_check_branch
        %290 = sbr.rel (%p287) target = $region40
      $region39: #{tpu_custom_call.1} parent=5 // pred_region
        %s291 = ssub.s32 %s24, 1
        %s292 = sand.u32 %s49, 1
        %s293 = scalar_lea.sflag [#allocation6], %s292
        %s294 = sand.u32 %s49, 1
        %s295 = smul.addr %s294, 8
        %s296 = scalar_lea.vmem [#allocation5], %s295
        // Predicated region
        $region41: #{tpu_custom_call.1} parent=39 // pred_check
          %p297 = pneg %p62
        $region42: #{tpu_custom_call.1} parent=39 // pred_check_branch
          %299 = sbr.rel (%p297) target = $region44
        $region43: #{tpu_custom_call.1} parent=39 // pred_region
          %301 = dma.done %s293, 128
        $region44: #{tpu_custom_call.1} parent=39 // pred_fallthru
          _
        // Predicated region
        $region45: #{tpu_custom_call.1} parent=39 // pred_check
          %p302 = pneg %p83
        $region46: #{tpu_custom_call.1} parent=39 // pred_check_branch
          %304 = sbr.rel (%p302) target = $region48
        $region47: #{tpu_custom_call.1} parent=39 // pred_region
          %306 = dma.done [#allocation9], 512
        $region48: #{tpu_custom_call.1} parent=39 // pred_fallthru
          _
        // Predicated region
        $region49: #{tpu_custom_call.1} parent=39 // pred_check
          %p307 = pneg %p104
        $region50: #{tpu_custom_call.1} parent=39 // pred_check_branch
          %309 = sbr.rel (%p307) target = $region52
        $region51: #{tpu_custom_call.1} parent=39 // pred_region
          %311 = dma.done [#allocation9], 512
        $region52: #{tpu_custom_call.1} parent=39 // pred_fallthru
          _
        // Predicated region
        $region53: #{tpu_custom_call.1} parent=39 // pred_check
          %p312 = pneg %p125
        $region54: #{tpu_custom_call.1} parent=39 // pred_check_branch
          %314 = sbr.rel (%p312) target = $region56
        $region55: #{tpu_custom_call.1} parent=39 // pred_region
          %316 = dma.done [#allocation12], 512
        $region56: #{tpu_custom_call.1} parent=39 // pred_fallthru
          _
        %s317 = sand.u32 %s49, 1
        %s318 = scalar_lea.sflag [#allocation6], %s317
        %s319 = sand.u32 %s49, 1
        %s320 = smul.addr %s319, 8
        %s321 = scalar_lea.vmem [#allocation5], %s320
        %p322 = pneg %p62
        %p323 = pneg %p59
        %p324 = pneg %p83
        %p325 = pneg %p80
        %p326 = pneg %p104
        %p327 = pneg %p101
        %p328 = pneg %p125
        %p329 = pneg %p122
        %p330 = pneg %p146
        %p331 = pneg %p143
        %p332 = pneg %p174
        %p333 = pneg %p171
        %s334 = sand.u32 %s161, 1
        %s335 = scalar_lea.sflag [#allocation7], %s334
        %s336 = sand.u32 %s161, 1
        %s337 = smul.addr %s336, 8
        %s338 = scalar_lea.vmem [#allocation13], %s337
        %p339 = pneg %p202
        %p340 = pneg %p199
        %s341 = sand.u32 %s189, 1
        %s342 = scalar_lea.sflag [#allocation15], %s341
        %s343 = sand.u32 %s189, 1
        %s344 = smul.addr %s343, 8
        %s345 = scalar_lea.vmem [#allocation14], %s344
        %p346 = scmp.eq.s32.totalorder %s34, 0
        // Predicated region
        $region57: #{tpu_custom_call.1} parent=39 // pred_check
          %p347 = pneg %p346
        $region58: #{tpu_custom_call.1} parent=39 // pred_check_branch
          %349 = sbr.rel (%p347) target = $region60
        $region59: #{tpu_custom_call.1} parent=39 // pred_region
          %v350 = vld [vmem:[%s296] sm:$0xff]
          %v351 = vld [vmem:[#allocation10] sm:$0xff]
          %v352 = vld [vmem:[#allocation10 + $0x8] sm:$0xff]
          %v353 = vld [vmem:[#allocation10 + $0x10] sm:$0xff]
          %v354 = vld [vmem:[#allocation10 + $0x18] sm:$0xff]
          %vm355 = vcmask 261120
          %v357 = vsel %vm355, %v350, 0
          %359 = vmatpush.msra.mxu0 0.0
          %360 = vmatpush.msra.mxu0 0.0
          %361 = vmatpush.msra.mxu0 0.0
          %362 = vmatpush.msra.mxu0 0.0
          %363 = vmatpush.msra.mxu0 0.0
          %364 = vmatpush.msra.mxu0 0.0
          %365 = vmatpush.msra.mxu0 0.0
          %366 = vmatpush.msra.mxu0 0.0
          %367 = vmatpush.msra.mxu0 0.0
          %368 = vmatpush.msra.mxu0 0.0
          %369 = vmatpush.msra.mxu0 0.0
          %370 = vmatpush.msra.mxu0 0.0
          %371 = vmatpush.msra.mxu0 %v354
          %372 = vmatpush.msra.mxu0 %v353
          %373 = vmatpush.msra.mxu0 %v352
          %374 = vmatpush.msra.mxu0 %v351
          %375 = vmatmul.f32.gmra.mxu0 %v357
          %v376 = vpop.f32.mrf.mxu0
          %v377 = vadd.f32 0.0, %v376
          %378 = vdwg.mxu0
          %vm379 = vcmask 523264
          %380 = vst.msk [vmem:[#allocation2] sm:$0xff] %vm379, %v377
        $region60: #{tpu_custom_call.1} parent=39 // pred_fallthru
          _
        %s381 = smul.u32 %s34, 8
        %s382 = scalar_lea.vmem %s296, %s381 [#allocation5]
        %v383 = vld [vmem:[%s382] sm:$0xff]
        %v384 = vld [vmem:[#allocation8] sm:$0xff]
        %v385 = vld [vmem:[#allocation8 + $0x8] sm:$0xff]
        %v386 = vld [vmem:[#allocation8 + $0x10] sm:$0xff]
        %v387 = vld [vmem:[#allocation8 + $0x18] sm:$0xff]
        %vm388 = vcmask 261120
        %v390 = vsel %vm388, %v383, 0
        %392 = vmatpush.msra.mxu0 0.0
        %393 = vmatpush.msra.mxu0 0.0
        %394 = vmatpush.msra.mxu0 0.0
        %395 = vmatpush.msra.mxu0 0.0
        %396 = vmatpush.msra.mxu0 0.0
        %397 = vmatpush.msra.mxu0 0.0
        %398 = vmatpush.msra.mxu0 0.0
        %399 = vmatpush.msra.mxu0 0.0
        %400 = vmatpush.msra.mxu0 0.0
        %401 = vmatpush.msra.mxu0 0.0
        %402 = vmatpush.msra.mxu0 0.0
        %403 = vmatpush.msra.mxu0 0.0
        %404 = vmatpush.msra.mxu0 %v387
        %405 = vmatpush.msra.mxu0 %v386
        %406 = vmatpush.msra.mxu0 %v385
        %407 = vmatpush.msra.mxu0 %v384
        %408 = vmatmul.f32.gmra.mxu0 %v390
        %v409 = vpop.f32.mrf.mxu0
        %v410 = vadd.f32 0.0, %v409
        %411 = vdwg.mxu0
        %vm412 = vcmask 64512
        %413 = vst.msk [vmem:[#allocation3] sm:$0xff] %vm412, 0.0
        %v414 = vld [vmem:[#allocation2] sm:$0xff]
        %vm415 = vcmask 31744
        %v417 = vsel %vm415, %v410, 0
        %v420 = vsel %vm415, %v414, 0
        %422 = vmatpush.xpose.msra.mxu0 0.0
        %423 = vmatpush.xpose.msra.mxu0 0.0
        %424 = vmatpush.xpose.msra.mxu0 0.0
        %425 = vmatpush.xpose.msra.mxu0 0.0
        %426 = vmatpush.xpose.msra.mxu0 0.0
        %427 = vmatpush.xpose.msra.mxu0 0.0
        %428 = vmatpush.xpose.msra.mxu0 0.0
        %429 = vmatpush.xpose.msra.mxu0 0.0
        %430 = vmatpush.xpose.msra.mxu0 0.0
        %431 = vmatpush.xpose.msra.mxu0 0.0
        %432 = vmatpush.xpose.msra.mxu0 0.0
        %433 = vmatpush.xpose.msra.mxu0 0.0
        %434 = vmatpush.xpose.msra.mxu0 0.0
        %435 = vmatpush.xpose.msra.mxu0 0.0
        %436 = vmatpush.xpose.msra.mxu0 0.0
        %437 = vmatpush.xpose.msra.mxu0 %v420
        %438 = vmatmul.f32.gmra.mxu0 %v417
        %v439 = vpop.f32.mrf.mxu0
        %v440 = vadd.f32 0.0, %v439
        %441 = vdwg.mxu0
        %v442 = vsel %vm412, %v440, -inf
        %443 = vmax.xlane.f32.xlu0 %v442
        %v444 = vpop.xlane.xlu0 %443
        %v445 = vsub.f32 %v440, %v444
        %v446 = vmul.f32 %v445, 1.442695
        %v447 = vpow.pop %v446
        %v448 = vsel %vm412, %v447, 0.0
        %449 = vadd.xlane.f32.xlu0 %v448
        %v450 = vpop.xlane.xlu0 %449
        %v451 = vrcp.pop %v450
        %v452 = vmul.f32 %v450, %v451
        %v453 = vsub.f32 2.0, %v452
        %v454 = vmul.f32 %v451, %v453
        %v455 = vmul.f32 %v447, %v454
        %v456 = vld [vmem:[#allocation3] sm:$0xff]
        %v457 = vadd.f32 %v456, %v455
        %458 = vst.msk [vmem:[#allocation3] sm:$0xff] %vm412, %v457
        %459 = vrot.lane.b32.xlu0 %v414, 96
        %v460 = vpop.permute.xlu0 %459
        %v463 = vsel %vm412, %v455, 0
        %465 = vmatpush.msra.mxu0 0.0
        %466 = vmatpush.msra.mxu0 0.0
        %467 = vmatpush.msra.mxu0 0.0
        %468 = vmatpush.msra.mxu0 0.0
        %469 = vmatpush.msra.mxu0 0.0
        %470 = vmatpush.msra.mxu0 0.0
        %471 = vmatpush.msra.mxu0 0.0
        %472 = vmatpush.msra.mxu0 0.0
        %473 = vmatpush.msra.mxu0 0.0
        %474 = vmatpush.msra.mxu0 0.0
        %475 = vmatpush.msra.mxu0 0.0
        %476 = vmatpush.msra.mxu0 0.0
        %477 = vmatpush.msra.mxu0 0.0
        %478 = vmatpush.msra.mxu0 0.0
        %479 = vmatpush.msra.mxu0 0.0
        %480 = vmatpush.msra.mxu0 %v460
        %481 = vmatmul.f32.gmra.mxu0 %v463
        %v482 = vpop.f32.mrf.mxu0
        %v483 = vadd.f32 0.0, %v482
        %484 = vdwg.mxu0
        %485 = vst.msk [vmem:[#allocation4] sm:$0xff] %vm415, %v483
        %v486 = vld [vmem:[#allocation2] sm:$0xff]
        %487 = vrot.lane.b32.xlu0 %v410, 124
        %v488 = vpop.permute.xlu0 %487
        %490 = vrot.lane.b32.xlu0 %v486, 124
        %v491 = vpop.permute.xlu0 %490
        %v492 = vsel %vm415, %v488, 0
        %v494 = vsel %vm415, %v491, 0
        %496 = vmatpush.xpose.msra.mxu0 0.0
        %497 = vmatpush.xpose.msra.mxu0 0.0
        %498 = vmatpush.xpose.msra.mxu0 0.0
        %499 = vmatpush.xpose.msra.mxu0 0.0
        %500 = vmatpush.xpose.msra.mxu0 0.0
        %501 = vmatpush.xpose.msra.mxu0 0.0
        %502 = vmatpush.xpose.msra.mxu0 0.0
        %503 = vmatpush.xpose.msra.mxu0 0.0
        %504 = vmatpush.xpose.msra.mxu0 0.0
        %505 = vmatpush.xpose.msra.mxu0 0.0
        %506 = vmatpush.xpose.msra.mxu0 0.0
        %507 = vmatpush.xpose.msra.mxu0 0.0
        %508 = vmatpush.xpose.msra.mxu0 0.0
        %509 = vmatpush.xpose.msra.mxu0 0.0
        %510 = vmatpush.xpose.msra.mxu0 0.0
        %511 = vmatpush.xpose.msra.mxu0 %v494
        %512 = vmatmul.f32.gmra.mxu0 %v492
        %v513 = vpop.f32.mrf.mxu0
        %v514 = vadd.f32 0.0, %v513
        %515 = vdwg.mxu0
        %v516 = vsel %vm412, %v514, -inf
        %517 = vmax.xlane.f32.xlu0 %v516
        %v518 = vpop.xlane.xlu0 %517
        %v519 = vsub.f32 %v514, %v518
        %v520 = vmul.f32 %v519, 1.442695
        %v521 = vpow.pop %v520
        %v522 = vsel %vm412, %v521, 0.0
        %523 = vadd.xlane.f32.xlu0 %v522
        %v524 = vpop.xlane.xlu0 %523
        %v525 = vrcp.pop %v524
        %v526 = vmul.f32 %v524, %v525
        %v527 = vsub.f32 2.0, %v526
        %v528 = vmul.f32 %v525, %v527
        %v529 = vmul.f32 %v521, %v528
        %v530 = vld [vmem:[#allocation3] sm:$0xff]
        %v531 = vadd.f32 %v530, %v529
        %532 = vst.msk [vmem:[#allocation3] sm:$0xff] %vm412, %v531
        %533 = vrot.lane.b32.xlu0 %v486, 92
        %v534 = vpop.permute.xlu0 %533
        %v537 = vsel %vm412, %v529, 0
        %539 = vmatpush.msra.mxu0 0.0
        %540 = vmatpush.msra.mxu0 0.0
        %541 = vmatpush.msra.mxu0 0.0
        %542 = vmatpush.msra.mxu0 0.0
        %543 = vmatpush.msra.mxu0 0.0
        %544 = vmatpush.msra.mxu0 0.0
        %545 = vmatpush.msra.mxu0 0.0
        %546 = vmatpush.msra.mxu0 0.0
        %547 = vmatpush.msra.mxu0 0.0
        %548 = vmatpush.msra.mxu0 0.0
        %549 = vmatpush.msra.mxu0 0.0
        %550 = vmatpush.msra.mxu0 0.0
        %551 = vmatpush.msra.mxu0 0.0
        %552 = vmatpush.msra.mxu0 0.0
        %553 = vmatpush.msra.mxu0 0.0
        %554 = vmatpush.msra.mxu0 %v534
        %555 = vmatmul.f32.gmra.mxu0 %v537
        %v556 = vpop.f32.mrf.mxu0
        %v557 = vadd.f32 0.0, %v556
        %558 = vdwg.mxu0
        %560 = vrot.lane.b32.xlu0 %v557, 4
        %v561 = vpop.permute.xlu0 %560
        %vm563 = vcmask 64544
        %564 = vst.msk [vmem:[#allocation4] sm:$0xff] %vm563, %v561
        %v565 = vld [vmem:[#allocation2] sm:$0xff]
        %566 = vrot.lane.b32.xlu0 %v410, 120
        %v567 = vpop.permute.xlu0 %566
        %569 = vrot.lane.b32.xlu0 %v565, 120
        %v570 = vpop.permute.xlu0 %569
        %v571 = vsel %vm415, %v567, 0
        %v573 = vsel %vm415, %v570, 0
        %575 = vmatpush.xpose.msra.mxu0 0.0
        %576 = vmatpush.xpose.msra.mxu0 0.0
        %577 = vmatpush.xpose.msra.mxu0 0.0
        %578 = vmatpush.xpose.msra.mxu0 0.0
        %579 = vmatpush.xpose.msra.mxu0 0.0
        %580 = vmatpush.xpose.msra.mxu0 0.0
        %581 = vmatpush.xpose.msra.mxu0 0.0
        %582 = vmatpush.xpose.msra.mxu0 0.0
        %583 = vmatpush.xpose.msra.mxu0 0.0
        %584 = vmatpush.xpose.msra.mxu0 0.0
        %585 = vmatpush.xpose.msra.mxu0 0.0
        %586 = vmatpush.xpose.msra.mxu0 0.0
        %587 = vmatpush.xpose.msra.mxu0 0.0
        %588 = vmatpush.xpose.msra.mxu0 0.0
        %589 = vmatpush.xpose.msra.mxu0 0.0
        %590 = vmatpush.xpose.msra.mxu0 %v573
        %591 = vmatmul.f32.gmra.mxu0 %v571
        %v592 = vpop.f32.mrf.mxu0
        %v593 = vadd.f32 0.0, %v592
        %594 = vdwg.mxu0
        %v595 = vsel %vm412, %v593, -inf
        %596 = vmax.xlane.f32.xlu0 %v595
        %v597 = vpop.xlane.xlu0 %596
        %v598 = vsub.f32 %v593, %v597
        %v599 = vmul.f32 %v598, 1.442695
        %v600 = vpow.pop %v599
        %v601 = vsel %vm412, %v600, 0.0
        %602 = vadd.xlane.f32.xlu0 %v601
        %v603 = vpop.xlane.xlu0 %602
        %v604 = vrcp.pop %v603
        %v605 = vmul.f32 %v603, %v604
        %v606 = vsub.f32 2.0, %v605
        %v607 = vmul.f32 %v604, %v606
        %v608 = vmul.f32 %v600, %v607
        %v609 = vld [vmem:[#allocation3] sm:$0xff]
        %v610 = vadd.f32 %v609, %v608
        %611 = vst.msk [vmem:[#allocation3] sm:$0xff] %vm412, %v610
        %612 = vrot.lane.b32.xlu0 %v565, 88
        %v613 = vpop.permute.xlu0 %612
        %v616 = vsel %vm412, %v608, 0
        %618 = vmatpush.msra.mxu0 0.0
        %619 = vmatpush.msra.mxu0 0.0
        %620 = vmatpush.msra.mxu0 0.0
        %621 = vmatpush.msra.mxu0 0.0
        %622 = vmatpush.msra.mxu0 0.0
        %623 = vmatpush.msra.mxu0 0.0
        %624 = vmatpush.msra.mxu0 0.0
        %625 = vmatpush.msra.mxu0 0.0
        %626 = vmatpush.msra.mxu0 0.0
        %627 = vmatpush.msra.mxu0 0.0
        %628 = vmatpush.msra.mxu0 0.0
        %629 = vmatpush.msra.mxu0 0.0
        %630 = vmatpush.msra.mxu0 0.0
        %631 = vmatpush.msra.mxu0 0.0
        %632 = vmatpush.msra.mxu0 0.0
        %633 = vmatpush.msra.mxu0 %v613
        %634 = vmatmul.f32.gmra.mxu0 %v616
        %v635 = vpop.f32.mrf.mxu0
        %v636 = vadd.f32 0.0, %v635
        %637 = vdwg.mxu0
        %639 = vrot.lane.b32.xlu0 %v636, 8
        %v640 = vpop.permute.xlu0 %639
        %vm642 = vcmask 97344
        %643 = vst.msk [vmem:[#allocation4] sm:$0xff] %vm642, %v640
        %v644 = vld [vmem:[#allocation2] sm:$0xff]
        %645 = vrot.lane.b32.xlu0 %v410, 116
        %v646 = vpop.permute.xlu0 %645
        %648 = vrot.lane.b32.xlu0 %v644, 116
        %v649 = vpop.permute.xlu0 %648
        %v650 = vsel %vm415, %v646, 0
        %v652 = vsel %vm415, %v649, 0
        %654 = vmatpush.xpose.msra.mxu0 0.0
        %655 = vmatpush.xpose.msra.mxu0 0.0
        %656 = vmatpush.xpose.msra.mxu0 0.0
        %657 = vmatpush.xpose.msra.mxu0 0.0
        %658 = vmatpush.xpose.msra.mxu0 0.0
        %659 = vmatpush.xpose.msra.mxu0 0.0
        %660 = vmatpush.xpose.msra.mxu0 0.0
        %661 = vmatpush.xpose.msra.mxu0 0.0
        %662 = vmatpush.xpose.msra.mxu0 0.0
        %663 = vmatpush.xpose.msra.mxu0 0.0
        %664 = vmatpush.xpose.msra.mxu0 0.0
        %665 = vmatpush.xpose.msra.mxu0 0.0
        %666 = vmatpush.xpose.msra.mxu0 0.0
        %667 = vmatpush.xpose.msra.mxu0 0.0
        %668 = vmatpush.xpose.msra.mxu0 0.0
        %669 = vmatpush.xpose.msra.mxu0 %v652
        %670 = vmatmul.f32.gmra.mxu0 %v650
        %v671 = vpop.f32.mrf.mxu0
        %v672 = vadd.f32 0.0, %v671
        %673 = vdwg.mxu0
        %v674 = vsel %vm412, %v672, -inf
        %675 = vmax.xlane.f32.xlu0 %v674
        %v676 = vpop.xlane.xlu0 %675
        %v677 = vsub.f32 %v672, %v676
        %v678 = vmul.f32 %v677, 1.442695
        %v679 = vpow.pop %v678
        %v680 = vsel %vm412, %v679, 0.0
        %681 = vadd.xlane.f32.xlu0 %v680
        %v682 = vpop.xlane.xlu0 %681
        %v683 = vrcp.pop %v682
        %v684 = vmul.f32 %v682, %v683
        %v685 = vsub.f32 2.0, %v684
        %v686 = vmul.f32 %v683, %v685
        %v687 = vmul.f32 %v679, %v686
        %v688 = vld [vmem:[#allocation3] sm:$0xff]
        %v689 = vadd.f32 %v688, %v687
        %690 = vst.msk [vmem:[#allocation3] sm:$0xff] %vm412, %v689
        %691 = vrot.lane.b32.xlu0 %v644, 84
        %v692 = vpop.permute.xlu0 %691
        %v695 = vsel %vm412, %v687, 0
        %697 = vmatpush.msra.mxu0 0.0
        %698 = vmatpush.msra.mxu0 0.0
        %699 = vmatpush.msra.mxu0 0.0
        %700 = vmatpush.msra.mxu0 0.0
        %701 = vmatpush.msra.mxu0 0.0
        %702 = vmatpush.msra.mxu0 0.0
        %703 = vmatpush.msra.mxu0 0.0
        %704 = vmatpush.msra.mxu0 0.0
        %705 = vmatpush.msra.mxu0 0.0
        %706 = vmatpush.msra.mxu0 0.0
        %707 = vmatpush.msra.mxu0 0.0
        %708 = vmatpush.msra.mxu0 0.0
        %709 = vmatpush.msra.mxu0 0.0
        %710 = vmatpush.msra.mxu0 0.0
        %711 = vmatpush.msra.mxu0 0.0
        %712 = vmatpush.msra.mxu0 %v692
        %713 = vmatmul.f32.gmra.mxu0 %v695
        %v714 = vpop.f32.mrf.mxu0
        %v715 = vadd.f32 0.0, %v714
        %716 = vdwg.mxu0
        %718 = vrot.lane.b32.xlu0 %v715, 12
        %v719 = vpop.permute.xlu0 %718
        %vm721 = vcmask 130144
        %722 = vst.msk [vmem:[#allocation4] sm:$0xff] %vm721, %v719
        %v723 = vld [vmem:[#allocation2] sm:$0xff]
        %724 = vrot.lane.b32.xlu0 %v410, 112
        %v725 = vpop.permute.xlu0 %724
        %727 = vrot.lane.b32.xlu0 %v723, 112
        %v728 = vpop.permute.xlu0 %727
        %v729 = vsel %vm415, %v725, 0
        %v731 = vsel %vm415, %v728, 0
        %733 = vmatpush.xpose.msra.mxu0 0.0
        %734 = vmatpush.xpose.msra.mxu0 0.0
        %735 = vmatpush.xpose.msra.mxu0 0.0
        %736 = vmatpush.xpose.msra.mxu0 0.0
        %737 = vmatpush.xpose.msra.mxu0 0.0
        %738 = vmatpush.xpose.msra.mxu0 0.0
        %739 = vmatpush.xpose.msra.mxu0 0.0
        %740 = vmatpush.xpose.msra.mxu0 0.0
        %741 = vmatpush.xpose.msra.mxu0 0.0
        %742 = vmatpush.xpose.msra.mxu0 0.0
        %743 = vmatpush.xpose.msra.mxu0 0.0
        %744 = vmatpush.xpose.msra.mxu0 0.0
        %745 = vmatpush.xpose.msra.mxu0 0.0
        %746 = vmatpush.xpose.msra.mxu0 0.0
        %747 = vmatpush.xpose.msra.mxu0 0.0
        %748 = vmatpush.xpose.msra.mxu0 %v731
        %749 = vmatmul.f32.gmra.mxu0 %v729
        %v750 = vpop.f32.mrf.mxu0
        %v751 = vadd.f32 0.0, %v750
        %752 = vdwg.mxu0
        %v753 = vsel %vm412, %v751, -inf
        %754 = vmax.xlane.f32.xlu0 %v753
        %v755 = vpop.xlane.xlu0 %754
        %v756 = vsub.f32 %v751, %v755
        %v757 = vmul.f32 %v756, 1.442695
        %v758 = vpow.pop %v757
        %v759 = vsel %vm412, %v758, 0.0
        %760 = vadd.xlane.f32.xlu0 %v759
        %v761 = vpop.xlane.xlu0 %760
        %v762 = vrcp.pop %v761
        %v763 = vmul.f32 %v761, %v762
        %v764 = vsub.f32 2.0, %v763
        %v765 = vmul.f32 %v762, %v764
        %v766 = vmul.f32 %v758, %v765
        %v767 = vld [vmem:[#allocation3] sm:$0xff]
        %v768 = vadd.f32 %v767, %v766
        %769 = vst.msk [vmem:[#allocation3] sm:$0xff] %vm412, %v768
        %770 = vrot.lane.b32.xlu0 %v723, 80
        %v771 = vpop.permute.xlu0 %770
        %v774 = vsel %vm412, %v766, 0
        %776 = vmatpush.msra.mxu0 0.0
        %777 = vmatpush.msra.mxu0 0.0
        %778 = vmatpush.msra.mxu0 0.0
        %779 = vmatpush.msra.mxu0 0.0
        %780 = vmatpush.msra.mxu0 0.0
        %781 = vmatpush.msra.mxu0 0.0
        %782 = vmatpush.msra.mxu0 0.0
        %783 = vmatpush.msra.mxu0 0.0
        %784 = vmatpush.msra.mxu0 0.0
        %785 = vmatpush.msra.mxu0 0.0
        %786 = vmatpush.msra.mxu0 0.0
        %787 = vmatpush.msra.mxu0 0.0
        %788 = vmatpush.msra.mxu0 0.0
        %789 = vmatpush.msra.mxu0 0.0
        %790 = vmatpush.msra.mxu0 0.0
        %791 = vmatpush.msra.mxu0 %v771
        %792 = vmatmul.f32.gmra.mxu0 %v774
        %v793 = vpop.f32.mrf.mxu0
        %v794 = vadd.f32 0.0, %v793
        %795 = vdwg.mxu0
        %797 = vrot.lane.b32.xlu0 %v794, 16
        %v798 = vpop.permute.xlu0 %797
        %vm800 = vcmask 162944
        %801 = vst.msk [vmem:[#allocation4] sm:$0xff] %vm800, %v798
        %v802 = vld [vmem:[#allocation2] sm:$0xff]
        %803 = vrot.lane.b32.xlu0 %v410, 108
        %v804 = vpop.permute.xlu0 %803
        %806 = vrot.lane.b32.xlu0 %v802, 108
        %v807 = vpop.permute.xlu0 %806
        %v808 = vsel %vm415, %v804, 0
        %v810 = vsel %vm415, %v807, 0
        %812 = vmatpush.xpose.msra.mxu0 0.0
        %813 = vmatpush.xpose.msra.mxu0 0.0
        %814 = vmatpush.xpose.msra.mxu0 0.0
        %815 = vmatpush.xpose.msra.mxu0 0.0
        %816 = vmatpush.xpose.msra.mxu0 0.0
        %817 = vmatpush.xpose.msra.mxu0 0.0
        %818 = vmatpush.xpose.msra.mxu0 0.0
        %819 = vmatpush.xpose.msra.mxu0 0.0
        %820 = vmatpush.xpose.msra.mxu0 0.0
        %821 = vmatpush.xpose.msra.mxu0 0.0
        %822 = vmatpush.xpose.msra.mxu0 0.0
        %823 = vmatpush.xpose.msra.mxu0 0.0
        %824 = vmatpush.xpose.msra.mxu0 0.0
        %825 = vmatpush.xpose.msra.mxu0 0.0
        %826 = vmatpush.xpose.msra.mxu0 0.0
        %827 = vmatpush.xpose.msra.mxu0 %v810
        %828 = vmatmul.f32.gmra.mxu0 %v808
        %v829 = vpop.f32.mrf.mxu0
        %v830 = vadd.f32 0.0, %v829
        %831 = vdwg.mxu0
        %v832 = vsel %vm412, %v830, -inf
        %833 = vmax.xlane.f32.xlu0 %v832
        %v834 = vpop.xlane.xlu0 %833
        %v835 = vsub.f32 %v830, %v834
        %v836 = vmul.f32 %v835, 1.442695
        %v837 = vpow.pop %v836
        %v838 = vsel %vm412, %v837, 0.0
        %839 = vadd.xlane.f32.xlu0 %v838
        %v840 = vpop.xlane.xlu0 %839
        %v841 = vrcp.pop %v840
        %v842 = vmul.f32 %v840, %v841
        %v843 = vsub.f32 2.0, %v842
        %v844 = vmul.f32 %v841, %v843
        %v845 = vmul.f32 %v837, %v844
        %v846 = vld [vmem:[#allocation3] sm:$0xff]
        %v847 = vadd.f32 %v846, %v845
        %848 = vst.msk [vmem:[#allocation3] sm:$0xff] %vm412, %v847
        %849 = vrot.lane.b32.xlu0 %v802, 76
        %v850 = vpop.permute.xlu0 %849
        %v853 = vsel %vm412, %v845, 0
        %855 = vmatpush.msra.mxu0 0.0
        %856 = vmatpush.msra.mxu0 0.0
        %857 = vmatpush.msra.mxu0 0.0
        %858 = vmatpush.msra.mxu0 0.0
        %859 = vmatpush.msra.mxu0 0.0
        %860 = vmatpush.msra.mxu0 0.0
        %861 = vmatpush.msra.mxu0 0.0
        %862 = vmatpush.msra.mxu0 0.0
        %863 = vmatpush.msra.mxu0 0.0
        %864 = vmatpush.msra.mxu0 0.0
        %865 = vmatpush.msra.mxu0 0.0
        %866 = vmatpush.msra.mxu0 0.0
        %867 = vmatpush.msra.mxu0 0.0
        %868 = vmatpush.msra.mxu0 0.0
        %869 = vmatpush.msra.mxu0 0.0
        %870 = vmatpush.msra.mxu0 %v850
        %871 = vmatmul.f32.gmra.mxu0 %v853
        %v872 = vpop.f32.mrf.mxu0
        %v873 = vadd.f32 0.0, %v872
        %874 = vdwg.mxu0
        %876 = vrot.lane.b32.xlu0 %v873, 20
        %v877 = vpop.permute.xlu0 %876
        %vm879 = vcmask 195744
        %880 = vst.msk [vmem:[#allocation4] sm:$0xff] %vm879, %v877
        %v881 = vld [vmem:[#allocation2] sm:$0xff]
        %882 = vrot.lane.b32.xlu0 %v410, 104
        %v883 = vpop.permute.xlu0 %882
        %885 = vrot.lane.b32.xlu0 %v881, 104
        %v886 = vpop.permute.xlu0 %885
        %v887 = vsel %vm415, %v883, 0
        %v889 = vsel %vm415, %v886, 0
        %891 = vmatpush.xpose.msra.mxu0 0.0
        %892 = vmatpush.xpose.msra.mxu0 0.0
        %893 = vmatpush.xpose.msra.mxu0 0.0
        %894 = vmatpush.xpose.msra.mxu0 0.0
        %895 = vmatpush.xpose.msra.mxu0 0.0
        %896 = vmatpush.xpose.msra.mxu0 0.0
        %897 = vmatpush.xpose.msra.mxu0 0.0
        %898 = vmatpush.xpose.msra.mxu0 0.0
        %899 = vmatpush.xpose.msra.mxu0 0.0
        %900 = vmatpush.xpose.msra.mxu0 0.0
        %901 = vmatpush.xpose.msra.mxu0 0.0
        %902 = vmatpush.xpose.msra.mxu0 0.0
        %903 = vmatpush.xpose.msra.mxu0 0.0
        %904 = vmatpush.xpose.msra.mxu0 0.0
        %905 = vmatpush.xpose.msra.mxu0 0.0
        %906 = vmatpush.xpose.msra.mxu0 %v889
        %907 = vmatmul.f32.gmra.mxu0 %v887
        %v908 = vpop.f32.mrf.mxu0
        %v909 = vadd.f32 0.0, %v908
        %910 = vdwg.mxu0
        %v911 = vsel %vm412, %v909, -inf
        %912 = vmax.xlane.f32.xlu0 %v911
        %v913 = vpop.xlane.xlu0 %912
        %v914 = vsub.f32 %v909, %v913
        %v915 = vmul.f32 %v914, 1.442695
        %v916 = vpow.pop %v915
        %v917 = vsel %vm412, %v916, 0.0
        %918 = vadd.xlane.f32.xlu0 %v917
        %v919 = vpop.xlane.xlu0 %918
        %v920 = vrcp.pop %v919
        %v921 = vmul.f32 %v919, %v920
        %v922 = vsub.f32 2.0, %v921
        %v923 = vmul.f32 %v920, %v922
        %v924 = vmul.f32 %v916, %v923
        %v925 = vld [vmem:[#allocation3] sm:$0xff]
        %v926 = vadd.f32 %v925, %v924
        %927 = vst.msk [vmem:[#allocation3] sm:$0xff] %vm412, %v926
        %928 = vrot.lane.b32.xlu0 %v881, 72
        %v929 = vpop.permute.xlu0 %928
        %v932 = vsel %vm412, %v924, 0
        %934 = vmatpush.msra.mxu0 0.0
        %935 = vmatpush.msra.mxu0 0.0
        %936 = vmatpush.msra.mxu0 0.0
        %937 = vmatpush.msra.mxu0 0.0
        %938 = vmatpush.msra.mxu0 0.0
        %939 = vmatpush.msra.mxu0 0.0
        %940 = vmatpush.msra.mxu0 0.0
        %941 = vmatpush.msra.mxu0 0.0
        %942 = vmatpush.msra.mxu0 0.0
        %943 = vmatpush.msra.mxu0 0.0
        %944 = vmatpush.msra.mxu0 0.0
        %945 = vmatpush.msra.mxu0 0.0
        %946 = vmatpush.msra.mxu0 0.0
        %947 = vmatpush.msra.mxu0 0.0
        %948 = vmatpush.msra.mxu0 0.0
        %949 = vmatpush.msra.mxu0 %v929
        %950 = vmatmul.f32.gmra.mxu0 %v932
        %v951 = vpop.f32.mrf.mxu0
        %v952 = vadd.f32 0.0, %v951
        %953 = vdwg.mxu0
        %955 = vrot.lane.b32.xlu0 %v952, 24
        %v956 = vpop.permute.xlu0 %955
        %vm958 = vcmask 228544
        %959 = vst.msk [vmem:[#allocation4] sm:$0xff] %vm958, %v956
        %v960 = vld [vmem:[#allocation2] sm:$0xff]
        %961 = vrot.lane.b32.xlu0 %v410, 100
        %v962 = vpop.permute.xlu0 %961
        %964 = vrot.lane.b32.xlu0 %v960, 100
        %v965 = vpop.permute.xlu0 %964
        %v966 = vsel %vm415, %v962, 0
        %v968 = vsel %vm415, %v965, 0
        %970 = vmatpush.xpose.msra.mxu0 0.0
        %971 = vmatpush.xpose.msra.mxu0 0.0
        %972 = vmatpush.xpose.msra.mxu0 0.0
        %973 = vmatpush.xpose.msra.mxu0 0.0
        %974 = vmatpush.xpose.msra.mxu0 0.0
        %975 = vmatpush.xpose.msra.mxu0 0.0
        %976 = vmatpush.xpose.msra.mxu0 0.0
        %977 = vmatpush.xpose.msra.mxu0 0.0
        %978 = vmatpush.xpose.msra.mxu0 0.0
        %979 = vmatpush.xpose.msra.mxu0 0.0
        %980 = vmatpush.xpose.msra.mxu0 0.0
        %981 = vmatpush.xpose.msra.mxu0 0.0
        %982 = vmatpush.xpose.msra.mxu0 0.0
        %983 = vmatpush.xpose.msra.mxu0 0.0
        %984 = vmatpush.xpose.msra.mxu0 0.0
        %985 = vmatpush.xpose.msra.mxu0 %v968
        %986 = vmatmul.f32.gmra.mxu0 %v966
        %v987 = vpop.f32.mrf.mxu0
        %v988 = vadd.f32 0.0, %v987
        %989 = vdwg.mxu0
        %v990 = vsel %vm412, %v988, -inf
        %991 = vmax.xlane.f32.xlu0 %v990
        %v992 = vpop.xlane.xlu0 %991
        %v993 = vsub.f32 %v988, %v992
        %v994 = vmul.f32 %v993, 1.442695
        %v995 = vpow.pop %v994
        %v996 = vsel %vm412, %v995, 0.0
        %997 = vadd.xlane.f32.xlu0 %v996
        %v998 = vpop.xlane.xlu0 %997
        %v999 = vrcp.pop %v998
        %v1000 = vmul.f32 %v998, %v999
        %v1001 = vsub.f32 2.0, %v1000
        %v1002 = vmul.f32 %v999, %v1001
        %v1003 = vmul.f32 %v995, %v1002
        %v1004 = vld [vmem:[#allocation3] sm:$0xff]
        %v1005 = vadd.f32 %v1004, %v1003
        %1006 = vst.msk [vmem:[#allocation3] sm:$0xff] %vm412, %v1005
        %1007 = vrot.lane.b32.xlu0 %v960, 68
        %v1008 = vpop.permute.xlu0 %1007
        %v1011 = vsel %vm412, %v1003, 0
        %1013 = vmatpush.msra.mxu0 0.0
        %1014 = vmatpush.msra.mxu0 0.0
        %1015 = vmatpush.msra.mxu0 0.0
        %1016 = vmatpush.msra.mxu0 0.0
        %1017 = vmatpush.msra.mxu0 0.0
        %1018 = vmatpush.msra.mxu0 0.0
        %1019 = vmatpush.msra.mxu0 0.0
        %1020 = vmatpush.msra.mxu0 0.0
        %1021 = vmatpush.msra.mxu0 0.0
        %1022 = vmatpush.msra.mxu0 0.0
        %1023 = vmatpush.msra.mxu0 0.0
        %1024 = vmatpush.msra.mxu0 0.0
        %1025 = vmatpush.msra.mxu0 0.0
        %1026 = vmatpush.msra.mxu0 0.0
        %1027 = vmatpush.msra.mxu0 0.0
        %1028 = vmatpush.msra.mxu0 %v1008
        %1029 = vmatmul.f32.gmra.mxu0 %v1011
        %v1030 = vpop.f32.mrf.mxu0
        %v1031 = vadd.f32 0.0, %v1030
        %1032 = vdwg.mxu0
        %1034 = vrot.lane.b32.xlu0 %v1031, 28
        %v1035 = vpop.permute.xlu0 %1034
        %vm1037 = vcmask 261344
        %1038 = vst.msk [vmem:[#allocation4] sm:$0xff] %vm1037, %v1035
        %v1039 = vld [vmem:[#allocation4] sm:$0xff]
        %v1040 = vld [vmem:[#allocation11] sm:$0xff]
        %v1041 = vld [vmem:[#allocation11 + $0x8] sm:$0xff]
        %v1042 = vld [vmem:[#allocation11 + $0x10] sm:$0xff]
        %v1043 = vld [vmem:[#allocation11 + $0x18] sm:$0xff]
        %v1044 = vld [vmem:[%s4] sm:$0x1]
        %v1046 = vperm.slane %v1044, 0
        %v1049 = vsel %vm388, %v1039, 0
        %1051 = vmatpush.msra.mxu0 0.0
        %1052 = vmatpush.msra.mxu0 0.0
        %1053 = vmatpush.msra.mxu0 0.0
        %1054 = vmatpush.msra.mxu0 0.0
        %1055 = vmatpush.msra.mxu0 0.0
        %1056 = vmatpush.msra.mxu0 0.0
        %1057 = vmatpush.msra.mxu0 0.0
        %1058 = vmatpush.msra.mxu0 0.0
        %1059 = vmatpush.msra.mxu0 0.0
        %1060 = vmatpush.msra.mxu0 0.0
        %1061 = vmatpush.msra.mxu0 0.0
        %1062 = vmatpush.msra.mxu0 0.0
        %1063 = vmatpush.msra.mxu0 %v1043
        %1064 = vmatpush.msra.mxu0 %v1042
        %1065 = vmatpush.msra.mxu0 %v1041
        %1066 = vmatpush.msra.mxu0 %v1040
        %1067 = vmatmul.f32.gmra.mxu0 %v1049
        %v1068 = vpop.f32.mrf.mxu0
        %v1069 = vadd.f32 %v1046, %v1068
        %1070 = vdwg.mxu0
        %1071 = vst.msk [vmem:[%s338] sm:$0xff] %vm388, %v1069
        %v1072 = vld [vmem:[#allocation3] sm:$0xff]
        %v1073 = vmul.f32 %v1072, 0.125
        %1074 = vst.msk [vmem:[%s345] sm:$0xff] %vm412, %v1073
        %s1075 = sand.u32 %s161, 1
        %s1076 = scalar_lea.sflag [#allocation7], %s1075
        %s1077 = sand.u32 %s161, 1
        %s1078 = smul.addr %s1077, 8
        %s1079 = scalar_lea.vmem [#allocation13], %s1078
        %s1080 = sand.u32 %s189, 1
        %s1081 = scalar_lea.sflag [#allocation15], %s1080
        %s1082 = sand.u32 %s189, 1
        %s1083 = smul.addr %s1082, 8
        %s1084 = scalar_lea.vmem [#allocation14], %s1083
        // Predicated region
        $region61: #{tpu_custom_call.1} parent=39 // pred_check
          %p1085 = pneg %p171
        $region62: #{tpu_custom_call.1} parent=39 // pred_check_branch
          %1087 = sbr.rel (%p1085) target = $region64
        $region63: #{tpu_custom_call.1} parent=39 // pred_region
          %1089 = vsyncadd %s1076, 0
          %s1090 = sadd.s32 %s34, %s33
          %s1091 = smul.addr %s1090, 8
          %s1092 = scalar_lea.hbm %s5, %s1091
          %s1094 = sshll.u32 %s1079, 4
          %s1095 = int_to_ptr.vmem [resolvable:$true] %s1094
          %s1096 = sshll.u32 %s1092, 4
          %s1097 = int_to_ptr.hbm [resolvable:$true] %s1096
          %1099 = dma.vmem_to_hbm [thread:$0]  %s1095, 128, %s1097, %s1076
        $region64: #{tpu_custom_call.1} parent=39 // pred_fallthru
          _
        // Predicated region
        $region65: #{tpu_custom_call.1} parent=39 // pred_check
          %p1100 = pneg %p199
        $region66: #{tpu_custom_call.1} parent=39 // pred_check_branch
          %1102 = sbr.rel (%p1100) target = $region68
        $region67: #{tpu_custom_call.1} parent=39 // pred_region
          %1104 = vsyncadd %s1081, 0
          %s1105 = sadd.s32 %s34, %s33
          %s1106 = smul.addr %s1105, 8
          %s1107 = scalar_lea.hbm %s6, %s1106
          %s1109 = sshll.u32 %s1084, 4
          %s1110 = int_to_ptr.vmem [resolvable:$true] %s1109
          %s1111 = sshll.u32 %s1107, 4
          %s1112 = int_to_ptr.hbm [resolvable:$true] %s1111
          %1114 = dma.vmem_to_hbm [thread:$0]  %s1110, 128, %s1112, %s1081
        $region68: #{tpu_custom_call.1} parent=39 // pred_fallthru
          _
      $region40: #{tpu_custom_call.1} parent=5 // pred_fallthru
        _
      %p1115 = scmp.le.s32.totalorder 2, %s24
      // Predicated region
      $region69: #{tpu_custom_call.1} parent=5 // pred_check
        %p1116 = pneg %p1115
      $region70: #{tpu_custom_call.1} parent=5 // pred_check_branch
        %1118 = sbr.rel (%p1116) target = $region72
      $region71: #{tpu_custom_call.1} parent=5 // pred_region
        %s1119 = ssub.s32 %s24, 2
        // Predicated region
        $region73: #{tpu_custom_call.1} parent=71 // pred_check
          %p1120 = pneg %p177
        $region74: #{tpu_custom_call.1} parent=71 // pred_check_branch
          %1122 = sbr.rel (%p1120) target = $region76
        $region75: #{tpu_custom_call.1} parent=71 // pred_region
          %s1123 = sand.u32 %s162, 1
          %s1124 = scalar_lea.sflag [#allocation7], %s1123
          %s1125 = sand.u32 %s162, 1
          %s1126 = smul.addr %s1125, 8
          %s1127 = scalar_lea.vmem [#allocation13], %s1126
          %1129 = dma.done %s1124, 128
        $region76: #{tpu_custom_call.1} parent=71 // pred_fallthru
          _
        // Predicated region
        $region77: #{tpu_custom_call.1} parent=71 // pred_check
          %p1130 = pneg %p205
        $region78: #{tpu_custom_call.1} parent=71 // pred_check_branch
          %1132 = sbr.rel (%p1130) target = $region80
        $region79: #{tpu_custom_call.1} parent=71 // pred_region
          %s1133 = sand.u32 %s190, 1
          %s1134 = scalar_lea.sflag [#allocation15], %s1133
          %s1135 = sand.u32 %s190, 1
          %s1136 = smul.addr %s1135, 8
          %s1137 = scalar_lea.vmem [#allocation14], %s1136
          %1139 = dma.done %s1134, 128
        $region80: #{tpu_custom_call.1} parent=71 // pred_fallthru
          _
      $region72: #{tpu_custom_call.1} parent=5 // pred_fallthru
        _
    $region6: #{tpu_custom_call.1} parent=1 // loop_footer
      %s28 = sadd.s32 1, %s24
    $region7: #{tpu_custom_call.1} parent=1 // loop_footer_branch
      %23 = sbr.rel target = $region3
    $region8: #{tpu_custom_call.1} parent=1 // loop_exit
      _
    %1140 = vsyncpa [#allocation6], 1
    %s1141 = scalar_lea.sflag [#allocation6], 1
    %1142 = vsyncpa %s1141, 1
    %1143 = vsyncpa [#allocation9], 1
    %1144 = vsyncpa [#allocation12], 1
    %1145 = vsyncpa [#allocation7], 1
    %s1146 = scalar_lea.sflag [#allocation7], 1
    %1147 = vsyncpa %s1146, 1
    %1148 = vsyncpa [#allocation15], 1
    %s1149 = scalar_lea.sflag [#allocation15], 1
    %1150 = vsyncpa %s1149, 1

</llo_original>
